<compile_context>
chip_gen: v7x
topology: tpu7x:2x2x1
jax: 0.10.0
libtpu: 0.0.40
codegen_flags: <defaults>
</compile_context>

<pallas_src>
import functools

import jax
import jax.numpy as jnp
from jax import lax
from jax.experimental import pallas as pl
from jax.experimental.pallas import tpu as pltpu


def _mha_kernel(x_ref, wt_ref, o_ref, qkv_ref, *, n_head, head_size):
    """Single invocation: all batch elements and heads computed inside."""
    B, L, D = x_ref.shape
    H = head_size
    NH = n_head

    # Causal additive bias (0 / -inf), built once, shared by every (batch, head).
    row = lax.broadcasted_iota(jnp.int32, (L, L), 0)
    col = lax.broadcasted_iota(jnp.int32, (L, L), 1)
    bias = jnp.where(col <= row, jnp.float32(0.0), jnp.float32(-jnp.inf))  # (L, L)

    for b in range(B):                       # static unroll, B = 2
        x_b = x_ref[b]                       # (L, D): leading-axis slice, free

        # Fused transposed projection for all heads:
        #   (3*NH*H, D) x (L, D)^T -> (3*NH*H, L).  Head axis on sublanes.
        qkv_ref[...] = lax.dot_general(
            wt_ref[...], x_b,
            dimension_numbers=(((1,), (1,)), ((), ())),
            preferred_element_type=jnp.float32)

        for h in range(NH):                  # static unroll, NH = 4
            # 32-row, sublane-aligned slices of the VMEM-staged qkv_T.
            q_t = qkv_ref[(0 * NH + h) * H:(0 * NH + h + 1) * H, :]   # (H, L)
            k_t = qkv_ref[(1 * NH + h) * H:(1 * NH + h + 1) * H, :]   # (H, L)
            v_t = qkv_ref[(2 * NH + h) * H:(2 * NH + h + 1) * H, :]   # (H, L)

            # Scores: scale already folded into W_q; K used directly as (H, L).
            q = q_t.T                                                 # (L, H), tiny XLU reorient
            wei = jnp.dot(q, k_t, preferred_element_type=jnp.float32)  # (L, L)
            wei = wei + bias

            # Numerically stable softmax; exact reciprocal (within 1e-4 tol).
            m = jnp.max(wei, axis=-1, keepdims=True)
            e = jnp.exp(wei - m)
            s = jnp.sum(e, axis=-1, keepdims=True)
            p = e * pl.reciprocal(s)

            # out[i, d] = sum_j p[i, j] * v_t[d, j]   (contract rhs dim 1)
            out = lax.dot_general(
                p, v_t,
                dimension_numbers=(((1,), (1,)), ((), ())),
                preferred_element_type=jnp.float32)                   # (L, H)

            # Direct per-head store (no concat, no long live ranges).
            o_ref[b, :, h * H:(h + 1) * H] = out.astype(o_ref.dtype)


def multi_head_attention(x, wq, wk, wv):
    """x: (B, L, dmodel); wq/wk/wv: (n_head, dmodel, head_size).

    Returns (B, L, n_head*head_size): concatenation of per-head causal
    attention outputs (head 0 first), matching the PyTorch MultiHeadAttention.
    """
    B, L, D = x.shape
    n_head, Dw, H = wq.shape
    assert Dw == D and n_head * H == D
    scale = float(H) ** -0.5

    # Fused transposed weights: (3*NH*H, D) = [Q heads | K heads | V heads],
    # head h at rows h*H:(h+1)*H of each third; 1/sqrt(H) folded into Q.
    def _fuse_t(w):
        return jnp.transpose(w, (0, 2, 1)).reshape(n_head * H, D)

    w_t = jnp.concatenate(
        [_fuse_t(wq) * scale, _fuse_t(wk), _fuse_t(wv)], axis=0)      # (384, 128)

    kernel = functools.partial(_mha_kernel, n_head=n_head, head_size=H)

    flops = B * (2 * (3 * n_head * H) * D * L + n_head * 4 * L * L * H)
    cost = pl.CostEstimate(
        flops=int(flops),
        transcendentals=int(B * n_head * L * L),
        bytes_accessed=int(4 * (x.size + w_t.size + B * L * n_head * H)),
    )

    out = pl.pallas_call(
        kernel,
        out_shape=jax.ShapeDtypeStruct((B, L, n_head * H), x.dtype),
        grid_spec=pltpu.PrefetchScalarGridSpec(
            num_scalar_prefetch=0,
            grid=(1,),
            in_specs=[
                pl.BlockSpec((B, L, D), lambda i: (0, 0, 0)),              # x
                pl.BlockSpec((3 * n_head * H, D), lambda i: (0, 0)),       # fused W^T
            ],
            out_specs=pl.BlockSpec((B, L, n_head * H), lambda i: (0, 0, 0)),
            scratch_shapes=[pltpu.VMEM((3 * n_head * H, L), jnp.float32)],
        ),
        compiler_params=pltpu.CompilerParams(
            dimension_semantics=("arbitrary",)),
        cost_estimate=cost,
    )(x, w_t)
    return out


def _reference(x, wq, wk, wv):
    """Pure-JAX reference mirroring the PyTorch forward."""
    B, L, D = x.shape
    n_head, _, H = wq.shape
    scale = float(H) ** -0.5
    outs = []
    for h in range(n_head):
        q = x @ wq[h]
        k = x @ wk[h]
        v = x @ wv[h]
        wei = (q @ jnp.swapaxes(k, -2, -1)) * scale
        mask = jnp.tril(jnp.ones((L, L), dtype=bool))
        wei = jnp.where(mask, wei, -jnp.inf)
        wei = jax.nn.softmax(wei, axis=-1)
        outs.append(wei @ v)
    return jnp.concatenate(outs, axis=-1)


if __name__ == "__main__":
    # Module hyperparameters: dmodel = 128, L = qH*qW + 1 with qH = qW = 4,
    # n_head * head_size = dmodel (required by the forward contract).
    dmodel = 128
    qH = qW = 4
    L = qH * qW + 1                  # 17
    n_head = 4
    head_size = dmodel // n_head     # 32
    B = 2

    key = jax.random.PRNGKey(0)
    kx, kq, kk, kv = jax.random.split(key, 4)

    x = jax.random.normal(kx, (B, L, dmodel), dtype=jnp.float32)
    # Deterministic "synthetic checkpoint": per-head projection weights,
    # stored as (dmodel, head_size) so the forward does x @ W.
    wq = jax.random.normal(kq, (n_head, dmodel, head_size), dtype=jnp.float32) * 0.05
    wk = jax.random.normal(kk, (n_head, dmodel, head_size), dtype=jnp.float32) * 0.05
    wv = jax.random.normal(kv, (n_head, dmodel, head_size), dtype=jnp.float32) * 0.05

    y = multi_head_attention(x, wq, wk, wv)
    y = jax.block_until_ready(y)

    y_ref = _reference(x, wq, wk, wv)
    assert y.shape == (B, L, n_head * head_size)
    assert jnp.allclose(y, y_ref, atol=1e-4, rtol=1e-4), "mismatch vs reference"

    print("KERNEL_OK")
</pallas_src>

<mosaic_0001>
module attributes {stable_mosaic.version = 11 : i64} {
  func.func @_mha_kernel(%arg0: i32, %arg1: memref<2x17x128xf32, #tpu.memory_space<vmem>>, %arg2: memref<384x128xf32, #tpu.memory_space<vmem>>, %arg3: memref<2x17x128xf32, #tpu.memory_space<vmem>>, %arg4: memref<384x17xf32, #tpu.memory_space<vmem>>) attributes {dimension_semantics = [#tpu.dimension_semantics<arbitrary>], iteration_bounds = array<i64: 1>, scalar_prefetch = 0 : i64, scratch_operands = 1 : i64, tpu.core_type = #tpu.core_type<tc>, window_params = [{pipeline_mode = #tpu.pipeline_mode<synchronous>, transform_indices = @transform_0, window_bounds = array<i64: 2, 17, 128>}, {pipeline_mode = #tpu.pipeline_mode<synchronous>, transform_indices = @transform_1, window_bounds = array<i64: 384, 128>}, {pipeline_mode = #tpu.pipeline_mode<synchronous>, transform_indices = @transform_2, window_bounds = array<i64: 2, 17, 128>}]} {
    %0 = tpu.iota {dimensions = array<i32: 0>} : vector<17x17xi32>
    %1 = tpu.iota {dimensions = array<i32: 1>} : vector<17x17xi32>
    %2 = arith.cmpi sle, %1, %0 : vector<17x17xi32>
    %cst = arith.constant 0.000000e+00 : f32
    %cst_0 = arith.constant 0xFF800000 : f32
    %3 = vector.broadcast %cst : f32 to vector<17x17xf32>
    %4 = vector.broadcast %cst_0 : f32 to vector<17x17xf32>
    %5 = arith.select %2, %3, %4 : vector<17x17xi1>, vector<17x17xf32>
    %c0 = arith.constant 0 : index
    %c0_1 = arith.constant 0 : index
    %c0_2 = arith.constant 0 : index
    %6 = vector.load %arg1[%c0, %c0_1, %c0_2] : memref<2x17x128xf32, #tpu.memory_space<vmem>>, vector<1x17x128xf32>
    %7 = vector.shape_cast %6 : vector<1x17x128xf32> to vector<17x128xf32>
    %c0_3 = arith.constant 0 : index
    %c0_4 = arith.constant 0 : index
    %8 = vector.load %arg2[%c0_3, %c0_4] : memref<384x128xf32, #tpu.memory_space<vmem>>, vector<384x128xf32>
    %cst_5 = arith.constant dense<0.000000e+00> : vector<384x17xf32>
    %9 = tpu.matmul %8, %7, %cst_5 {dimension_numbers = #tpu.dot_dimension_numbers<[1], [1], [0], [0], [0, 0, 1, 0], [], []>} : vector<384x128xf32>, vector<17x128xf32>, vector<384x17xf32> -> vector<384x17xf32>
    %c0_6 = arith.constant 0 : index
    %c0_7 = arith.constant 0 : index
    %10 = vector.load %arg4[%c0_6, %c0_7] : memref<384x17xf32, #tpu.memory_space<vmem>>, vector<384x17xf32>
    tpu.vector_store %arg4[%c0_6, %c0_7], %9 {strides = array<i32>} : memref<384x17xf32, #tpu.memory_space<vmem>>, vector<384x17xf32>,
    %c0_8 = arith.constant 0 : index
    %c0_9 = arith.constant 0 : index
    %11 = vector.load %arg4[%c0_8, %c0_9] : memref<384x17xf32, #tpu.memory_space<vmem>>, vector<32x17xf32>
    %c128 = arith.constant 128 : index
    %c0_10 = arith.constant 0 : index
    %12 = vector.load %arg4[%c128, %c0_10] : memref<384x17xf32, #tpu.memory_space<vmem>>, vector<32x17xf32>
    %c256 = arith.constant 256 : index
    %c0_11 = arith.constant 0 : index
    %13 = vector.load %arg4[%c256, %c0_11] : memref<384x17xf32, #tpu.memory_space<vmem>>, vector<32x17xf32>
    %14 = tpu.transpose %11, [1, 0] : vector<32x17xf32> -> vector<17x32xf32>
    %cst_12 = arith.constant dense<0.000000e+00> : vector<17x17xf32>
    %15 = tpu.matmul %14, %12, %cst_12 {dimension_numbers = #tpu.dot_dimension_numbers<[1], [0], [0], [1], [0, 0, 1, 1], [], []>} : vector<17x32xf32>, vector<32x17xf32>, vector<17x17xf32> -> vector<17x17xf32>
    %16 = arith.addf %15, %5 : vector<17x17xf32>
    %cst_13 = arith.constant dense<0xFF800000> : vector<17xf32>
    %17 = vector.multi_reduction <maximumf>, %16, %cst_13 [1] : vector<17x17xf32> to vector<17xf32>
    %18 = vector.shape_cast %17 : vector<17xf32> to vector<17x1xf32>
    %19 = vector.broadcast %18 : vector<17x1xf32> to vector<17x17xf32>
    %20 = arith.subf %16, %19 : vector<17x17xf32>
    %21 = math.exp %20 : vector<17x17xf32>
    %cst_14 = arith.constant dense<0.000000e+00> : vector<17xf32>
    %22 = vector.multi_reduction <add>, %21, %cst_14 [1] : vector<17x17xf32> to vector<17xf32>
    %23 = vector.shape_cast %22 : vector<17xf32> to vector<17x1xf32>
    %24 = tpu.reciprocal %23 : vector<17x1xf32> -> vector<17x1xf32>
    %25 = vector.broadcast %24 : vector<17x1xf32> to vector<17x17xf32>
    %26 = arith.mulf %21, %25 : vector<17x17xf32>
    %cst_15 = arith.constant dense<0.000000e+00> : vector<17x32xf32>
    %27 = tpu.matmul %26, %13, %cst_15 {dimension_numbers = #tpu.dot_dimension_numbers<[1], [1], [0], [0], [0, 0, 1, 0], [], []>} : vector<17x17xf32>, vector<32x17xf32>, vector<17x32xf32> -> vector<17x32xf32>
    %c0_16 = arith.constant 0 : index
    %c0_17 = arith.constant 0 : index
    %c0_18 = arith.constant 0 : index
    %28 = vector.load %arg3[%c0_16, %c0_17, %c0_18] : memref<2x17x128xf32, #tpu.memory_space<vmem>>, vector<1x17x32xf32>
    %29 = vector.shape_cast %28 : vector<1x17x32xf32> to vector<17x32xf32>
    %30 = vector.shape_cast %27 : vector<17x32xf32> to vector<1x17x32xf32>
    tpu.vector_store %arg3[%c0_16, %c0_17, %c0_18], %30 {strides = array<i32>} : memref<2x17x128xf32, #tpu.memory_space<vmem>>, vector<1x17x32xf32>,
    %c32 = arith.constant 32 : index
    %c0_19 = arith.constant 0 : index
    %31 = vector.load %arg4[%c32, %c0_19] : memref<384x17xf32, #tpu.memory_space<vmem>>, vector<32x17xf32>
    %c160 = arith.constant 160 : index
    %c0_20 = arith.constant 0 : index
    %32 = vector.load %arg4[%c160, %c0_20] : memref<384x17xf32, #tpu.memory_space<vmem>>, vector<32x17xf32>
    %c288 = arith.constant 288 : index
    %c0_21 = arith.constant 0 : index
    %33 = vector.load %arg4[%c288, %c0_21] : memref<384x17xf32, #tpu.memory_space<vmem>>, vector<32x17xf32>
    %34 = tpu.transpose %31, [1, 0] : vector<32x17xf32> -> vector<17x32xf32>
    %cst_22 = arith.constant dense<0.000000e+00> : vector<17x17xf32>
    %35 = tpu.matmul %34, %32, %cst_22 {dimension_numbers = #tpu.dot_dimension_numbers<[1], [0], [0], [1], [0, 0, 1, 1], [], []>} : vector<17x32xf32>, vector<32x17xf32>, vector<17x17xf32> -> vector<17x17xf32>
    %36 = arith.addf %35, %5 : vector<17x17xf32>
    %cst_23 = arith.constant dense<0xFF800000> : vector<17xf32>
    %37 = vector.multi_reduction <maximumf>, %36, %cst_23 [1] : vector<17x17xf32> to vector<17xf32>
    %38 = vector.shape_cast %37 : vector<17xf32> to vector<17x1xf32>
    %39 = vector.broadcast %38 : vector<17x1xf32> to vector<17x17xf32>
    %40 = arith.subf %36, %39 : vector<17x17xf32>
    %41 = math.exp %40 : vector<17x17xf32>
    %cst_24 = arith.constant dense<0.000000e+00> : vector<17xf32>
    %42 = vector.multi_reduction <add>, %41, %cst_24 [1] : vector<17x17xf32> to vector<17xf32>
    %43 = vector.shape_cast %42 : vector<17xf32> to vector<17x1xf32>
    %44 = tpu.reciprocal %43 : vector<17x1xf32> -> vector<17x1xf32>
    %45 = vector.broadcast %44 : vector<17x1xf32> to vector<17x17xf32>
    %46 = arith.mulf %41, %45 : vector<17x17xf32>
    %cst_25 = arith.constant dense<0.000000e+00> : vector<17x32xf32>
    %47 = tpu.matmul %46, %33, %cst_25 {dimension_numbers = #tpu.dot_dimension_numbers<[1], [1], [0], [0], [0, 0, 1, 0], [], []>} : vector<17x17xf32>, vector<32x17xf32>, vector<17x32xf32> -> vector<17x32xf32>
    %c0_26 = arith.constant 0 : index
    %c0_27 = arith.constant 0 : index
    %c32_28 = arith.constant 32 : index
    %48 = vector.load %arg3[%c0_26, %c0_27, %c32_28] : memref<2x17x128xf32, #tpu.memory_space<vmem>>, vector<1x17x32xf32>
    %49 = vector.shape_cast %48 : vector<1x17x32xf32> to vector<17x32xf32>
    %50 = vector.shape_cast %47 : vector<17x32xf32> to vector<1x17x32xf32>
    tpu.vector_store %arg3[%c0_26, %c0_27, %c32_28], %50 {strides = array<i32>} : memref<2x17x128xf32, #tpu.memory_space<vmem>>, vector<1x17x32xf32>,
    %c64 = arith.constant 64 : index
    %c0_29 = arith.constant 0 : index
    %51 = vector.load %arg4[%c64, %c0_29] : memref<384x17xf32, #tpu.memory_space<vmem>>, vector<32x17xf32>
    %c192 = arith.constant 192 : index
    %c0_30 = arith.constant 0 : index
    %52 = vector.load %arg4[%c192, %c0_30] : memref<384x17xf32, #tpu.memory_space<vmem>>, vector<32x17xf32>
    %c320 = arith.constant 320 : index
    %c0_31 = arith.constant 0 : index
    %53 = vector.load %arg4[%c320, %c0_31] : memref<384x17xf32, #tpu.memory_space<vmem>>, vector<32x17xf32>
    %54 = tpu.transpose %51, [1, 0] : vector<32x17xf32> -> vector<17x32xf32>
    %cst_32 = arith.constant dense<0.000000e+00> : vector<17x17xf32>
    %55 = tpu.matmul %54, %52, %cst_32 {dimension_numbers = #tpu.dot_dimension_numbers<[1], [0], [0], [1], [0, 0, 1, 1], [], []>} : vector<17x32xf32>, vector<32x17xf32>, vector<17x17xf32> -> vector<17x17xf32>
    %56 = arith.addf %55, %5 : vector<17x17xf32>
    %cst_33 = arith.constant dense<0xFF800000> : vector<17xf32>
    %57 = vector.multi_reduction <maximumf>, %56, %cst_33 [1] : vector<17x17xf32> to vector<17xf32>
    %58 = vector.shape_cast %57 : vector<17xf32> to vector<17x1xf32>
    %59 = vector.broadcast %58 : vector<17x1xf32> to vector<17x17xf32>
    %60 = arith.subf %56, %59 : vector<17x17xf32>
    %61 = math.exp %60 : vector<17x17xf32>
    %cst_34 = arith.constant dense<0.000000e+00> : vector<17xf32>
    %62 = vector.multi_reduction <add>, %61, %cst_34 [1] : vector<17x17xf32> to vector<17xf32>
    %63 = vector.shape_cast %62 : vector<17xf32> to vector<17x1xf32>
    %64 = tpu.reciprocal %63 : vector<17x1xf32> -> vector<17x1xf32>
    %65 = vector.broadcast %64 : vector<17x1xf32> to vector<17x17xf32>
    %66 = arith.mulf %61, %65 : vector<17x17xf32>
    %cst_35 = arith.constant dense<0.000000e+00> : vector<17x32xf32>
    %67 = tpu.matmul %66, %53, %cst_35 {dimension_numbers = #tpu.dot_dimension_numbers<[1], [1], [0], [0], [0, 0, 1, 0], [], []>} : vector<17x17xf32>, vector<32x17xf32>, vector<17x32xf32> -> vector<17x32xf32>
    %c0_36 = arith.constant 0 : index
    %c0_37 = arith.constant 0 : index
    %c64_38 = arith.constant 64 : index
    %68 = vector.load %arg3[%c0_36, %c0_37, %c64_38] : memref<2x17x128xf32, #tpu.memory_space<vmem>>, vector<1x17x32xf32>
    %69 = vector.shape_cast %68 : vector<1x17x32xf32> to vector<17x32xf32>
    %70 = vector.shape_cast %67 : vector<17x32xf32> to vector<1x17x32xf32>
    tpu.vector_store %arg3[%c0_36, %c0_37, %c64_38], %70 {strides = array<i32>} : memref<2x17x128xf32, #tpu.memory_space<vmem>>, vector<1x17x32xf32>,
    %c96 = arith.constant 96 : index
    %c0_39 = arith.constant 0 : index
    %71 = vector.load %arg4[%c96, %c0_39] : memref<384x17xf32, #tpu.memory_space<vmem>>, vector<32x17xf32>
    %c224 = arith.constant 224 : index
    %c0_40 = arith.constant 0 : index
    %72 = vector.load %arg4[%c224, %c0_40] : memref<384x17xf32, #tpu.memory_space<vmem>>, vector<32x17xf32>
    %c352 = arith.constant 352 : index
    %c0_41 = arith.constant 0 : index
    %73 = vector.load %arg4[%c352, %c0_41] : memref<384x17xf32, #tpu.memory_space<vmem>>, vector<32x17xf32>
    %74 = tpu.transpose %71, [1, 0] : vector<32x17xf32> -> vector<17x32xf32>
    %cst_42 = arith.constant dense<0.000000e+00> : vector<17x17xf32>
    %75 = tpu.matmul %74, %72, %cst_42 {dimension_numbers = #tpu.dot_dimension_numbers<[1], [0], [0], [1], [0, 0, 1, 1], [], []>} : vector<17x32xf32>, vector<32x17xf32>, vector<17x17xf32> -> vector<17x17xf32>
    %76 = arith.addf %75, %5 : vector<17x17xf32>
    %cst_43 = arith.constant dense<0xFF800000> : vector<17xf32>
    %77 = vector.multi_reduction <maximumf>, %76, %cst_43 [1] : vector<17x17xf32> to vector<17xf32>
    %78 = vector.shape_cast %77 : vector<17xf32> to vector<17x1xf32>
    %79 = vector.broadcast %78 : vector<17x1xf32> to vector<17x17xf32>
    %80 = arith.subf %76, %79 : vector<17x17xf32>
    %81 = math.exp %80 : vector<17x17xf32>
    %cst_44 = arith.constant dense<0.000000e+00> : vector<17xf32>
    %82 = vector.multi_reduction <add>, %81, %cst_44 [1] : vector<17x17xf32> to vector<17xf32>
    %83 = vector.shape_cast %82 : vector<17xf32> to vector<17x1xf32>
    %84 = tpu.reciprocal %83 : vector<17x1xf32> -> vector<17x1xf32>
    %85 = vector.broadcast %84 : vector<17x1xf32> to vector<17x17xf32>
    %86 = arith.mulf %81, %85 : vector<17x17xf32>
    %cst_45 = arith.constant dense<0.000000e+00> : vector<17x32xf32>
    %87 = tpu.matmul %86, %73, %cst_45 {dimension_numbers = #tpu.dot_dimension_numbers<[1], [1], [0], [0], [0, 0, 1, 0], [], []>} : vector<17x17xf32>, vector<32x17xf32>, vector<17x32xf32> -> vector<17x32xf32>
    %c0_46 = arith.constant 0 : index
    %c0_47 = arith.constant 0 : index
    %c96_48 = arith.constant 96 : index
    %88 = vector.load %arg3[%c0_46, %c0_47, %c96_48] : memref<2x17x128xf32, #tpu.memory_space<vmem>>, vector<1x17x32xf32>
    %89 = vector.shape_cast %88 : vector<1x17x32xf32> to vector<17x32xf32>
    %90 = vector.shape_cast %87 : vector<17x32xf32> to vector<1x17x32xf32>
    tpu.vector_store %arg3[%c0_46, %c0_47, %c96_48], %90 {strides = array<i32>} : memref<2x17x128xf32, #tpu.memory_space<vmem>>, vector<1x17x32xf32>,
    %c1 = arith.constant 1 : index
    %c0_49 = arith.constant 0 : index
    %c0_50 = arith.constant 0 : index
    %91 = vector.load %arg1[%c1, %c0_49, %c0_50] : memref<2x17x128xf32, #tpu.memory_space<vmem>>, vector<1x17x128xf32>
    %92 = vector.shape_cast %91 : vector<1x17x128xf32> to vector<17x128xf32>
    %c0_51 = arith.constant 0 : index
    %c0_52 = arith.constant 0 : index
    %93 = vector.load %arg2[%c0_51, %c0_52] : memref<384x128xf32, #tpu.memory_space<vmem>>, vector<384x128xf32>
    %cst_53 = arith.constant dense<0.000000e+00> : vector<384x17xf32>
    %94 = tpu.matmul %93, %92, %cst_53 {dimension_numbers = #tpu.dot_dimension_numbers<[1], [1], [0], [0], [0, 0, 1, 0], [], []>} : vector<384x128xf32>, vector<17x128xf32>, vector<384x17xf32> -> vector<384x17xf32>
    %c0_54 = arith.constant 0 : index
    %c0_55 = arith.constant 0 : index
    %95 = vector.load %arg4[%c0_54, %c0_55] : memref<384x17xf32, #tpu.memory_space<vmem>>, vector<384x17xf32>
    tpu.vector_store %arg4[%c0_54, %c0_55], %94 {strides = array<i32>} : memref<384x17xf32, #tpu.memory_space<vmem>>, vector<384x17xf32>,
    %c0_56 = arith.constant 0 : index
    %c0_57 = arith.constant 0 : index
    %96 = vector.load %arg4[%c0_56, %c0_57] : memref<384x17xf32, #tpu.memory_space<vmem>>, vector<32x17xf32>
    %c128_58 = arith.constant 128 : index
    %c0_59 = arith.constant 0 : index
    %97 = vector.load %arg4[%c128_58, %c0_59] : memref<384x17xf32, #tpu.memory_space<vmem>>, vector<32x17xf32>
    %c256_60 = arith.constant 256 : index
    %c0_61 = arith.constant 0 : index
    %98 = vector.load %arg4[%c256_60, %c0_61] : memref<384x17xf32, #tpu.memory_space<vmem>>, vector<32x17xf32>
    %99 = tpu.transpose %96, [1, 0] : vector<32x17xf32> -> vector<17x32xf32>
    %cst_62 = arith.constant dense<0.000000e+00> : vector<17x17xf32>
    %100 = tpu.matmul %99, %97, %cst_62 {dimension_numbers = #tpu.dot_dimension_numbers<[1], [0], [0], [1], [0, 0, 1, 1], [], []>} : vector<17x32xf32>, vector<32x17xf32>, vector<17x17xf32> -> vector<17x17xf32>
    %101 = arith.addf %100, %5 : vector<17x17xf32>
    %cst_63 = arith.constant dense<0xFF800000> : vector<17xf32>
    %102 = vector.multi_reduction <maximumf>, %101, %cst_63 [1] : vector<17x17xf32> to vector<17xf32>
    %103 = vector.shape_cast %102 : vector<17xf32> to vector<17x1xf32>
    %104 = vector.broadcast %103 : vector<17x1xf32> to vector<17x17xf32>
    %105 = arith.subf %101, %104 : vector<17x17xf32>
    %106 = math.exp %105 : vector<17x17xf32>
    %cst_64 = arith.constant dense<0.000000e+00> : vector<17xf32>
    %107 = vector.multi_reduction <add>, %106, %cst_64 [1] : vector<17x17xf32> to vector<17xf32>
    %108 = vector.shape_cast %107 : vector<17xf32> to vector<17x1xf32>
    %109 = tpu.reciprocal %108 : vector<17x1xf32> -> vector<17x1xf32>
    %110 = vector.broadcast %109 : vector<17x1xf32> to vector<17x17xf32>
    %111 = arith.mulf %106, %110 : vector<17x17xf32>
    %cst_65 = arith.constant dense<0.000000e+00> : vector<17x32xf32>
    %112 = tpu.matmul %111, %98, %cst_65 {dimension_numbers = #tpu.dot_dimension_numbers<[1], [1], [0], [0], [0, 0, 1, 0], [], []>} : vector<17x17xf32>, vector<32x17xf32>, vector<17x32xf32> -> vector<17x32xf32>
    %c1_66 = arith.constant 1 : index
    %c0_67 = arith.constant 0 : index
    %c0_68 = arith.constant 0 : index
    %113 = vector.load %arg3[%c1_66, %c0_67, %c0_68] : memref<2x17x128xf32, #tpu.memory_space<vmem>>, vector<1x17x32xf32>
    %114 = vector.shape_cast %113 : vector<1x17x32xf32> to vector<17x32xf32>
    %115 = vector.shape_cast %112 : vector<17x32xf32> to vector<1x17x32xf32>
    tpu.vector_store %arg3[%c1_66, %c0_67, %c0_68], %115 {strides = array<i32>} : memref<2x17x128xf32, #tpu.memory_space<vmem>>, vector<1x17x32xf32>,
    %c32_69 = arith.constant 32 : index
    %c0_70 = arith.constant 0 : index
    %116 = vector.load %arg4[%c32_69, %c0_70] : memref<384x17xf32, #tpu.memory_space<vmem>>, vector<32x17xf32>
    %c160_71 = arith.constant 160 : index
    %c0_72 = arith.constant 0 : index
    %117 = vector.load %arg4[%c160_71, %c0_72] : memref<384x17xf32, #tpu.memory_space<vmem>>, vector<32x17xf32>
    %c288_73 = arith.constant 288 : index
    %c0_74 = arith.constant 0 : index
    %118 = vector.load %arg4[%c288_73, %c0_74] : memref<384x17xf32, #tpu.memory_space<vmem>>, vector<32x17xf32>
    %119 = tpu.transpose %116, [1, 0] : vector<32x17xf32> -> vector<17x32xf32>
    %cst_75 = arith.constant dense<0.000000e+00> : vector<17x17xf32>
    %120 = tpu.matmul %119, %117, %cst_75 {dimension_numbers = #tpu.dot_dimension_numbers<[1], [0], [0], [1], [0, 0, 1, 1], [], []>} : vector<17x32xf32>, vector<32x17xf32>, vector<17x17xf32> -> vector<17x17xf32>
    %121 = arith.addf %120, %5 : vector<17x17xf32>
    %cst_76 = arith.constant dense<0xFF800000> : vector<17xf32>
    %122 = vector.multi_reduction <maximumf>, %121, %cst_76 [1] : vector<17x17xf32> to vector<17xf32>
    %123 = vector.shape_cast %122 : vector<17xf32> to vector<17x1xf32>
    %124 = vector.broadcast %123 : vector<17x1xf32> to vector<17x17xf32>
    %125 = arith.subf %121, %124 : vector<17x17xf32>
    %126 = math.exp %125 : vector<17x17xf32>
    %cst_77 = arith.constant dense<0.000000e+00> : vector<17xf32>
    %127 = vector.multi_reduction <add>, %126, %cst_77 [1] : vector<17x17xf32> to vector<17xf32>
    %128 = vector.shape_cast %127 : vector<17xf32> to vector<17x1xf32>
    %129 = tpu.reciprocal %128 : vector<17x1xf32> -> vector<17x1xf32>
    %130 = vector.broadcast %129 : vector<17x1xf32> to vector<17x17xf32>
    %131 = arith.mulf %126, %130 : vector<17x17xf32>
    %cst_78 = arith.constant dense<0.000000e+00> : vector<17x32xf32>
    %132 = tpu.matmul %131, %118, %cst_78 {dimension_numbers = #tpu.dot_dimension_numbers<[1], [1], [0], [0], [0, 0, 1, 0], [], []>} : vector<17x17xf32>, vector<32x17xf32>, vector<17x32xf32> -> vector<17x32xf32>
    %c1_79 = arith.constant 1 : index
    %c0_80 = arith.constant 0 : index
    %c32_81 = arith.constant 32 : index
    %133 = vector.load %arg3[%c1_79, %c0_80, %c32_81] : memref<2x17x128xf32, #tpu.memory_space<vmem>>, vector<1x17x32xf32>
    %134 = vector.shape_cast %133 : vector<1x17x32xf32> to vector<17x32xf32>
    %135 = vector.shape_cast %132 : vector<17x32xf32> to vector<1x17x32xf32>
    tpu.vector_store %arg3[%c1_79, %c0_80, %c32_81], %135 {strides = array<i32>} : memref<2x17x128xf32, #tpu.memory_space<vmem>>, vector<1x17x32xf32>,
    %c64_82 = arith.constant 64 : index
    %c0_83 = arith.constant 0 : index
    %136 = vector.load %arg4[%c64_82, %c0_83] : memref<384x17xf32, #tpu.memory_space<vmem>>, vector<32x17xf32>
    %c192_84 = arith.constant 192 : index
    %c0_85 = arith.constant 0 : index
    %137 = vector.load %arg4[%c192_84, %c0_85] : memref<384x17xf32, #tpu.memory_space<vmem>>, vector<32x17xf32>
    %c320_86 = arith.constant 320 : index
    %c0_87 = arith.constant 0 : index
    %138 = vector.load %arg4[%c320_86, %c0_87] : memref<384x17xf32, #tpu.memory_space<vmem>>, vector<32x17xf32>
    %139 = tpu.transpose %136, [1, 0] : vector<32x17xf32> -> vector<17x32xf32>
    %cst_88 = arith.constant dense<0.000000e+00> : vector<17x17xf32>
    %140 = tpu.matmul %139, %137, %cst_88 {dimension_numbers = #tpu.dot_dimension_numbers<[1], [0], [0], [1], [0, 0, 1, 1], [], []>} : vector<17x32xf32>, vector<32x17xf32>, vector<17x17xf32> -> vector<17x17xf32>
    %141 = arith.addf %140, %5 : vector<17x17xf32>
    %cst_89 = arith.constant dense<0xFF800000> : vector<17xf32>
    %142 = vector.multi_reduction <maximumf>, %141, %cst_89 [1] : vector<17x17xf32> to vector<17xf32>
    %143 = vector.shape_cast %142 : vector<17xf32> to vector<17x1xf32>
    %144 = vector.broadcast %143 : vector<17x1xf32> to vector<17x17xf32>
    %145 = arith.subf %141, %144 : vector<17x17xf32>
    %146 = math.exp %145 : vector<17x17xf32>
    %cst_90 = arith.constant dense<0.000000e+00> : vector<17xf32>
    %147 = vector.multi_reduction <add>, %146, %cst_90 [1] : vector<17x17xf32> to vector<17xf32>
    %148 = vector.shape_cast %147 : vector<17xf32> to vector<17x1xf32>
    %149 = tpu.reciprocal %148 : vector<17x1xf32> -> vector<17x1xf32>
    %150 = vector.broadcast %149 : vector<17x1xf32> to vector<17x17xf32>
    %151 = arith.mulf %146, %150 : vector<17x17xf32>
    %cst_91 = arith.constant dense<0.000000e+00> : vector<17x32xf32>
    %152 = tpu.matmul %151, %138, %cst_91 {dimension_numbers = #tpu.dot_dimension_numbers<[1], [1], [0], [0], [0, 0, 1, 0], [], []>} : vector<17x17xf32>, vector<32x17xf32>, vector<17x32xf32> -> vector<17x32xf32>
    %c1_92 = arith.constant 1 : index
    %c0_93 = arith.constant 0 : index
    %c64_94 = arith.constant 64 : index
    %153 = vector.load %arg3[%c1_92, %c0_93, %c64_94] : memref<2x17x128xf32, #tpu.memory_space<vmem>>, vector<1x17x32xf32>
    %154 = vector.shape_cast %153 : vector<1x17x32xf32> to vector<17x32xf32>
    %155 = vector.shape_cast %152 : vector<17x32xf32> to vector<1x17x32xf32>
    tpu.vector_store %arg3[%c1_92, %c0_93, %c64_94], %155 {strides = array<i32>} : memref<2x17x128xf32, #tpu.memory_space<vmem>>, vector<1x17x32xf32>,
    %c96_95 = arith.constant 96 : index
    %c0_96 = arith.constant 0 : index
    %156 = vector.load %arg4[%c96_95, %c0_96] : memref<384x17xf32, #tpu.memory_space<vmem>>, vector<32x17xf32>
    %c224_97 = arith.constant 224 : index
    %c0_98 = arith.constant 0 : index
    %157 = vector.load %arg4[%c224_97, %c0_98] : memref<384x17xf32, #tpu.memory_space<vmem>>, vector<32x17xf32>
    %c352_99 = arith.constant 352 : index
    %c0_100 = arith.constant 0 : index
    %158 = vector.load %arg4[%c352_99, %c0_100] : memref<384x17xf32, #tpu.memory_space<vmem>>, vector<32x17xf32>
    %159 = tpu.transpose %156, [1, 0] : vector<32x17xf32> -> vector<17x32xf32>
    %cst_101 = arith.constant dense<0.000000e+00> : vector<17x17xf32>
    %160 = tpu.matmul %159, %157, %cst_101 {dimension_numbers = #tpu.dot_dimension_numbers<[1], [0], [0], [1], [0, 0, 1, 1], [], []>} : vector<17x32xf32>, vector<32x17xf32>, vector<17x17xf32> -> vector<17x17xf32>
    %161 = arith.addf %160, %5 : vector<17x17xf32>
    %cst_102 = arith.constant dense<0xFF800000> : vector<17xf32>
    %162 = vector.multi_reduction <maximumf>, %161, %cst_102 [1] : vector<17x17xf32> to vector<17xf32>
    %163 = vector.shape_cast %162 : vector<17xf32> to vector<17x1xf32>
    %164 = vector.broadcast %163 : vector<17x1xf32> to vector<17x17xf32>
    %165 = arith.subf %161, %164 : vector<17x17xf32>
    %166 = math.exp %165 : vector<17x17xf32>
    %cst_103 = arith.constant dense<0.000000e+00> : vector<17xf32>
    %167 = vector.multi_reduction <add>, %166, %cst_103 [1] : vector<17x17xf32> to vector<17xf32>
    %168 = vector.shape_cast %167 : vector<17xf32> to vector<17x1xf32>
    %169 = tpu.reciprocal %168 : vector<17x1xf32> -> vector<17x1xf32>
    %170 = vector.broadcast %169 : vector<17x1xf32> to vector<17x17xf32>
    %171 = arith.mulf %166, %170 : vector<17x17xf32>
    %cst_104 = arith.constant dense<0.000000e+00> : vector<17x32xf32>
    %172 = tpu.matmul %171, %158, %cst_104 {dimension_numbers = #tpu.dot_dimension_numbers<[1], [1], [0], [0], [0, 0, 1, 0], [], []>} : vector<17x17xf32>, vector<32x17xf32>, vector<17x32xf32> -> vector<17x32xf32>
    %c1_105 = arith.constant 1 : index
    %c0_106 = arith.constant 0 : index
    %c96_107 = arith.constant 96 : index
    %173 = vector.load %arg3[%c1_105, %c0_106, %c96_107] : memref<2x17x128xf32, #tpu.memory_space<vmem>>, vector<1x17x32xf32>
    %174 = vector.shape_cast %173 : vector<1x17x32xf32> to vector<17x32xf32>
    %175 = vector.shape_cast %172 : vector<17x32xf32> to vector<1x17x32xf32>
    tpu.vector_store %arg3[%c1_105, %c0_106, %c96_107], %175 {strides = array<i32>} : memref<2x17x128xf32, #tpu.memory_space<vmem>>, vector<1x17x32xf32>,
    return
  }
  func.func @transform_0(%arg0: i32) -> (i32, i32, i32) {
    %c0_i32 = arith.constant 0 : i32
    %c0_i32_0 = arith.constant 0 : i32
    %c0_i32_1 = arith.constant 0 : i32
    %c0_i32_2 = arith.constant 0 : i32
    return %c0_i32, %c0_i32_0, %c0_i32_1 : i32, i32, i32
  }
  func.func @transform_1(%arg0: i32) -> (i32, i32) {
    %c0_i32 = arith.constant 0 : i32
    %c0_i32_0 = arith.constant 0 : i32
    %c0_i32_1 = arith.constant 0 : i32
    return %c0_i32, %c0_i32_0 : i32, i32
  }
  func.func @transform_2(%arg0: i32) -> (i32, i32, i32) {
    %c0_i32 = arith.constant 0 : i32
    %c0_i32_0 = arith.constant 0 : i32
    %c0_i32_1 = arith.constant 0 : i32
    %c0_i32_2 = arith.constant 0 : i32
    return %c0_i32, %c0_i32_0, %c0_i32_1 : i32, i32, i32
  }
}

</mosaic_0001>

<llo_original>
// kernel: tpu_custom_call.1
$region0: #{tpu_custom_call.1}
  #allocation0 [shape = 'u32[]', space=smem, size = 0x4, offset = 0x4, fixed_abs, tag = 'smem constant byte address 0x4 - core index']
  #allocation1 [shape = 'u32[144,128]{1,0:T(1,128)}', space=vmem, size = 0x12000, scoped, tag = 'internal scratch']
  #allocation2 [shape = 'f32[384,17]{1,0:T(8,128)}', space=vmem, size = 0x30000, scoped, tag = 'scratch operand']
  %s0 = inlined_call_operand.vmem [shape: f32[2,17,128], index: 0, kind: input, shape index: {}]
  %s1 = inlined_call_operand.hbm [shape: f32[384,128], index: 1, kind: input, shape index: {}]
  %s2 = inlined_call_operand.vmem [shape: f32[2,17,128], index: 2, kind: output, shape index: {}]
  %s3 = sld [smem:[#allocation0]]
  $region22: #{tpu_custom_call.1} parent=0
    _
  %s5 = ssub.s32 1, %s3
  %s6 = scalar_select 0, %s5, %s3
  $region1: #{tpu_custom_call.1} parent=0
    #allocation3 [shape = 'u8[196608]{0}', space=vmem, size = 0x30000, scoped, tag = 'input window, operand 1, single buffered']
    #allocation4 [shape = 's32[1]{0}', space=sflag, size = 0x4, scoped, tag = 'scoped memory for tpu_custom_call.1']
    %7 = vsyncpa [#allocation4], 0
    // Predicated region
    $region2: #{tpu_custom_call.1} parent=1 // pred_check
      _
    $region3: #{tpu_custom_call.1} parent=1 // pred_check_branch
      %9 = sbr.rel (0) target = $region5
    $region4: #{tpu_custom_call.1} parent=1 // pred_region
      _
    $region5: #{tpu_custom_call.1} parent=1 // pred_fallthru
      _
    // Predicated region
    $region6: #{tpu_custom_call.1} parent=1 // pred_check
      _
    $region7: #{tpu_custom_call.1} parent=1 // pred_check_branch
      %11 = sbr.rel (0) target = $region9
    $region8: #{tpu_custom_call.1} parent=1 // pred_region
      %s13 = ssub.s32 6144, 6144
      %14 = vsyncadd [#allocation4], %s13
      %s15 = sshll.u32 [#allocation3], 4
      %s16 = int_to_ptr.vmem [resolvable:$true] %s15
      %21 = dma.hbm_to_vmem [thread:$0]  %s1, 6144, %s16, [#allocation4], 128, 128, 8
    $region9: #{tpu_custom_call.1} parent=1 // pred_fallthru
      _
    // Predicated region
    $region10: #{tpu_custom_call.1} parent=1 // pred_check
      _
    $region11: #{tpu_custom_call.1} parent=1 // pred_check_branch
      %23 = sbr.rel (0) target = $region13
    $region12: #{tpu_custom_call.1} parent=1 // pred_region
      %24 = dma.done [#allocation4], 6144
    $region13: #{tpu_custom_call.1} parent=1 // pred_fallthru
      _
    %v25 = vlaneseq
    %v26 = vshrl.u32 %v25, 7
    %v27 = vadd.s32 %v26, 8
    %v28 = vadd.s32 %v26, 16
    %v29 = vlaneseq
    %v30 = vand.u32 %v29, 127
    %vm31 = vcmp.le.s32.totalorder %v30, %v26
    %vm32 = vcmp.le.s32.totalorder %v30, %v27
    %vm33 = vcmp.le.s32.totalorder %v30, %v28
    %v34 = vsel %vm31, 0.0, -inf
    %v35 = vsel %vm32, 0.0, -inf
    %v36 = vsel %vm33, 0.0, -inf
    %v37 = vld [vmem:[%s0] sm:$0xff]
    %v38 = vld [vmem:[%s0 + $0x8] sm:$0xff]
    %v39 = vld [vmem:[%s0 + $0x10] sm:$0x1]
    %v40 = vld [vmem:[#allocation3] sm:$0xff]
    %v41 = vld [vmem:[#allocation3 + $0x8] sm:$0xff]
    %v42 = vld [vmem:[#allocation3 + $0x10] sm:$0xff]
    %v43 = vld [vmem:[#allocation3 + $0x18] sm:$0xff]
    %v44 = vld [vmem:[#allocation3 + $0x20] sm:$0xff]
    %v45 = vld [vmem:[#allocation3 + $0x28] sm:$0xff]
    %v46 = vld [vmem:[#allocation3 + $0x30] sm:$0xff]
    %v47 = vld [vmem:[#allocation3 + $0x38] sm:$0xff]
    %v48 = vld [vmem:[#allocation3 + $0x40] sm:$0xff]
    %v49 = vld [vmem:[#allocation3 + $0x48] sm:$0xff]
    %v50 = vld [vmem:[#allocation3 + $0x50] sm:$0xff]
    %v51 = vld [vmem:[#allocation3 + $0x58] sm:$0xff]
    %v52 = vld [vmem:[#allocation3 + $0x60] sm:$0xff]
    %v53 = vld [vmem:[#allocation3 + $0x68] sm:$0xff]
    %v54 = vld [vmem:[#allocation3 + $0x70] sm:$0xff]
    %v55 = vld [vmem:[#allocation3 + $0x78] sm:$0xff]
    %v56 = vld [vmem:[#allocation3 + $0x80] sm:$0xff]
    %v57 = vld [vmem:[#allocation3 + $0x88] sm:$0xff]
    %v58 = vld [vmem:[#allocation3 + $0x90] sm:$0xff]
    %v59 = vld [vmem:[#allocation3 + $0x98] sm:$0xff]
    %v60 = vld [vmem:[#allocation3 + $0xa0] sm:$0xff]
    %v61 = vld [vmem:[#allocation3 + $0xa8] sm:$0xff]
    %v62 = vld [vmem:[#allocation3 + $0xb0] sm:$0xff]
    %v63 = vld [vmem:[#allocation3 + $0xb8] sm:$0xff]
    %v64 = vld [vmem:[#allocation3 + $0xc0] sm:$0xff]
    %v65 = vld [vmem:[#allocation3 + $0xc8] sm:$0xff]
    %v66 = vld [vmem:[#allocation3 + $0xd0] sm:$0xff]
    %v67 = vld [vmem:[#allocation3 + $0xd8] sm:$0xff]
    %v68 = vld [vmem:[#allocation3 + $0xe0] sm:$0xff]
    %v69 = vld [vmem:[#allocation3 + $0xe8] sm:$0xff]
    %v70 = vld [vmem:[#allocation3 + $0xf0] sm:$0xff]
    %v71 = vld [vmem:[#allocation3 + $0xf8] sm:$0xff]
    %v72 = vld [vmem:[#allocation3 + $0x100] sm:$0xff]
    %v73 = vld [vmem:[#allocation3 + $0x108] sm:$0xff]
    %v74 = vld [vmem:[#allocation3 + $0x110] sm:$0xff]
    %v75 = vld [vmem:[#allocation3 + $0x118] sm:$0xff]
    %v76 = vld [vmem:[#allocation3 + $0x120] sm:$0xff]
    %v77 = vld [vmem:[#allocation3 + $0x128] sm:$0xff]
    %v78 = vld [vmem:[#allocation3 + $0x130] sm:$0xff]
    %v79 = vld [vmem:[#allocation3 + $0x138] sm:$0xff]
    %v80 = vld [vmem:[#allocation3 + $0x140] sm:$0xff]
    %v81 = vld [vmem:[#allocation3 + $0x148] sm:$0xff]
    %v82 = vld [vmem:[#allocation3 + $0x150] sm:$0xff]
    %v83 = vld [vmem:[#allocation3 + $0x158] sm:$0xff]
    %v84 = vld [vmem:[#allocation3 + $0x160] sm:$0xff]
    %v85 = vld [vmem:[#allocation3 + $0x168] sm:$0xff]
    %v86 = vld [vmem:[#allocation3 + $0x170] sm:$0xff]
    %v87 = vld [vmem:[#allocation3 + $0x178] sm:$0xff]
    %88 = vmatprep.subr.mxu0 0.0
    %89 = vmatpush1.xpose.msra.mxu0 %v37
    %90 = vmatprep.subr.mxu0 0.0
    %91 = vmatpush1.xpose.msra.mxu0 %v38
    %92 = vmatprep.subr.mxu0 0.0
    %93 = vmatpush1.xpose.msra.mxu0 %v39
    %94 = vmatprep.subr.mxu0 0.0
    %95 = vmatpush1.xpose.msra.mxu0 0.0
    %96 = vmatprep.subr.mxu0 0.0
    %97 = vmatpush1.xpose.msra.mxu0 0.0
    %98 = vmatprep.subr.mxu0 0.0
    %99 = vmatpush1.xpose.msra.mxu0 0.0
    %100 = vmatprep.subr.mxu0 0.0
    %101 = vmatpush1.xpose.msra.mxu0 0.0
    %102 = vmatprep.subr.mxu0 0.0
    %103 = vmatpush1.xpose.msra.mxu0 0.0
    %104 = vmatprep.subr.mxu0 0.0
    %105 = vmatpush1.xpose.msra.mxu0 0.0
    %106 = vmatprep.subr.mxu0 0.0
    %107 = vmatpush1.xpose.msra.mxu0 0.0
    %108 = vmatprep.subr.mxu0 0.0
    %109 = vmatpush1.xpose.msra.mxu0 0.0
    %110 = vmatprep.subr.mxu0 0.0
    %111 = vmatpush1.xpose.msra.mxu0 0.0
    %112 = vmatprep.subr.mxu0 0.0
    %113 = vmatpush1.xpose.msra.mxu0 0.0
    %114 = vmatprep.subr.mxu0 0.0
    %115 = vmatpush1.xpose.msra.mxu0 0.0
    %116 = vmatprep.subr.mxu0 0.0
    %117 = vmatpush1.xpose.msra.mxu0 0.0
    %118 = vmatprep.subr.mxu0 0.0
    %119 = vmatpush1.xpose.msra.mxu0 0.0
    %120 = vmatprep.subr.mxu0 0.0
    %121 = vmatpush1.xpose.msra.mxu0 0.0
    %122 = vmatprep.subr.mxu0 0.0
    %123 = vmatpush1.xpose.msra.mxu0 0.0
    %124 = vmatprep.subr.mxu0 0.0
    %125 = vmatpush1.xpose.msra.mxu0 0.0
    %126 = vmatprep.subr.mxu0 0.0
    %127 = vmatpush1.xpose.msra.mxu0 0.0
    %128 = vmatprep.subr.mxu0 0.0
    %129 = vmatpush1.xpose.msra.mxu0 0.0
    %130 = vmatprep.subr.mxu0 0.0
    %131 = vmatpush1.xpose.msra.mxu0 0.0
    %132 = vmatprep.subr.mxu0 0.0
    %133 = vmatpush1.xpose.msra.mxu0 0.0
    %134 = vmatprep.subr.mxu0 0.0
    %135 = vmatpush1.xpose.msra.mxu0 0.0
    %136 = vmatprep.subr.mxu0 0.0
    %137 = vmatpush1.xpose.msra.mxu0 0.0
    %138 = vmatprep.subr.mxu0 0.0
    %139 = vmatpush1.xpose.msra.mxu0 0.0
    %140 = vmatprep.subr.mxu0 0.0
    %141 = vmatpush1.xpose.msra.mxu0 0.0
    %142 = vmatprep.subr.mxu0 0.0
    %143 = vmatpush1.xpose.msra.mxu0 0.0
    %144 = vmatprep.subr.mxu0 0.0
    %145 = vmatpush1.xpose.msra.mxu0 0.0
    %146 = vmatprep.subr.mxu0 0.0
    %147 = vmatpush1.xpose.msra.mxu0 0.0
    %148 = vmatprep.subr.mxu0 0.0
    %149 = vmatpush1.xpose.msra.mxu0 0.0
    %150 = vmatprep.subr.mxu0 0.0
    %151 = vmatpush1.xpose.msra.mxu0 0.0
    %152 = vmatprep.mubr.f32.mxu0 0.0
    %153 = vmatmul.mubr.f32.gmra.mrb[0].mxu0 %v40
    %v154 = vpop.f32.mrb[0].mxu0
    %v155 = vadd.f32 0.0, %v154
    %v156 = vpop.f32.mrb[0].mxu0
    %157 = vmatprep.mubr.f32.mxu0 0.0
    %158 = vmatmul.mubr.f32.gmra.mrb[0].mxu0 %v41
    %v159 = vpop.f32.mrb[0].mxu0
    %v160 = vadd.f32 0.0, %v159
    %v161 = vpop.f32.mrb[0].mxu0
    %162 = vmatprep.mubr.f32.mxu0 0.0
    %163 = vmatmul.mubr.f32.gmra.mrb[0].mxu0 %v42
    %v164 = vpop.f32.mrb[0].mxu0
    %v165 = vadd.f32 0.0, %v164
    %v166 = vpop.f32.mrb[0].mxu0
    %167 = vmatprep.mubr.f32.mxu0 0.0
    %168 = vmatmul.mubr.f32.gmra.mrb[0].mxu0 %v43
    %v169 = vpop.f32.mrb[0].mxu0
    %v170 = vadd.f32 0.0, %v169
    %v171 = vpop.f32.mrb[0].mxu0
    %172 = vmatprep.mubr.f32.mxu0 0.0
    %173 = vmatmul.mubr.f32.gmra.mrb[0].mxu0 %v44
    %v174 = vpop.f32.mrb[0].mxu0
    %v175 = vadd.f32 0.0, %v174
    %v176 = vpop.f32.mrb[0].mxu0
    %177 = vmatprep.mubr.f32.mxu0 0.0
    %178 = vmatmul.mubr.f32.gmra.mrb[0].mxu0 %v45
    %v179 = vpop.f32.mrb[0].mxu0
    %v180 = vadd.f32 0.0, %v179
    %v181 = vpop.f32.mrb[0].mxu0
    %182 = vmatprep.mubr.f32.mxu0 0.0
    %183 = vmatmul.mubr.f32.gmra.mrb[0].mxu0 %v46
    %v184 = vpop.f32.mrb[0].mxu0
    %v185 = vadd.f32 0.0, %v184
    %v186 = vpop.f32.mrb[0].mxu0
    %187 = vmatprep.mubr.f32.mxu0 0.0
    %188 = vmatmul.mubr.f32.gmra.mrb[0].mxu0 %v47
    %v189 = vpop.f32.mrb[0].mxu0
    %v190 = vadd.f32 0.0, %v189
    %v191 = vpop.f32.mrb[0].mxu0
    %192 = vmatprep.mubr.f32.mxu0 0.0
    %193 = vmatmul.mubr.f32.gmra.mrb[0].mxu0 %v48
    %v194 = vpop.f32.mrb[0].mxu0
    %v195 = vadd.f32 0.0, %v194
    %v196 = vpop.f32.mrb[0].mxu0
    %197 = vmatprep.mubr.f32.mxu0 0.0
    %198 = vmatmul.mubr.f32.gmra.mrb[0].mxu0 %v49
    %v199 = vpop.f32.mrb[0].mxu0
    %v200 = vadd.f32 0.0, %v199
    %v201 = vpop.f32.mrb[0].mxu0
    %202 = vmatprep.mubr.f32.mxu0 0.0
    %203 = vmatmul.mubr.f32.gmra.mrb[0].mxu0 %v50
    %v204 = vpop.f32.mrb[0].mxu0
    %v205 = vadd.f32 0.0, %v204
    %v206 = vpop.f32.mrb[0].mxu0
    %207 = vmatprep.mubr.f32.mxu0 0.0
    %208 = vmatmul.mubr.f32.gmra.mrb[0].mxu0 %v51
    %v209 = vpop.f32.mrb[0].mxu0
    %v210 = vadd.f32 0.0, %v209
    %v211 = vpop.f32.mrb[0].mxu0
    %212 = vmatprep.mubr.f32.mxu0 0.0
    %213 = vmatmul.mubr.f32.gmra.mrb[0].mxu0 %v52
    %v214 = vpop.f32.mrb[0].mxu0
    %v215 = vadd.f32 0.0, %v214
    %v216 = vpop.f32.mrb[0].mxu0
    %217 = vmatprep.mubr.f32.mxu0 0.0
    %218 = vmatmul.mubr.f32.gmra.mrb[0].mxu0 %v53
    %v219 = vpop.f32.mrb[0].mxu0
    %v220 = vadd.f32 0.0, %v219
    %v221 = vpop.f32.mrb[0].mxu0
    %222 = vmatprep.mubr.f32.mxu0 0.0
    %223 = vmatmul.mubr.f32.gmra.mrb[0].mxu0 %v54
    %v224 = vpop.f32.mrb[0].mxu0
    %v225 = vadd.f32 0.0, %v224
    %v226 = vpop.f32.mrb[0].mxu0
    %227 = vmatprep.mubr.f32.mxu0 0.0
    %228 = vmatmul.mubr.f32.gmra.mrb[0].mxu0 %v55
    %v229 = vpop.f32.mrb[0].mxu0
    %v230 = vadd.f32 0.0, %v229
    %v231 = vpop.f32.mrb[0].mxu0
    %232 = vmatprep.mubr.f32.mxu0 0.0
    %233 = vmatmul.mubr.f32.gmra.mrb[0].mxu0 %v56
    %v234 = vpop.f32.mrb[0].mxu0
    %v235 = vadd.f32 0.0, %v234
    %v236 = vpop.f32.mrb[0].mxu0
    %237 = vmatprep.mubr.f32.mxu0 0.0
    %238 = vmatmul.mubr.f32.gmra.mrb[0].mxu0 %v57
    %v239 = vpop.f32.mrb[0].mxu0
    %v240 = vadd.f32 0.0, %v239
    %v241 = vpop.f32.mrb[0].mxu0
    %242 = vmatprep.mubr.f32.mxu0 0.0
    %243 = vmatmul.mubr.f32.gmra.mrb[0].mxu0 %v58
    %v244 = vpop.f32.mrb[0].mxu0
    %v245 = vadd.f32 0.0, %v244
    %v246 = vpop.f32.mrb[0].mxu0
    %247 = vmatprep.mubr.f32.mxu0 0.0
    %248 = vmatmul.mubr.f32.gmra.mrb[0].mxu0 %v59
    %v249 = vpop.f32.mrb[0].mxu0
    %v250 = vadd.f32 0.0, %v249
    %v251 = vpop.f32.mrb[0].mxu0
    %252 = vmatprep.mubr.f32.mxu0 0.0
    %253 = vmatmul.mubr.f32.gmra.mrb[0].mxu0 %v60
    %v254 = vpop.f32.mrb[0].mxu0
    %v255 = vadd.f32 0.0, %v254
    %v256 = vpop.f32.mrb[0].mxu0
    %257 = vmatprep.mubr.f32.mxu0 0.0
    %258 = vmatmul.mubr.f32.gmra.mrb[0].mxu0 %v61
    %v259 = vpop.f32.mrb[0].mxu0
    %v260 = vadd.f32 0.0, %v259
    %v261 = vpop.f32.mrb[0].mxu0
    %262 = vmatprep.mubr.f32.mxu0 0.0
    %263 = vmatmul.mubr.f32.gmra.mrb[0].mxu0 %v62
    %v264 = vpop.f32.mrb[0].mxu0
    %v265 = vadd.f32 0.0, %v264
    %v266 = vpop.f32.mrb[0].mxu0
    %267 = vmatprep.mubr.f32.mxu0 0.0
    %268 = vmatmul.mubr.f32.gmra.mrb[0].mxu0 %v63
    %v269 = vpop.f32.mrb[0].mxu0
    %v270 = vadd.f32 0.0, %v269
    %v271 = vpop.f32.mrb[0].mxu0
    %272 = vmatprep.mubr.f32.mxu0 0.0
    %273 = vmatmul.mubr.f32.gmra.mrb[0].mxu0 %v64
    %v274 = vpop.f32.mrb[0].mxu0
    %v275 = vadd.f32 0.0, %v274
    %v276 = vpop.f32.mrb[0].mxu0
    %277 = vmatprep.mubr.f32.mxu0 0.0
    %278 = vmatmul.mubr.f32.gmra.mrb[0].mxu0 %v65
    %v279 = vpop.f32.mrb[0].mxu0
    %v280 = vadd.f32 0.0, %v279
    %v281 = vpop.f32.mrb[0].mxu0
    %282 = vmatprep.mubr.f32.mxu0 0.0
    %283 = vmatmul.mubr.f32.gmra.mrb[0].mxu0 %v66
    %v284 = vpop.f32.mrb[0].mxu0
    %v285 = vadd.f32 0.0, %v284
    %v286 = vpop.f32.mrb[0].mxu0
    %287 = vmatprep.mubr.f32.mxu0 0.0
    %288 = vmatmul.mubr.f32.gmra.mrb[0].mxu0 %v67
    %v289 = vpop.f32.mrb[0].mxu0
    %v290 = vadd.f32 0.0, %v289
    %v291 = vpop.f32.mrb[0].mxu0
    %292 = vmatprep.mubr.f32.mxu0 0.0
    %293 = vmatmul.mubr.f32.gmra.mrb[0].mxu0 %v68
    %v294 = vpop.f32.mrb[0].mxu0
    %v295 = vadd.f32 0.0, %v294
    %v296 = vpop.f32.mrb[0].mxu0
    %297 = vmatprep.mubr.f32.mxu0 0.0
    %298 = vmatmul.mubr.f32.gmra.mrb[0].mxu0 %v69
    %v299 = vpop.f32.mrb[0].mxu0
    %v300 = vadd.f32 0.0, %v299
    %v301 = vpop.f32.mrb[0].mxu0
    %302 = vmatprep.mubr.f32.mxu0 0.0
    %303 = vmatmul.mubr.f32.gmra.mrb[0].mxu0 %v70
    %v304 = vpop.f32.mrb[0].mxu0
    %v305 = vadd.f32 0.0, %v304
    %v306 = vpop.f32.mrb[0].mxu0
    %307 = vmatprep.mubr.f32.mxu0 0.0
    %308 = vmatmul.mubr.f32.gmra.mrb[0].mxu0 %v71
    %v309 = vpop.f32.mrb[0].mxu0
    %v310 = vadd.f32 0.0, %v309
    %v311 = vpop.f32.mrb[0].mxu0
    %312 = vmatprep.mubr.f32.mxu0 0.0
    %313 = vmatmul.mubr.f32.gmra.mrb[0].mxu0 %v72
    %v314 = vpop.f32.mrb[0].mxu0
    %v315 = vadd.f32 0.0, %v314
    %v316 = vpop.f32.mrb[0].mxu0
    %317 = vmatprep.mubr.f32.mxu0 0.0
    %318 = vmatmul.mubr.f32.gmra.mrb[0].mxu0 %v73
    %v319 = vpop.f32.mrb[0].mxu0
    %v320 = vadd.f32 0.0, %v319
    %v321 = vpop.f32.mrb[0].mxu0
    %322 = vmatprep.mubr.f32.mxu0 0.0
    %323 = vmatmul.mubr.f32.gmra.mrb[0].mxu0 %v74
    %v324 = vpop.f32.mrb[0].mxu0
    %v325 = vadd.f32 0.0, %v324
    %v326 = vpop.f32.mrb[0].mxu0
    %327 = vmatprep.mubr.f32.mxu0 0.0
    %328 = vmatmul.mubr.f32.gmra.mrb[0].mxu0 %v75
    %v329 = vpop.f32.mrb[0].mxu0
    %v330 = vadd.f32 0.0, %v329
    %v331 = vpop.f32.mrb[0].mxu0
    %332 = vmatprep.mubr.f32.mxu0 0.0
    %333 = vmatmul.mubr.f32.gmra.mrb[0].mxu0 %v76
    %v334 = vpop.f32.mrb[0].mxu0
    %v335 = vadd.f32 0.0, %v334
    %v336 = vpop.f32.mrb[0].mxu0
    %337 = vmatprep.mubr.f32.mxu0 0.0
    %338 = vmatmul.mubr.f32.gmra.mrb[0].mxu0 %v77
    %v339 = vpop.f32.mrb[0].mxu0
    %v340 = vadd.f32 0.0, %v339
    %v341 = vpop.f32.mrb[0].mxu0
    %342 = vmatprep.mubr.f32.mxu0 0.0
    %343 = vmatmul.mubr.f32.gmra.mrb[0].mxu0 %v78
    %v344 = vpop.f32.mrb[0].mxu0
    %v345 = vadd.f32 0.0, %v344
    %v346 = vpop.f32.mrb[0].mxu0
    %347 = vmatprep.mubr.f32.mxu0 0.0
    %348 = vmatmul.mubr.f32.gmra.mrb[0].mxu0 %v79
    %v349 = vpop.f32.mrb[0].mxu0
    %v350 = vadd.f32 0.0, %v349
    %v351 = vpop.f32.mrb[0].mxu0
    %352 = vmatprep.mubr.f32.mxu0 0.0
    %353 = vmatmul.mubr.f32.gmra.mrb[0].mxu0 %v80
    %v354 = vpop.f32.mrb[0].mxu0
    %v355 = vadd.f32 0.0, %v354
    %v356 = vpop.f32.mrb[0].mxu0
    %357 = vmatprep.mubr.f32.mxu0 0.0
    %358 = vmatmul.mubr.f32.gmra.mrb[0].mxu0 %v81
    %v359 = vpop.f32.mrb[0].mxu0
    %v360 = vadd.f32 0.0, %v359
    %v361 = vpop.f32.mrb[0].mxu0
    %362 = vmatprep.mubr.f32.mxu0 0.0
    %363 = vmatmul.mubr.f32.gmra.mrb[0].mxu0 %v82
    %v364 = vpop.f32.mrb[0].mxu0
    %v365 = vadd.f32 0.0, %v364
    %v366 = vpop.f32.mrb[0].mxu0
    %367 = vmatprep.mubr.f32.mxu0 0.0
    %368 = vmatmul.mubr.f32.gmra.mrb[0].mxu0 %v83
    %v369 = vpop.f32.mrb[0].mxu0
    %v370 = vadd.f32 0.0, %v369
    %v371 = vpop.f32.mrb[0].mxu0
    %372 = vmatprep.mubr.f32.mxu0 0.0
    %373 = vmatmul.mubr.f32.gmra.mrb[0].mxu0 %v84
    %v374 = vpop.f32.mrb[0].mxu0
    %v375 = vadd.f32 0.0, %v374
    %v376 = vpop.f32.mrb[0].mxu0
    %377 = vmatprep.mubr.f32.mxu0 0.0
    %378 = vmatmul.mubr.f32.gmra.mrb[0].mxu0 %v85
    %v379 = vpop.f32.mrb[0].mxu0
    %v380 = vadd.f32 0.0, %v379
    %v381 = vpop.f32.mrb[0].mxu0
    %382 = vmatprep.mubr.f32.mxu0 0.0
    %383 = vmatmul.mubr.f32.gmra.mrb[0].mxu0 %v86
    %v384 = vpop.f32.mrb[0].mxu0
    %v385 = vadd.f32 0.0, %v384
    %v386 = vpop.f32.mrb[0].mxu0
    %387 = vmatprep.mubr.f32.mxu0 0.0
    %388 = vmatmul.mubr.f32.gmra.mrb[0].mxu0 %v87
    %v389 = vpop.f32.mrb[0].mxu0
    %v390 = vadd.f32 0.0, %v389
    %v391 = vpop.f32.mrb[0].mxu0
    %392 = vdwg.mxu0
    %vm393 = vcmask 138240
    %394 = vst.msk [vmem:[#allocation2] sm:$0xff] %vm393, %v155
    %395 = vst.msk [vmem:[#allocation2 + $0x8] sm:$0xff] %vm393, %v160
    %396 = vst.msk [vmem:[#allocation2 + $0x10] sm:$0xff] %vm393, %v165
    %397 = vst.msk [vmem:[#allocation2 + $0x18] sm:$0xff] %vm393, %v170
    %398 = vst.msk [vmem:[#allocation2 + $0x20] sm:$0xff] %vm393, %v175
    %399 = vst.msk [vmem:[#allocation2 + $0x28] sm:$0xff] %vm393, %v180
    %400 = vst.msk [vmem:[#allocation2 + $0x30] sm:$0xff] %vm393, %v185
    %401 = vst.msk [vmem:[#allocation2 + $0x38] sm:$0xff] %vm393, %v190
    %402 = vst.msk [vmem:[#allocation2 + $0x40] sm:$0xff] %vm393, %v195
    %403 = vst.msk [vmem:[#allocation2 + $0x48] sm:$0xff] %vm393, %v200
    %404 = vst.msk [vmem:[#allocation2 + $0x50] sm:$0xff] %vm393, %v205
    %405 = vst.msk [vmem:[#allocation2 + $0x58] sm:$0xff] %vm393, %v210
    %406 = vst.msk [vmem:[#allocation2 + $0x60] sm:$0xff] %vm393, %v215
    %407 = vst.msk [vmem:[#allocation2 + $0x68] sm:$0xff] %vm393, %v220
    %408 = vst.msk [vmem:[#allocation2 + $0x70] sm:$0xff] %vm393, %v225
    %409 = vst.msk [vmem:[#allocation2 + $0x78] sm:$0xff] %vm393, %v230
    %410 = vst.msk [vmem:[#allocation2 + $0x80] sm:$0xff] %vm393, %v235
    %411 = vst.msk [vmem:[#allocation2 + $0x88] sm:$0xff] %vm393, %v240
    %412 = vst.msk [vmem:[#allocation2 + $0x90] sm:$0xff] %vm393, %v245
    %413 = vst.msk [vmem:[#allocation2 + $0x98] sm:$0xff] %vm393, %v250
    %414 = vst.msk [vmem:[#allocation2 + $0xa0] sm:$0xff] %vm393, %v255
    %415 = vst.msk [vmem:[#allocation2 + $0xa8] sm:$0xff] %vm393, %v260
    %416 = vst.msk [vmem:[#allocation2 + $0xb0] sm:$0xff] %vm393, %v265
    %417 = vst.msk [vmem:[#allocation2 + $0xb8] sm:$0xff] %vm393, %v270
    %418 = vst.msk [vmem:[#allocation2 + $0xc0] sm:$0xff] %vm393, %v275
    %419 = vst.msk [vmem:[#allocation2 + $0xc8] sm:$0xff] %vm393, %v280
    %420 = vst.msk [vmem:[#allocation2 + $0xd0] sm:$0xff] %vm393, %v285
    %421 = vst.msk [vmem:[#allocation2 + $0xd8] sm:$0xff] %vm393, %v290
    %422 = vst.msk [vmem:[#allocation2 + $0xe0] sm:$0xff] %vm393, %v295
    %423 = vst.msk [vmem:[#allocation2 + $0xe8] sm:$0xff] %vm393, %v300
    %424 = vst.msk [vmem:[#allocation2 + $0xf0] sm:$0xff] %vm393, %v305
    %425 = vst.msk [vmem:[#allocation2 + $0xf8] sm:$0xff] %vm393, %v310
    %426 = vst.msk [vmem:[#allocation2 + $0x100] sm:$0xff] %vm393, %v315
    %427 = vst.msk [vmem:[#allocation2 + $0x108] sm:$0xff] %vm393, %v320
    %428 = vst.msk [vmem:[#allocation2 + $0x110] sm:$0xff] %vm393, %v325
    %429 = vst.msk [vmem:[#allocation2 + $0x118] sm:$0xff] %vm393, %v330
    %430 = vst.msk [vmem:[#allocation2 + $0x120] sm:$0xff] %vm393, %v335
    %431 = vst.msk [vmem:[#allocation2 + $0x128] sm:$0xff] %vm393, %v340
    %432 = vst.msk [vmem:[#allocation2 + $0x130] sm:$0xff] %vm393, %v345
    %433 = vst.msk [vmem:[#allocation2 + $0x138] sm:$0xff] %vm393, %v350
    %434 = vst.msk [vmem:[#allocation2 + $0x140] sm:$0xff] %vm393, %v355
    %435 = vst.msk [vmem:[#allocation2 + $0x148] sm:$0xff] %vm393, %v360
    %436 = vst.msk [vmem:[#allocation2 + $0x150] sm:$0xff] %vm393, %v365
    %437 = vst.msk [vmem:[#allocation2 + $0x158] sm:$0xff] %vm393, %v370
    %438 = vst.msk [vmem:[#allocation2 + $0x160] sm:$0xff] %vm393, %v375
    %439 = vst.msk [vmem:[#allocation2 + $0x168] sm:$0xff] %vm393, %v380
    %440 = vst.msk [vmem:[#allocation2 + $0x170] sm:$0xff] %vm393, %v385
    %441 = vst.msk [vmem:[#allocation2 + $0x178] sm:$0xff] %vm393, %v390
    %v442 = vld [vmem:[#allocation2] sm:$0xff]
    %v443 = vld [vmem:[#allocation2 + $0x8] sm:$0xff]
    %v444 = vld [vmem:[#allocation2 + $0x10] sm:$0xff]
    %v445 = vld [vmem:[#allocation2 + $0x18] sm:$0xff]
    %v446 = vld [vmem:[#allocation2 + $0x80] sm:$0xff]
    %v447 = vld [vmem:[#allocation2 + $0x88] sm:$0xff]
    %v448 = vld [vmem:[#allocation2 + $0x90] sm:$0xff]
    %v449 = vld [vmem:[#allocation2 + $0x98] sm:$0xff]
    %v450 = vld [vmem:[#allocation2 + $0x100] sm:$0xff]
    %v451 = vld [vmem:[#allocation2 + $0x108] sm:$0xff]
    %v452 = vld [vmem:[#allocation2 + $0x110] sm:$0xff]
    %v453 = vld [vmem:[#allocation2 + $0x118] sm:$0xff]
    %454 = vxpose.xlu0.b32.start [1/16] %v442, 128
    %455 = vxpose.xlu0.b32.cont [2/16] %v443, 128
    %456 = vxpose.xlu0.b32.cont [3/16] %v444, 128
    %457 = vxpose.xlu0.b32.cont [4/16] %v445, 128
    %458 = vxpose.xlu0.b32.cont [5/16] 0.0, 128
    %459 = vxpose.xlu0.b32.cont [6/16] 0.0, 128
    %460 = vxpose.xlu0.b32.cont [7/16] 0.0, 128
    %461 = vxpose.xlu0.b32.cont [8/16] 0.0, 128
    %462 = vxpose.xlu0.b32.cont [9/16] 0.0, 128
    %463 = vxpose.xlu0.b32.cont [10/16] 0.0, 128
    %464 = vxpose.xlu0.b32.cont [11/16] 0.0, 128
    %465 = vxpose.xlu0.b32.cont [12/16] 0.0, 128
    %466 = vxpose.xlu0.b32.cont [13/16] 0.0, 128
    %467 = vxpose.xlu0.b32.cont [14/16] 0.0, 128
    %468 = vxpose.xlu0.b32.cont [15/16] 0.0, 128
    %469 = vxpose.xlu0.b32.end [16/16] 0.0, 128
    %v470 = vpop.trf.xlu0
    %v471 = vpop.trf.xlu0
    %v472 = vpop.trf.xlu0
    %v473 = vpop.trf.xlu0
    %v474 = vpop.trf.xlu0
    %v475 = vpop.trf.xlu0
    %v476 = vpop.trf.xlu0
    %v477 = vpop.trf.xlu0
    %v478 = vpop.trf.xlu0
    %v479 = vpop.trf.xlu0
    %v480 = vpop.trf.xlu0
    %v481 = vpop.trf.xlu0
    %v482 = vpop.trf.xlu0
    %v483 = vpop.trf.xlu0
    %v484 = vpop.trf.xlu0
    %v485 = vpop.trf.xlu0
    %vm486 = vcmask 261120
    %v488 = vsel %vm486, %v470, 0
    %v491 = vsel %vm486, %v471, 0
    %v494 = vsel %vm486, %v472, 0
    %496 = vmatprep.subr.mxu0 0.0
    %497 = vmatpush1.msra.mxu0 %v446
    %498 = vmatprep.subr.mxu0 0.0
    %499 = vmatpush1.msra.mxu0 %v447
    %500 = vmatprep.subr.mxu0 0.0
    %501 = vmatpush1.msra.mxu0 %v448
    %502 = vmatprep.subr.mxu0 0.0
    %503 = vmatpush1.msra.mxu0 %v449
    %504 = vmatprep.subr.mxu0 0.0
    %505 = vmatpush1.msra.mxu0 0.0
    %506 = vmatprep.subr.mxu0 0.0
    %507 = vmatpush1.msra.mxu0 0.0
    %508 = vmatprep.subr.mxu0 0.0
    %509 = vmatpush1.msra.mxu0 0.0
    %510 = vmatprep.subr.mxu0 0.0
    %511 = vmatpush1.msra.mxu0 0.0
    %512 = vmatprep.subr.mxu0 0.0
    %513 = vmatpush1.msra.mxu0 0.0
    %514 = vmatprep.subr.mxu0 0.0
    %515 = vmatpush1.msra.mxu0 0.0
    %516 = vmatprep.subr.mxu0 0.0
    %517 = vmatpush1.msra.mxu0 0.0
    %518 = vmatprep.subr.mxu0 0.0
    %519 = vmatpush1.msra.mxu0 0.0
    %520 = vmatprep.subr.mxu0 0.0
    %521 = vmatpush1.msra.mxu0 0.0
    %522 = vmatprep.subr.mxu0 0.0
    %523 = vmatpush1.msra.mxu0 0.0
    %524 = vmatprep.subr.mxu0 0.0
    %525 = vmatpush1.msra.mxu0 0.0
    %526 = vmatprep.subr.mxu0 0.0
    %527 = vmatpush1.msra.mxu0 0.0
    %528 = vmatprep.subr.mxu0 0.0
    %529 = vmatpush1.msra.mxu0 0.0
    %530 = vmatprep.subr.mxu0 0.0
    %531 = vmatpush1.msra.mxu0 0.0
    %532 = vmatprep.subr.mxu0 0.0
    %533 = vmatpush1.msra.mxu0 0.0
    %534 = vmatprep.subr.mxu0 0.0
    %535 = vmatpush1.msra.mxu0 0.0
    %536 = vmatprep.subr.mxu0 0.0
    %537 = vmatpush1.msra.mxu0 0.0
    %538 = vmatprep.subr.mxu0 0.0
    %539 = vmatpush1.msra.mxu0 0.0
    %540 = vmatprep.subr.mxu0 0.0
    %541 = vmatpush1.msra.mxu0 0.0
    %542 = vmatprep.subr.mxu0 0.0
    %543 = vmatpush1.msra.mxu0 0.0
    %544 = vmatprep.subr.mxu0 0.0
    %545 = vmatpush1.msra.mxu0 0.0
    %546 = vmatprep.subr.mxu0 0.0
    %547 = vmatpush1.msra.mxu0 0.0
    %548 = vmatprep.subr.mxu0 0.0
    %549 = vmatpush1.msra.mxu0 0.0
    %550 = vmatprep.subr.mxu0 0.0
    %551 = vmatpush1.msra.mxu0 0.0
    %552 = vmatprep.subr.mxu0 0.0
    %553 = vmatpush1.msra.mxu0 0.0
    %554 = vmatprep.subr.mxu0 0.0
    %555 = vmatpush1.msra.mxu0 0.0
    %556 = vmatprep.subr.mxu0 0.0
    %557 = vmatpush1.msra.mxu0 0.0
    %558 = vmatprep.subr.mxu0 0.0
    %559 = vmatpush1.msra.mxu0 0.0
    %560 = vmatprep.mubr.f32.mxu0 0.0
    %561 = vmatmul.mubr.f32.gmra.mrb[0].mxu0 %v488
    %v562 = vpop.f32.mrb[0].mxu0
    %v563 = vadd.f32 %v34, %v562
    %v564 = vpop.f32.mrb[0].mxu0
    %565 = vmatprep.mubr.f32.mxu0 0.0
    %566 = vmatmul.mubr.f32.gmra.mrb[0].mxu0 %v491
    %v567 = vpop.f32.mrb[0].mxu0
    %v568 = vadd.f32 %v35, %v567
    %v569 = vpop.f32.mrb[0].mxu0
    %570 = vmatprep.mubr.f32.mxu0 0.0
    %571 = vmatmul.mubr.f32.gmra.mrb[0].mxu0 %v494
    %v572 = vpop.f32.mrb[0].mxu0
    %v573 = vadd.f32 %v36, %v572
    %v574 = vpop.f32.mrb[0].mxu0
    %575 = vdwg.mxu0
    %v576 = vsel %vm393, %v563, -inf
    %577 = vmax.xlane.f32.xlu0 %v576
    %v578 = vpop.xlane.xlu0 %577
    %v579 = vsel %vm393, %v568, -inf
    %580 = vmax.xlane.f32.xlu0 %v579
    %v581 = vpop.xlane.xlu0 %580
    %vm582 = vcmask 131072
    %v583 = vsel %vm582, %v573, -inf
    %584 = vmax.xlane.f32.xlu0 %v583
    %v585 = vpop.xlane.xlu0 %584
    %v586 = vsub.f32 %v563, %v578
    %v587 = vsub.f32 %v568, %v581
    %v588 = vsub.f32 %v573, %v585
    %v589 = vmul.f32 %v586, 1.442695
    %v590 = vpow.pop %v589
    %v591 = vmul.f32 %v587, 1.442695
    %v592 = vpow.pop %v591
    %v593 = vmul.f32 %v588, 1.442695
    %v594 = vpow.pop %v593
    %v595 = vsel %vm393, %v590, 0.0
    %596 = vadd.xlane.f32.xlu0 %v595
    %v597 = vpop.xlane.xlu0 %596
    %v598 = vsel %vm393, %v592, 0.0
    %599 = vadd.xlane.f32.xlu0 %v598
    %v600 = vpop.xlane.xlu0 %599
    %v601 = vsel %vm582, %v594, 0.0
    %602 = vadd.xlane.f32.xlu0 %v601
    %v603 = vpop.xlane.xlu0 %602
    %v604 = vrcp.pop %v597
    %v605 = vrcp.pop %v600
    %v606 = vrcp.pop %v603
    %v607 = vmul.f32 %v590, %v604
    %v608 = vmul.f32 %v592, %v605
    %v609 = vmul.f32 %v594, %v606
    %v611 = vsel %vm393, %v607, 0
    %v614 = vsel %vm393, %v608, 0
    %v617 = vsel %vm393, %v609, 0
    %v620 = vsel %vm393, %v450, 0
    %v623 = vsel %vm393, %v451, 0
    %v626 = vsel %vm393, %v452, 0
    %v629 = vsel %vm393, %v453, 0
    %631 = vmatprep.subr.mxu0 0.0
    %632 = vmatpush1.xpose.msra.mxu0 %v620
    %633 = vmatprep.subr.mxu0 0.0
    %634 = vmatpush1.xpose.msra.mxu0 %v623
    %635 = vmatprep.subr.mxu0 0.0
    %636 = vmatpush1.xpose.msra.mxu0 %v626
    %637 = vmatprep.subr.mxu0 0.0
    %638 = vmatpush1.xpose.msra.mxu0 %v629
    %639 = vmatprep.subr.mxu0 0.0
    %640 = vmatpush1.xpose.msra.mxu0 0.0
    %641 = vmatprep.subr.mxu0 0.0
    %642 = vmatpush1.xpose.msra.mxu0 0.0
    %643 = vmatprep.subr.mxu0 0.0
    %644 = vmatpush1.xpose.msra.mxu0 0.0
    %645 = vmatprep.subr.mxu0 0.0
    %646 = vmatpush1.xpose.msra.mxu0 0.0
    %647 = vmatprep.subr.mxu0 0.0
    %648 = vmatpush1.xpose.msra.mxu0 0.0
    %649 = vmatprep.subr.mxu0 0.0
    %650 = vmatpush1.xpose.msra.mxu0 0.0
    %651 = vmatprep.subr.mxu0 0.0
    %652 = vmatpush1.xpose.msra.mxu0 0.0
    %653 = vmatprep.subr.mxu0 0.0
    %654 = vmatpush1.xpose.msra.mxu0 0.0
    %655 = vmatprep.subr.mxu0 0.0
    %656 = vmatpush1.xpose.msra.mxu0 0.0
    %657 = vmatprep.subr.mxu0 0.0
    %658 = vmatpush1.xpose.msra.mxu0 0.0
    %659 = vmatprep.subr.mxu0 0.0
    %660 = vmatpush1.xpose.msra.mxu0 0.0
    %661 = vmatprep.subr.mxu0 0.0
    %662 = vmatpush1.xpose.msra.mxu0 0.0
    %663 = vmatprep.subr.mxu0 0.0
    %664 = vmatpush1.xpose.msra.mxu0 0.0
    %665 = vmatprep.subr.mxu0 0.0
    %666 = vmatpush1.xpose.msra.mxu0 0.0
    %667 = vmatprep.subr.mxu0 0.0
    %668 = vmatpush1.xpose.msra.mxu0 0.0
    %669 = vmatprep.subr.mxu0 0.0
    %670 = vmatpush1.xpose.msra.mxu0 0.0
    %671 = vmatprep.subr.mxu0 0.0
    %672 = vmatpush1.xpose.msra.mxu0 0.0
    %673 = vmatprep.subr.mxu0 0.0
    %674 = vmatpush1.xpose.msra.mxu0 0.0
    %675 = vmatprep.subr.mxu0 0.0
    %676 = vmatpush1.xpose.msra.mxu0 0.0
    %677 = vmatprep.subr.mxu0 0.0
    %678 = vmatpush1.xpose.msra.mxu0 0.0
    %679 = vmatprep.subr.mxu0 0.0
    %680 = vmatpush1.xpose.msra.mxu0 0.0
    %681 = vmatprep.subr.mxu0 0.0
    %682 = vmatpush1.xpose.msra.mxu0 0.0
    %683 = vmatprep.subr.mxu0 0.0
    %684 = vmatpush1.xpose.msra.mxu0 0.0
    %685 = vmatprep.subr.mxu0 0.0
    %686 = vmatpush1.xpose.msra.mxu0 0.0
    %687 = vmatprep.subr.mxu0 0.0
    %688 = vmatpush1.xpose.msra.mxu0 0.0
    %689 = vmatprep.subr.mxu0 0.0
    %690 = vmatpush1.xpose.msra.mxu0 0.0
    %691 = vmatprep.subr.mxu0 0.0
    %692 = vmatpush1.xpose.msra.mxu0 0.0
    %693 = vmatprep.subr.mxu0 0.0
    %694 = vmatpush1.xpose.msra.mxu0 0.0
    %695 = vmatprep.mubr.f32.mxu0 0.0
    %696 = vmatmul.mubr.f32.gmra.mrb[0].mxu0 %v611
    %v697 = vpop.f32.mrb[0].mxu0
    %v698 = vadd.f32 0.0, %v697
    %v699 = vpop.f32.mrb[0].mxu0
    %700 = vmatprep.mubr.f32.mxu0 0.0
    %701 = vmatmul.mubr.f32.gmra.mrb[0].mxu0 %v614
    %v702 = vpop.f32.mrb[0].mxu0
    %v703 = vadd.f32 0.0, %v702
    %v704 = vpop.f32.mrb[0].mxu0
    %705 = vmatprep.mubr.f32.mxu0 0.0
    %706 = vmatmul.mubr.f32.gmra.mrb[0].mxu0 %v617
    %v707 = vpop.f32.mrb[0].mxu0
    %v708 = vadd.f32 0.0, %v707
    %v709 = vpop.f32.mrb[0].mxu0
    %710 = vdwg.mxu0
    %711 = vst.msk [vmem:[%s2] sm:$0xff] %vm486, %v698
    %712 = vst.msk [vmem:[%s2 + $0x8] sm:$0xff] %vm486, %v703
    %vm713 = vcmask 253952
    %714 = vst.msk [vmem:[%s2 + $0x10] sm:$0x1] %vm713, %v708
    %v715 = vld [vmem:[#allocation2 + $0x20] sm:$0xff]
    %v716 = vld [vmem:[#allocation2 + $0x28] sm:$0xff]
    %v717 = vld [vmem:[#allocation2 + $0x30] sm:$0xff]
    %v718 = vld [vmem:[#allocation2 + $0x38] sm:$0xff]
    %v719 = vld [vmem:[#allocation2 + $0xa0] sm:$0xff]
    %v720 = vld [vmem:[#allocation2 + $0xa8] sm:$0xff]
    %v721 = vld [vmem:[#allocation2 + $0xb0] sm:$0xff]
    %v722 = vld [vmem:[#allocation2 + $0xb8] sm:$0xff]
    %v723 = vld [vmem:[#allocation2 + $0x120] sm:$0xff]
    %v724 = vld [vmem:[#allocation2 + $0x128] sm:$0xff]
    %v725 = vld [vmem:[#allocation2 + $0x130] sm:$0xff]
    %v726 = vld [vmem:[#allocation2 + $0x138] sm:$0xff]
    %727 = vxpose.xlu0.b32.start [1/16] %v715, 128
    %728 = vxpose.xlu0.b32.cont [2/16] %v716, 128
    %729 = vxpose.xlu0.b32.cont [3/16] %v717, 128
    %730 = vxpose.xlu0.b32.cont [4/16] %v718, 128
    %731 = vxpose.xlu0.b32.cont [5/16] 0.0, 128
    %732 = vxpose.xlu0.b32.cont [6/16] 0.0, 128
    %733 = vxpose.xlu0.b32.cont [7/16] 0.0, 128
    %734 = vxpose.xlu0.b32.cont [8/16] 0.0, 128
    %735 = vxpose.xlu0.b32.cont [9/16] 0.0, 128
    %736 = vxpose.xlu0.b32.cont [10/16] 0.0, 128
    %737 = vxpose.xlu0.b32.cont [11/16] 0.0, 128
    %738 = vxpose.xlu0.b32.cont [12/16] 0.0, 128
    %739 = vxpose.xlu0.b32.cont [13/16] 0.0, 128
    %740 = vxpose.xlu0.b32.cont [14/16] 0.0, 128
    %741 = vxpose.xlu0.b32.cont [15/16] 0.0, 128
    %742 = vxpose.xlu0.b32.end [16/16] 0.0, 128
    %v743 = vpop.trf.xlu0
    %v744 = vpop.trf.xlu0
    %v745 = vpop.trf.xlu0
    %v746 = vpop.trf.xlu0
    %v747 = vpop.trf.xlu0
    %v748 = vpop.trf.xlu0
    %v749 = vpop.trf.xlu0
    %v750 = vpop.trf.xlu0
    %v751 = vpop.trf.xlu0
    %v752 = vpop.trf.xlu0
    %v753 = vpop.trf.xlu0
    %v754 = vpop.trf.xlu0
    %v755 = vpop.trf.xlu0
    %v756 = vpop.trf.xlu0
    %v757 = vpop.trf.xlu0
    %v758 = vpop.trf.xlu0
    %v760 = vsel %vm486, %v743, 0
    %v763 = vsel %vm486, %v744, 0
    %v766 = vsel %vm486, %v745, 0
    %768 = vmatprep.subr.mxu0 0.0
    %769 = vmatpush1.msra.mxu0 %v719
    %770 = vmatprep.subr.mxu0 0.0
    %771 = vmatpush1.msra.mxu0 %v720
    %772 = vmatprep.subr.mxu0 0.0
    %773 = vmatpush1.msra.mxu0 %v721
    %774 = vmatprep.subr.mxu0 0.0
    %775 = vmatpush1.msra.mxu0 %v722
    %776 = vmatprep.subr.mxu0 0.0
    %777 = vmatpush1.msra.mxu0 0.0
    %778 = vmatprep.subr.mxu0 0.0
    %779 = vmatpush1.msra.mxu0 0.0
    %780 = vmatprep.subr.mxu0 0.0
    %781 = vmatpush1.msra.mxu0 0.0
    %782 = vmatprep.subr.mxu0 0.0
    %783 = vmatpush1.msra.mxu0 0.0
    %784 = vmatprep.subr.mxu0 0.0
    %785 = vmatpush1.msra.mxu0 0.0
    %786 = vmatprep.subr.mxu0 0.0
    %787 = vmatpush1.msra.mxu0 0.0
    %788 = vmatprep.subr.mxu0 0.0
    %789 = vmatpush1.msra.mxu0 0.0
    %790 = vmatprep.subr.mxu0 0.0
    %791 = vmatpush1.msra.mxu0 0.0
    %792 = vmatprep.subr.mxu0 0.0
    %793 = vmatpush1.msra.mxu0 0.0
    %794 = vmatprep.subr.mxu0 0.0
    %795 = vmatpush1.msra.mxu0 0.0
    %796 = vmatprep.subr.mxu0 0.0
    %797 = vmatpush1.msra.mxu0 0.0
    %798 = vmatprep.subr.mxu0 0.0
    %799 = vmatpush1.msra.mxu0 0.0
    %800 = vmatprep.subr.mxu0 0.0
    %801 = vmatpush1.msra.mxu0 0.0
    %802 = vmatprep.subr.mxu0 0.0
    %803 = vmatpush1.msra.mxu0 0.0
    %804 = vmatprep.subr.mxu0 0.0
    %805 = vmatpush1.msra.mxu0 0.0
    %806 = vmatprep.subr.mxu0 0.0
    %807 = vmatpush1.msra.mxu0 0.0
    %808 = vmatprep.subr.mxu0 0.0
    %809 = vmatpush1.msra.mxu0 0.0
    %810 = vmatprep.subr.mxu0 0.0
    %811 = vmatpush1.msra.mxu0 0.0
    %812 = vmatprep.subr.mxu0 0.0
    %813 = vmatpush1.msra.mxu0 0.0
    %814 = vmatprep.subr.mxu0 0.0
    %815 = vmatpush1.msra.mxu0 0.0
    %816 = vmatprep.subr.mxu0 0.0
    %817 = vmatpush1.msra.mxu0 0.0
    %818 = vmatprep.subr.mxu0 0.0
    %819 = vmatpush1.msra.mxu0 0.0
    %820 = vmatprep.subr.mxu0 0.0
    %821 = vmatpush1.msra.mxu0 0.0
    %822 = vmatprep.subr.mxu0 0.0
    %823 = vmatpush1.msra.mxu0 0.0
    %824 = vmatprep.subr.mxu0 0.0
    %825 = vmatpush1.msra.mxu0 0.0
    %826 = vmatprep.subr.mxu0 0.0
    %827 = vmatpush1.msra.mxu0 0.0
    %828 = vmatprep.subr.mxu0 0.0
    %829 = vmatpush1.msra.mxu0 0.0
    %830 = vmatprep.subr.mxu0 0.0
    %831 = vmatpush1.msra.mxu0 0.0
    %832 = vmatprep.mubr.f32.mxu0 0.0
    %833 = vmatmul.mubr.f32.gmra.mrb[0].mxu0 %v760
    %v834 = vpop.f32.mrb[0].mxu0
    %v835 = vadd.f32 %v34, %v834
    %v836 = vpop.f32.mrb[0].mxu0
    %837 = vmatprep.mubr.f32.mxu0 0.0
    %838 = vmatmul.mubr.f32.gmra.mrb[0].mxu0 %v763
    %v839 = vpop.f32.mrb[0].mxu0
    %v840 = vadd.f32 %v35, %v839
    %v841 = vpop.f32.mrb[0].mxu0
    %842 = vmatprep.mubr.f32.mxu0 0.0
    %843 = vmatmul.mubr.f32.gmra.mrb[0].mxu0 %v766
    %v844 = vpop.f32.mrb[0].mxu0
    %v845 = vadd.f32 %v36, %v844
    %v846 = vpop.f32.mrb[0].mxu0
    %847 = vdwg.mxu0
    %v848 = vsel %vm393, %v835, -inf
    %849 = vmax.xlane.f32.xlu0 %v848
    %v850 = vpop.xlane.xlu0 %849
    %v851 = vsel %vm393, %v840, -inf
    %852 = vmax.xlane.f32.xlu0 %v851
    %v853 = vpop.xlane.xlu0 %852
    %v854 = vsel %vm582, %v845, -inf
    %855 = vmax.xlane.f32.xlu0 %v854
    %v856 = vpop.xlane.xlu0 %855
    %v857 = vsub.f32 %v835, %v850
    %v858 = vsub.f32 %v840, %v853
    %v859 = vsub.f32 %v845, %v856
    %v860 = vmul.f32 %v857, 1.442695
    %v861 = vpow.pop %v860
    %v862 = vmul.f32 %v858, 1.442695
    %v863 = vpow.pop %v862
    %v864 = vmul.f32 %v859, 1.442695
    %v865 = vpow.pop %v864
    %v866 = vsel %vm393, %v861, 0.0
    %867 = vadd.xlane.f32.xlu0 %v866
    %v868 = vpop.xlane.xlu0 %867
    %v869 = vsel %vm393, %v863, 0.0
    %870 = vadd.xlane.f32.xlu0 %v869
    %v871 = vpop.xlane.xlu0 %870
    %v872 = vsel %vm582, %v865, 0.0
    %873 = vadd.xlane.f32.xlu0 %v872
    %v874 = vpop.xlane.xlu0 %873
    %v875 = vrcp.pop %v868
    %v876 = vrcp.pop %v871
    %v877 = vrcp.pop %v874
    %v878 = vmul.f32 %v861, %v875
    %v879 = vmul.f32 %v863, %v876
    %v880 = vmul.f32 %v865, %v877
    %v882 = vsel %vm393, %v878, 0
    %v885 = vsel %vm393, %v879, 0
    %v888 = vsel %vm393, %v880, 0
    %v891 = vsel %vm393, %v723, 0
    %v894 = vsel %vm393, %v724, 0
    %v897 = vsel %vm393, %v725, 0
    %v900 = vsel %vm393, %v726, 0
    %902 = vmatprep.subr.mxu0 0.0
    %903 = vmatpush1.xpose.msra.mxu0 %v891
    %904 = vmatprep.subr.mxu0 0.0
    %905 = vmatpush1.xpose.msra.mxu0 %v894
    %906 = vmatprep.subr.mxu0 0.0
    %907 = vmatpush1.xpose.msra.mxu0 %v897
    %908 = vmatprep.subr.mxu0 0.0
    %909 = vmatpush1.xpose.msra.mxu0 %v900
    %910 = vmatprep.subr.mxu0 0.0
    %911 = vmatpush1.xpose.msra.mxu0 0.0
    %912 = vmatprep.subr.mxu0 0.0
    %913 = vmatpush1.xpose.msra.mxu0 0.0
    %914 = vmatprep.subr.mxu0 0.0
    %915 = vmatpush1.xpose.msra.mxu0 0.0
    %916 = vmatprep.subr.mxu0 0.0
    %917 = vmatpush1.xpose.msra.mxu0 0.0
    %918 = vmatprep.subr.mxu0 0.0
    %919 = vmatpush1.xpose.msra.mxu0 0.0
    %920 = vmatprep.subr.mxu0 0.0
    %921 = vmatpush1.xpose.msra.mxu0 0.0
    %922 = vmatprep.subr.mxu0 0.0
    %923 = vmatpush1.xpose.msra.mxu0 0.0
    %924 = vmatprep.subr.mxu0 0.0
    %925 = vmatpush1.xpose.msra.mxu0 0.0
    %926 = vmatprep.subr.mxu0 0.0
    %927 = vmatpush1.xpose.msra.mxu0 0.0
    %928 = vmatprep.subr.mxu0 0.0
    %929 = vmatpush1.xpose.msra.mxu0 0.0
    %930 = vmatprep.subr.mxu0 0.0
    %931 = vmatpush1.xpose.msra.mxu0 0.0
    %932 = vmatprep.subr.mxu0 0.0
    %933 = vmatpush1.xpose.msra.mxu0 0.0
    %934 = vmatprep.subr.mxu0 0.0
    %935 = vmatpush1.xpose.msra.mxu0 0.0
    %936 = vmatprep.subr.mxu0 0.0
    %937 = vmatpush1.xpose.msra.mxu0 0.0
    %938 = vmatprep.subr.mxu0 0.0
    %939 = vmatpush1.xpose.msra.mxu0 0.0
    %940 = vmatprep.subr.mxu0 0.0
    %941 = vmatpush1.xpose.msra.mxu0 0.0
    %942 = vmatprep.subr.mxu0 0.0
    %943 = vmatpush1.xpose.msra.mxu0 0.0
    %944 = vmatprep.subr.mxu0 0.0
    %945 = vmatpush1.xpose.msra.mxu0 0.0
    %946 = vmatprep.subr.mxu0 0.0
    %947 = vmatpush1.xpose.msra.mxu0 0.0
    %948 = vmatprep.subr.mxu0 0.0
    %949 = vmatpush1.xpose.msra.mxu0 0.0
    %950 = vmatprep.subr.mxu0 0.0
    %951 = vmatpush1.xpose.msra.mxu0 0.0
    %952 = vmatprep.subr.mxu0 0.0
    %953 = vmatpush1.xpose.msra.mxu0 0.0
    %954 = vmatprep.subr.mxu0 0.0
    %955 = vmatpush1.xpose.msra.mxu0 0.0
    %956 = vmatprep.subr.mxu0 0.0
    %957 = vmatpush1.xpose.msra.mxu0 0.0
    %958 = vmatprep.subr.mxu0 0.0
    %959 = vmatpush1.xpose.msra.mxu0 0.0
    %960 = vmatprep.subr.mxu0 0.0
    %961 = vmatpush1.xpose.msra.mxu0 0.0
    %962 = vmatprep.subr.mxu0 0.0
    %963 = vmatpush1.xpose.msra.mxu0 0.0
    %964 = vmatprep.subr.mxu0 0.0
    %965 = vmatpush1.xpose.msra.mxu0 0.0
    %966 = vmatprep.mubr.f32.mxu0 0.0
    %967 = vmatmul.mubr.f32.gmra.mrb[0].mxu0 %v882
    %v968 = vpop.f32.mrb[0].mxu0
    %v969 = vadd.f32 0.0, %v968
    %v970 = vpop.f32.mrb[0].mxu0
    %971 = vmatprep.mubr.f32.mxu0 0.0
    %972 = vmatmul.mubr.f32.gmra.mrb[0].mxu0 %v885
    %v973 = vpop.f32.mrb[0].mxu0
    %v974 = vadd.f32 0.0, %v973
    %v975 = vpop.f32.mrb[0].mxu0
    %976 = vmatprep.mubr.f32.mxu0 0.0
    %977 = vmatmul.mubr.f32.gmra.mrb[0].mxu0 %v888
    %v978 = vpop.f32.mrb[0].mxu0
    %v979 = vadd.f32 0.0, %v978
    %v980 = vpop.f32.mrb[0].mxu0
    %981 = vdwg.mxu0
    %985 = vrot.lane.b32.xlu0 %v969, 32
    %v986 = vpop.permute.xlu0 %985
    %987 = vrot.lane.b32.xlu0 %v974, 32
    %v988 = vpop.permute.xlu0 %987
    %989 = vrot.lane.b32.xlu0 %v979, 32
    %v990 = vpop.permute.xlu0 %989
    %vm994 = vcmask 523520
    %995 = vst.msk [vmem:[%s2] sm:$0xff] %vm994, %v986
    %996 = vst.msk [vmem:[%s2 + $0x8] sm:$0xff] %vm994, %v988
    %vm997 = vcmask 516352
    %998 = vst.msk [vmem:[%s2 + $0x10] sm:$0x1] %vm997, %v990
    %v999 = vld [vmem:[#allocation2 + $0x40] sm:$0xff]
    %v1000 = vld [vmem:[#allocation2 + $0x48] sm:$0xff]
    %v1001 = vld [vmem:[#allocation2 + $0x50] sm:$0xff]
    %v1002 = vld [vmem:[#allocation2 + $0x58] sm:$0xff]
    %v1003 = vld [vmem:[#allocation2 + $0xc0] sm:$0xff]
    %v1004 = vld [vmem:[#allocation2 + $0xc8] sm:$0xff]
    %v1005 = vld [vmem:[#allocation2 + $0xd0] sm:$0xff]
    %v1006 = vld [vmem:[#allocation2 + $0xd8] sm:$0xff]
    %v1007 = vld [vmem:[#allocation2 + $0x140] sm:$0xff]
    %v1008 = vld [vmem:[#allocation2 + $0x148] sm:$0xff]
    %v1009 = vld [vmem:[#allocation2 + $0x150] sm:$0xff]
    %v1010 = vld [vmem:[#allocation2 + $0x158] sm:$0xff]
    %1011 = vxpose.xlu0.b32.start [1/16] %v999, 128
    %1012 = vxpose.xlu0.b32.cont [2/16] %v1000, 128
    %1013 = vxpose.xlu0.b32.cont [3/16] %v1001, 128
    %1014 = vxpose.xlu0.b32.cont [4/16] %v1002, 128
    %1015 = vxpose.xlu0.b32.cont [5/16] 0.0, 128
    %1016 = vxpose.xlu0.b32.cont [6/16] 0.0, 128
    %1017 = vxpose.xlu0.b32.cont [7/16] 0.0, 128
    %1018 = vxpose.xlu0.b32.cont [8/16] 0.0, 128
    %1019 = vxpose.xlu0.b32.cont [9/16] 0.0, 128
    %1020 = vxpose.xlu0.b32.cont [10/16] 0.0, 128
    %1021 = vxpose.xlu0.b32.cont [11/16] 0.0, 128
    %1022 = vxpose.xlu0.b32.cont [12/16] 0.0, 128
    %1023 = vxpose.xlu0.b32.cont [13/16] 0.0, 128
    %1024 = vxpose.xlu0.b32.cont [14/16] 0.0, 128
    %1025 = vxpose.xlu0.b32.cont [15/16] 0.0, 128
    %1026 = vxpose.xlu0.b32.end [16/16] 0.0, 128
    %v1027 = vpop.trf.xlu0
    %v1028 = vpop.trf.xlu0
    %v1029 = vpop.trf.xlu0
    %v1030 = vpop.trf.xlu0
    %v1031 = vpop.trf.xlu0
    %v1032 = vpop.trf.xlu0
    %v1033 = vpop.trf.xlu0
    %v1034 = vpop.trf.xlu0
    %v1035 = vpop.trf.xlu0
    %v1036 = vpop.trf.xlu0
    %v1037 = vpop.trf.xlu0
    %v1038 = vpop.trf.xlu0
    %v1039 = vpop.trf.xlu0
    %v1040 = vpop.trf.xlu0
    %v1041 = vpop.trf.xlu0
    %v1042 = vpop.trf.xlu0
    %v1044 = vsel %vm486, %v1027, 0
    %v1047 = vsel %vm486, %v1028, 0
    %v1050 = vsel %vm486, %v1029, 0
    %1052 = vmatprep.subr.mxu0 0.0
    %1053 = vmatpush1.msra.mxu0 %v1003
    %1054 = vmatprep.subr.mxu0 0.0
    %1055 = vmatpush1.msra.mxu0 %v1004
    %1056 = vmatprep.subr.mxu0 0.0
    %1057 = vmatpush1.msra.mxu0 %v1005
    %1058 = vmatprep.subr.mxu0 0.0
    %1059 = vmatpush1.msra.mxu0 %v1006
    %1060 = vmatprep.subr.mxu0 0.0
    %1061 = vmatpush1.msra.mxu0 0.0
    %1062 = vmatprep.subr.mxu0 0.0
    %1063 = vmatpush1.msra.mxu0 0.0
    %1064 = vmatprep.subr.mxu0 0.0
    %1065 = vmatpush1.msra.mxu0 0.0
    %1066 = vmatprep.subr.mxu0 0.0
    %1067 = vmatpush1.msra.mxu0 0.0
    %1068 = vmatprep.subr.mxu0 0.0
    %1069 = vmatpush1.msra.mxu0 0.0
    %1070 = vmatprep.subr.mxu0 0.0
    %1071 = vmatpush1.msra.mxu0 0.0
    %1072 = vmatprep.subr.mxu0 0.0
    %1073 = vmatpush1.msra.mxu0 0.0
    %1074 = vmatprep.subr.mxu0 0.0
    %1075 = vmatpush1.msra.mxu0 0.0
    %1076 = vmatprep.subr.mxu0 0.0
    %1077 = vmatpush1.msra.mxu0 0.0
    %1078 = vmatprep.subr.mxu0 0.0
    %1079 = vmatpush1.msra.mxu0 0.0
    %1080 = vmatprep.subr.mxu0 0.0
    %1081 = vmatpush1.msra.mxu0 0.0
    %1082 = vmatprep.subr.mxu0 0.0
    %1083 = vmatpush1.msra.mxu0 0.0
    %1084 = vmatprep.subr.mxu0 0.0
    %1085 = vmatpush1.msra.mxu0 0.0
    %1086 = vmatprep.subr.mxu0 0.0
    %1087 = vmatpush1.msra.mxu0 0.0
    %1088 = vmatprep.subr.mxu0 0.0
    %1089 = vmatpush1.msra.mxu0 0.0
    %1090 = vmatprep.subr.mxu0 0.0
    %1091 = vmatpush1.msra.mxu0 0.0
    %1092 = vmatprep.subr.mxu0 0.0
    %1093 = vmatpush1.msra.mxu0 0.0
    %1094 = vmatprep.subr.mxu0 0.0
    %1095 = vmatpush1.msra.mxu0 0.0
    %1096 = vmatprep.subr.mxu0 0.0
    %1097 = vmatpush1.msra.mxu0 0.0
    %1098 = vmatprep.subr.mxu0 0.0
    %1099 = vmatpush1.msra.mxu0 0.0
    %1100 = vmatprep.subr.mxu0 0.0
    %1101 = vmatpush1.msra.mxu0 0.0
    %1102 = vmatprep.subr.mxu0 0.0
    %1103 = vmatpush1.msra.mxu0 0.0
    %1104 = vmatprep.subr.mxu0 0.0
    %1105 = vmatpush1.msra.mxu0 0.0
    %1106 = vmatprep.subr.mxu0 0.0
    %1107 = vmatpush1.msra.mxu0 0.0
    %1108 = vmatprep.subr.mxu0 0.0
    %1109 = vmatpush1.msra.mxu0 0.0
    %1110 = vmatprep.subr.mxu0 0.0
    %1111 = vmatpush1.msra.mxu0 0.0
    %1112 = vmatprep.subr.mxu0 0.0
    %1113 = vmatpush1.msra.mxu0 0.0
    %1114 = vmatprep.subr.mxu0 0.0
    %1115 = vmatpush1.msra.mxu0 0.0
    %1116 = vmatprep.mubr.f32.mxu0 0.0
    %1117 = vmatmul.mubr.f32.gmra.mrb[0].mxu0 %v1044
    %v1118 = vpop.f32.mrb[0].mxu0
    %v1119 = vadd.f32 %v34, %v1118
    %v1120 = vpop.f32.mrb[0].mxu0
    %1121 = vmatprep.mubr.f32.mxu0 0.0
    %1122 = vmatmul.mubr.f32.gmra.mrb[0].mxu0 %v1047
    %v1123 = vpop.f32.mrb[0].mxu0
    %v1124 = vadd.f32 %v35, %v1123
    %v1125 = vpop.f32.mrb[0].mxu0
    %1126 = vmatprep.mubr.f32.mxu0 0.0
    %1127 = vmatmul.mubr.f32.gmra.mrb[0].mxu0 %v1050
    %v1128 = vpop.f32.mrb[0].mxu0
    %v1129 = vadd.f32 %v36, %v1128
    %v1130 = vpop.f32.mrb[0].mxu0
    %1131 = vdwg.mxu0
    %v1132 = vsel %vm393, %v1119, -inf
    %1133 = vmax.xlane.f32.xlu0 %v1132
    %v1134 = vpop.xlane.xlu0 %1133
    %v1135 = vsel %vm393, %v1124, -inf
    %1136 = vmax.xlane.f32.xlu0 %v1135
    %v1137 = vpop.xlane.xlu0 %1136
    %v1138 = vsel %vm582, %v1129, -inf
    %1139 = vmax.xlane.f32.xlu0 %v1138
    %v1140 = vpop.xlane.xlu0 %1139
    %v1141 = vsub.f32 %v1119, %v1134
    %v1142 = vsub.f32 %v1124, %v1137
    %v1143 = vsub.f32 %v1129, %v1140
    %v1144 = vmul.f32 %v1141, 1.442695
    %v1145 = vpow.pop %v1144
    %v1146 = vmul.f32 %v1142, 1.442695
    %v1147 = vpow.pop %v1146
    %v1148 = vmul.f32 %v1143, 1.442695
    %v1149 = vpow.pop %v1148
    %v1150 = vsel %vm393, %v1145, 0.0
    %1151 = vadd.xlane.f32.xlu0 %v1150
    %v1152 = vpop.xlane.xlu0 %1151
    %v1153 = vsel %vm393, %v1147, 0.0
    %1154 = vadd.xlane.f32.xlu0 %v1153
    %v1155 = vpop.xlane.xlu0 %1154
    %v1156 = vsel %vm582, %v1149, 0.0
    %1157 = vadd.xlane.f32.xlu0 %v1156
    %v1158 = vpop.xlane.xlu0 %1157
    %v1159 = vrcp.pop %v1152
    %v1160 = vrcp.pop %v1155
    %v1161 = vrcp.pop %v1158
    %v1162 = vmul.f32 %v1145, %v1159
    %v1163 = vmul.f32 %v1147, %v1160
    %v1164 = vmul.f32 %v1149, %v1161
    %v1166 = vsel %vm393, %v1162, 0
    %v1169 = vsel %vm393, %v1163, 0
    %v1172 = vsel %vm393, %v1164, 0
    %v1175 = vsel %vm393, %v1007, 0
    %v1178 = vsel %vm393, %v1008, 0
    %v1181 = vsel %vm393, %v1009, 0
    %v1184 = vsel %vm393, %v1010, 0
    %1186 = vmatprep.subr.mxu0 0.0
    %1187 = vmatpush1.xpose.msra.mxu0 %v1175
    %1188 = vmatprep.subr.mxu0 0.0
    %1189 = vmatpush1.xpose.msra.mxu0 %v1178
    %1190 = vmatprep.subr.mxu0 0.0
    %1191 = vmatpush1.xpose.msra.mxu0 %v1181
    %1192 = vmatprep.subr.mxu0 0.0
    %1193 = vmatpush1.xpose.msra.mxu0 %v1184
    %1194 = vmatprep.subr.mxu0 0.0
    %1195 = vmatpush1.xpose.msra.mxu0 0.0
    %1196 = vmatprep.subr.mxu0 0.0
    %1197 = vmatpush1.xpose.msra.mxu0 0.0
    %1198 = vmatprep.subr.mxu0 0.0
    %1199 = vmatpush1.xpose.msra.mxu0 0.0
    %1200 = vmatprep.subr.mxu0 0.0
    %1201 = vmatpush1.xpose.msra.mxu0 0.0
    %1202 = vmatprep.subr.mxu0 0.0
    %1203 = vmatpush1.xpose.msra.mxu0 0.0
    %1204 = vmatprep.subr.mxu0 0.0
    %1205 = vmatpush1.xpose.msra.mxu0 0.0
    %1206 = vmatprep.subr.mxu0 0.0
    %1207 = vmatpush1.xpose.msra.mxu0 0.0
    %1208 = vmatprep.subr.mxu0 0.0
    %1209 = vmatpush1.xpose.msra.mxu0 0.0
    %1210 = vmatprep.subr.mxu0 0.0
    %1211 = vmatpush1.xpose.msra.mxu0 0.0
    %1212 = vmatprep.subr.mxu0 0.0
    %1213 = vmatpush1.xpose.msra.mxu0 0.0
    %1214 = vmatprep.subr.mxu0 0.0
    %1215 = vmatpush1.xpose.msra.mxu0 0.0
    %1216 = vmatprep.subr.mxu0 0.0
    %1217 = vmatpush1.xpose.msra.mxu0 0.0
    %1218 = vmatprep.subr.mxu0 0.0
    %1219 = vmatpush1.xpose.msra.mxu0 0.0
    %1220 = vmatprep.subr.mxu0 0.0
    %1221 = vmatpush1.xpose.msra.mxu0 0.0
    %1222 = vmatprep.subr.mxu0 0.0
    %1223 = vmatpush1.xpose.msra.mxu0 0.0
    %1224 = vmatprep.subr.mxu0 0.0
    %1225 = vmatpush1.xpose.msra.mxu0 0.0
    %1226 = vmatprep.subr.mxu0 0.0
    %1227 = vmatpush1.xpose.msra.mxu0 0.0
    %1228 = vmatprep.subr.mxu0 0.0
    %1229 = vmatpush1.xpose.msra.mxu0 0.0
    %1230 = vmatprep.subr.mxu0 0.0
    %1231 = vmatpush1.xpose.msra.mxu0 0.0
    %1232 = vmatprep.subr.mxu0 0.0
    %1233 = vmatpush1.xpose.msra.mxu0 0.0
    %1234 = vmatprep.subr.mxu0 0.0
    %1235 = vmatpush1.xpose.msra.mxu0 0.0
    %1236 = vmatprep.subr.mxu0 0.0
    %1237 = vmatpush1.xpose.msra.mxu0 0.0
    %1238 = vmatprep.subr.mxu0 0.0
    %1239 = vmatpush1.xpose.msra.mxu0 0.0
    %1240 = vmatprep.subr.mxu0 0.0
    %1241 = vmatpush1.xpose.msra.mxu0 0.0
    %1242 = vmatprep.subr.mxu0 0.0
    %1243 = vmatpush1.xpose.msra.mxu0 0.0
    %1244 = vmatprep.subr.mxu0 0.0
    %1245 = vmatpush1.xpose.msra.mxu0 0.0
    %1246 = vmatprep.subr.mxu0 0.0
    %1247 = vmatpush1.xpose.msra.mxu0 0.0
    %1248 = vmatprep.subr.mxu0 0.0
    %1249 = vmatpush1.xpose.msra.mxu0 0.0
    %1250 = vmatprep.mubr.f32.mxu0 0.0
    %1251 = vmatmul.mubr.f32.gmra.mrb[0].mxu0 %v1166
    %v1252 = vpop.f32.mrb[0].mxu0
    %v1253 = vadd.f32 0.0, %v1252
    %v1254 = vpop.f32.mrb[0].mxu0
    %1255 = vmatprep.mubr.f32.mxu0 0.0
    %1256 = vmatmul.mubr.f32.gmra.mrb[0].mxu0 %v1169
    %v1257 = vpop.f32.mrb[0].mxu0
    %v1258 = vadd.f32 0.0, %v1257
    %v1259 = vpop.f32.mrb[0].mxu0
    %1260 = vmatprep.mubr.f32.mxu0 0.0
    %1261 = vmatmul.mubr.f32.gmra.mrb[0].mxu0 %v1172
    %v1262 = vpop.f32.mrb[0].mxu0
    %v1263 = vadd.f32 0.0, %v1262
    %v1264 = vpop.f32.mrb[0].mxu0
    %1265 = vdwg.mxu0
    %1269 = vrot.lane.b32.xlu0 %v1253, 64
    %v1270 = vpop.permute.xlu0 %1269
    %1271 = vrot.lane.b32.xlu0 %v1258, 64
    %v1272 = vpop.permute.xlu0 %1271
    %1273 = vrot.lane.b32.xlu0 %v1263, 64
    %v1274 = vpop.permute.xlu0 %1273
    %vm1278 = vcmask 785920
    %1279 = vst.msk [vmem:[%s2] sm:$0xff] %vm1278, %v1270
    %1280 = vst.msk [vmem:[%s2 + $0x8] sm:$0xff] %vm1278, %v1272
    %vm1281 = vcmask 778752
    %1282 = vst.msk [vmem:[%s2 + $0x10] sm:$0x1] %vm1281, %v1274
    %v1283 = vld [vmem:[#allocation2 + $0x60] sm:$0xff]
    %v1284 = vld [vmem:[#allocation2 + $0x68] sm:$0xff]
    %v1285 = vld [vmem:[#allocation2 + $0x70] sm:$0xff]
    %v1286 = vld [vmem:[#allocation2 + $0x78] sm:$0xff]
    %v1287 = vld [vmem:[#allocation2 + $0xe0] sm:$0xff]
    %v1288 = vld [vmem:[#allocation2 + $0xe8] sm:$0xff]
    %v1289 = vld [vmem:[#allocation2 + $0xf0] sm:$0xff]
    %v1290 = vld [vmem:[#allocation2 + $0xf8] sm:$0xff]
    %v1291 = vld [vmem:[#allocation2 + $0x160] sm:$0xff]
    %v1292 = vld [vmem:[#allocation2 + $0x168] sm:$0xff]
    %v1293 = vld [vmem:[#allocation2 + $0x170] sm:$0xff]
    %v1294 = vld [vmem:[#allocation2 + $0x178] sm:$0xff]
    %1295 = vxpose.xlu0.b32.start [1/16] %v1283, 128
    %1296 = vxpose.xlu0.b32.cont [2/16] %v1284, 128
    %1297 = vxpose.xlu0.b32.cont [3/16] %v1285, 128
    %1298 = vxpose.xlu0.b32.cont [4/16] %v1286, 128
    %1299 = vxpose.xlu0.b32.cont [5/16] 0.0, 128
    %1300 = vxpose.xlu0.b32.cont [6/16] 0.0, 128
    %1301 = vxpose.xlu0.b32.cont [7/16] 0.0, 128
    %1302 = vxpose.xlu0.b32.cont [8/16] 0.0, 128
    %1303 = vxpose.xlu0.b32.cont [9/16] 0.0, 128
    %1304 = vxpose.xlu0.b32.cont [10/16] 0.0, 128
    %1305 = vxpose.xlu0.b32.cont [11/16] 0.0, 128
    %1306 = vxpose.xlu0.b32.cont [12/16] 0.0, 128
    %1307 = vxpose.xlu0.b32.cont [13/16] 0.0, 128
    %1308 = vxpose.xlu0.b32.cont [14/16] 0.0, 128
    %1309 = vxpose.xlu0.b32.cont [15/16] 0.0, 128
    %1310 = vxpose.xlu0.b32.end [16/16] 0.0, 128
    %v1311 = vpop.trf.xlu0
    %v1312 = vpop.trf.xlu0
    %v1313 = vpop.trf.xlu0
    %v1314 = vpop.trf.xlu0
    %v1315 = vpop.trf.xlu0
    %v1316 = vpop.trf.xlu0
    %v1317 = vpop.trf.xlu0
    %v1318 = vpop.trf.xlu0
    %v1319 = vpop.trf.xlu0
    %v1320 = vpop.trf.xlu0
    %v1321 = vpop.trf.xlu0
    %v1322 = vpop.trf.xlu0
    %v1323 = vpop.trf.xlu0
    %v1324 = vpop.trf.xlu0
    %v1325 = vpop.trf.xlu0
    %v1326 = vpop.trf.xlu0
    %v1328 = vsel %vm486, %v1311, 0
    %v1331 = vsel %vm486, %v1312, 0
    %v1334 = vsel %vm486, %v1313, 0
    %1336 = vmatprep.subr.mxu0 0.0
    %1337 = vmatpush1.msra.mxu0 %v1287
    %1338 = vmatprep.subr.mxu0 0.0
    %1339 = vmatpush1.msra.mxu0 %v1288
    %1340 = vmatprep.subr.mxu0 0.0
    %1341 = vmatpush1.msra.mxu0 %v1289
    %1342 = vmatprep.subr.mxu0 0.0
    %1343 = vmatpush1.msra.mxu0 %v1290
    %1344 = vmatprep.subr.mxu0 0.0
    %1345 = vmatpush1.msra.mxu0 0.0
    %1346 = vmatprep.subr.mxu0 0.0
    %1347 = vmatpush1.msra.mxu0 0.0
    %1348 = vmatprep.subr.mxu0 0.0
    %1349 = vmatpush1.msra.mxu0 0.0
    %1350 = vmatprep.subr.mxu0 0.0
    %1351 = vmatpush1.msra.mxu0 0.0
    %1352 = vmatprep.subr.mxu0 0.0
    %1353 = vmatpush1.msra.mxu0 0.0
    %1354 = vmatprep.subr.mxu0 0.0
    %1355 = vmatpush1.msra.mxu0 0.0
    %1356 = vmatprep.subr.mxu0 0.0
    %1357 = vmatpush1.msra.mxu0 0.0
    %1358 = vmatprep.subr.mxu0 0.0
    %1359 = vmatpush1.msra.mxu0 0.0
    %1360 = vmatprep.subr.mxu0 0.0
    %1361 = vmatpush1.msra.mxu0 0.0
    %1362 = vmatprep.subr.mxu0 0.0
    %1363 = vmatpush1.msra.mxu0 0.0
    %1364 = vmatprep.subr.mxu0 0.0
    %1365 = vmatpush1.msra.mxu0 0.0
    %1366 = vmatprep.subr.mxu0 0.0
    %1367 = vmatpush1.msra.mxu0 0.0
    %1368 = vmatprep.subr.mxu0 0.0
    %1369 = vmatpush1.msra.mxu0 0.0
    %1370 = vmatprep.subr.mxu0 0.0
    %1371 = vmatpush1.msra.mxu0 0.0
    %1372 = vmatprep.subr.mxu0 0.0
    %1373 = vmatpush1.msra.mxu0 0.0
    %1374 = vmatprep.subr.mxu0 0.0
    %1375 = vmatpush1.msra.mxu0 0.0
    %1376 = vmatprep.subr.mxu0 0.0
    %1377 = vmatpush1.msra.mxu0 0.0
    %1378 = vmatprep.subr.mxu0 0.0
    %1379 = vmatpush1.msra.mxu0 0.0
    %1380 = vmatprep.subr.mxu0 0.0
    %1381 = vmatpush1.msra.mxu0 0.0
    %1382 = vmatprep.subr.mxu0 0.0
    %1383 = vmatpush1.msra.mxu0 0.0
    %1384 = vmatprep.subr.mxu0 0.0
    %1385 = vmatpush1.msra.mxu0 0.0
    %1386 = vmatprep.subr.mxu0 0.0
    %1387 = vmatpush1.msra.mxu0 0.0
    %1388 = vmatprep.subr.mxu0 0.0
    %1389 = vmatpush1.msra.mxu0 0.0
    %1390 = vmatprep.subr.mxu0 0.0
    %1391 = vmatpush1.msra.mxu0 0.0
    %1392 = vmatprep.subr.mxu0 0.0
    %1393 = vmatpush1.msra.mxu0 0.0
    %1394 = vmatprep.subr.mxu0 0.0
    %1395 = vmatpush1.msra.mxu0 0.0
    %1396 = vmatprep.subr.mxu0 0.0
    %1397 = vmatpush1.msra.mxu0 0.0
    %1398 = vmatprep.subr.mxu0 0.0
    %1399 = vmatpush1.msra.mxu0 0.0
    %1400 = vmatprep.mubr.f32.mxu0 0.0
    %1401 = vmatmul.mubr.f32.gmra.mrb[0].mxu0 %v1328
    %v1402 = vpop.f32.mrb[0].mxu0
    %v1403 = vadd.f32 %v34, %v1402
    %v1404 = vpop.f32.mrb[0].mxu0
    %1405 = vmatprep.mubr.f32.mxu0 0.0
    %1406 = vmatmul.mubr.f32.gmra.mrb[0].mxu0 %v1331
    %v1407 = vpop.f32.mrb[0].mxu0
    %v1408 = vadd.f32 %v35, %v1407
    %v1409 = vpop.f32.mrb[0].mxu0
    %1410 = vmatprep.mubr.f32.mxu0 0.0
    %1411 = vmatmul.mubr.f32.gmra.mrb[0].mxu0 %v1334
    %v1412 = vpop.f32.mrb[0].mxu0
    %v1413 = vadd.f32 %v36, %v1412
    %v1414 = vpop.f32.mrb[0].mxu0
    %1415 = vdwg.mxu0
    %v1416 = vsel %vm393, %v1403, -inf
    %1417 = vmax.xlane.f32.xlu0 %v1416
    %v1418 = vpop.xlane.xlu0 %1417
    %v1419 = vsel %vm393, %v1408, -inf
    %1420 = vmax.xlane.f32.xlu0 %v1419
    %v1421 = vpop.xlane.xlu0 %1420
    %v1422 = vsel %vm582, %v1413, -inf
    %1423 = vmax.xlane.f32.xlu0 %v1422
    %v1424 = vpop.xlane.xlu0 %1423
    %v1425 = vsub.f32 %v1403, %v1418
    %v1426 = vsub.f32 %v1408, %v1421
    %v1427 = vsub.f32 %v1413, %v1424
    %v1428 = vmul.f32 %v1425, 1.442695
    %v1429 = vpow.pop %v1428
    %v1430 = vmul.f32 %v1426, 1.442695
    %v1431 = vpow.pop %v1430
    %v1432 = vmul.f32 %v1427, 1.442695
    %v1433 = vpow.pop %v1432
    %v1434 = vsel %vm393, %v1429, 0.0
    %1435 = vadd.xlane.f32.xlu0 %v1434
    %v1436 = vpop.xlane.xlu0 %1435
    %v1437 = vsel %vm393, %v1431, 0.0
    %1438 = vadd.xlane.f32.xlu0 %v1437
    %v1439 = vpop.xlane.xlu0 %1438
    %v1440 = vsel %vm582, %v1433, 0.0
    %1441 = vadd.xlane.f32.xlu0 %v1440
    %v1442 = vpop.xlane.xlu0 %1441
    %v1443 = vrcp.pop %v1436
    %v1444 = vrcp.pop %v1439
    %v1445 = vrcp.pop %v1442
    %v1446 = vmul.f32 %v1429, %v1443
    %v1447 = vmul.f32 %v1431, %v1444
    %v1448 = vmul.f32 %v1433, %v1445
    %v1450 = vsel %vm393, %v1446, 0
    %v1453 = vsel %vm393, %v1447, 0
    %v1456 = vsel %vm393, %v1448, 0
    %v1459 = vsel %vm393, %v1291, 0
    %v1462 = vsel %vm393, %v1292, 0
    %v1465 = vsel %vm393, %v1293, 0
    %v1468 = vsel %vm393, %v1294, 0
    %1470 = vmatprep.subr.mxu0 0.0
    %1471 = vmatpush1.xpose.msra.mxu0 %v1459
    %1472 = vmatprep.subr.mxu0 0.0
    %1473 = vmatpush1.xpose.msra.mxu0 %v1462
    %1474 = vmatprep.subr.mxu0 0.0
    %1475 = vmatpush1.xpose.msra.mxu0 %v1465
    %1476 = vmatprep.subr.mxu0 0.0
    %1477 = vmatpush1.xpose.msra.mxu0 %v1468
    %1478 = vmatprep.subr.mxu0 0.0
    %1479 = vmatpush1.xpose.msra.mxu0 0.0
    %1480 = vmatprep.subr.mxu0 0.0
    %1481 = vmatpush1.xpose.msra.mxu0 0.0
    %1482 = vmatprep.subr.mxu0 0.0
    %1483 = vmatpush1.xpose.msra.mxu0 0.0
    %1484 = vmatprep.subr.mxu0 0.0
    %1485 = vmatpush1.xpose.msra.mxu0 0.0
    %1486 = vmatprep.subr.mxu0 0.0
    %1487 = vmatpush1.xpose.msra.mxu0 0.0
    %1488 = vmatprep.subr.mxu0 0.0
    %1489 = vmatpush1.xpose.msra.mxu0 0.0
    %1490 = vmatprep.subr.mxu0 0.0
    %1491 = vmatpush1.xpose.msra.mxu0 0.0
    %1492 = vmatprep.subr.mxu0 0.0
    %1493 = vmatpush1.xpose.msra.mxu0 0.0
    %1494 = vmatprep.subr.mxu0 0.0
    %1495 = vmatpush1.xpose.msra.mxu0 0.0
    %1496 = vmatprep.subr.mxu0 0.0
    %1497 = vmatpush1.xpose.msra.mxu0 0.0
    %1498 = vmatprep.subr.mxu0 0.0
    %1499 = vmatpush1.xpose.msra.mxu0 0.0
    %1500 = vmatprep.subr.mxu0 0.0
    %1501 = vmatpush1.xpose.msra.mxu0 0.0
    %1502 = vmatprep.subr.mxu0 0.0
    %1503 = vmatpush1.xpose.msra.mxu0 0.0
    %1504 = vmatprep.subr.mxu0 0.0
    %1505 = vmatpush1.xpose.msra.mxu0 0.0
    %1506 = vmatprep.subr.mxu0 0.0
    %1507 = vmatpush1.xpose.msra.mxu0 0.0
    %1508 = vmatprep.subr.mxu0 0.0
    %1509 = vmatpush1.xpose.msra.mxu0 0.0
    %1510 = vmatprep.subr.mxu0 0.0
    %1511 = vmatpush1.xpose.msra.mxu0 0.0
    %1512 = vmatprep.subr.mxu0 0.0
    %1513 = vmatpush1.xpose.msra.mxu0 0.0
    %1514 = vmatprep.subr.mxu0 0.0
    %1515 = vmatpush1.xpose.msra.mxu0 0.0
    %1516 = vmatprep.subr.mxu0 0.0
    %1517 = vmatpush1.xpose.msra.mxu0 0.0
    %1518 = vmatprep.subr.mxu0 0.0
    %1519 = vmatpush1.xpose.msra.mxu0 0.0
    %1520 = vmatprep.subr.mxu0 0.0
    %1521 = vmatpush1.xpose.msra.mxu0 0.0
    %1522 = vmatprep.subr.mxu0 0.0
    %1523 = vmatpush1.xpose.msra.mxu0 0.0
    %1524 = vmatprep.subr.mxu0 0.0
    %1525 = vmatpush1.xpose.msra.mxu0 0.0
    %1526 = vmatprep.subr.mxu0 0.0
    %1527 = vmatpush1.xpose.msra.mxu0 0.0
    %1528 = vmatprep.subr.mxu0 0.0
    %1529 = vmatpush1.xpose.msra.mxu0 0.0
    %1530 = vmatprep.subr.mxu0 0.0
    %1531 = vmatpush1.xpose.msra.mxu0 0.0
    %1532 = vmatprep.subr.mxu0 0.0
    %1533 = vmatpush1.xpose.msra.mxu0 0.0
    %1534 = vmatprep.mubr.f32.mxu0 0.0
    %1535 = vmatmul.mubr.f32.gmra.mrb[0].mxu0 %v1450
    %v1536 = vpop.f32.mrb[0].mxu0
    %v1537 = vadd.f32 0.0, %v1536
    %v1538 = vpop.f32.mrb[0].mxu0
    %1539 = vmatprep.mubr.f32.mxu0 0.0
    %1540 = vmatmul.mubr.f32.gmra.mrb[0].mxu0 %v1453
    %v1541 = vpop.f32.mrb[0].mxu0
    %v1542 = vadd.f32 0.0, %v1541
    %v1543 = vpop.f32.mrb[0].mxu0
    %1544 = vmatprep.mubr.f32.mxu0 0.0
    %1545 = vmatmul.mubr.f32.gmra.mrb[0].mxu0 %v1456
    %v1546 = vpop.f32.mrb[0].mxu0
    %v1547 = vadd.f32 0.0, %v1546
    %v1548 = vpop.f32.mrb[0].mxu0
    %1549 = vdwg.mxu0
    %1553 = vrot.lane.b32.xlu0 %v1537, 96
    %v1554 = vpop.permute.xlu0 %1553
    %1555 = vrot.lane.b32.xlu0 %v1542, 96
    %v1556 = vpop.permute.xlu0 %1555
    %1557 = vrot.lane.b32.xlu0 %v1547, 96
    %v1558 = vpop.permute.xlu0 %1557
    %vm1562 = vcmask 1048320
    %1563 = vst.msk [vmem:[%s2] sm:$0xff] %vm1562, %v1554
    %1564 = vst.msk [vmem:[%s2 + $0x8] sm:$0xff] %vm1562, %v1556
    %vm1565 = vcmask 1041152
    %1566 = vst.msk [vmem:[%s2 + $0x10] sm:$0x1] %vm1565, %v1558
    %s1567 = scalar_lea.vmem %s0, 24
    %v1568 = vld [vmem:[%s1567] sm:$0xff]
    %v1569 = vld [vmem:[%s1567 + $0x8] sm:$0xff]
    %v1570 = vld [vmem:[%s1567 + $0x10] sm:$0x1]
    %v1571 = vld [vmem:[#allocation3] sm:$0xff]
    %v1572 = vld [vmem:[#allocation3 + $0x8] sm:$0xff]
    %v1573 = vld [vmem:[#allocation3 + $0x10] sm:$0xff]
    %v1574 = vld [vmem:[#allocation3 + $0x18] sm:$0xff]
    %v1575 = vld [vmem:[#allocation3 + $0x20] sm:$0xff]
    %v1576 = vld [vmem:[#allocation3 + $0x28] sm:$0xff]
    %v1577 = vld [vmem:[#allocation3 + $0x30] sm:$0xff]
    %v1578 = vld [vmem:[#allocation3 + $0x38] sm:$0xff]
    %v1579 = vld [vmem:[#allocation3 + $0x40] sm:$0xff]
    %v1580 = vld [vmem:[#allocation3 + $0x48] sm:$0xff]
    %v1581 = vld [vmem:[#allocation3 + $0x50] sm:$0xff]
    %v1582 = vld [vmem:[#allocation3 + $0x58] sm:$0xff]
    %v1583 = vld [vmem:[#allocation3 + $0x60] sm:$0xff]
    %v1584 = vld [vmem:[#allocation3 + $0x68] sm:$0xff]
    %v1585 = vld [vmem:[#allocation3 + $0x70] sm:$0xff]
    %v1586 = vld [vmem:[#allocation3 + $0x78] sm:$0xff]
    %v1587 = vld [vmem:[#allocation3 + $0x80] sm:$0xff]
    %v1588 = vld [vmem:[#allocation3 + $0x88] sm:$0xff]
    %v1589 = vld [vmem:[#allocation3 + $0x90] sm:$0xff]
    %v1590 = vld [vmem:[#allocation3 + $0x98] sm:$0xff]
    %v1591 = vld [vmem:[#allocation3 + $0xa0] sm:$0xff]
    %v1592 = vld [vmem:[#allocation3 + $0xa8] sm:$0xff]
    %v1593 = vld [vmem:[#allocation3 + $0xb0] sm:$0xff]
    %v1594 = vld [vmem:[#allocation3 + $0xb8] sm:$0xff]
    %v1595 = vld [vmem:[#allocation3 + $0xc0] sm:$0xff]
    %v1596 = vld [vmem:[#allocation3 + $0xc8] sm:$0xff]
    %v1597 = vld [vmem:[#allocation3 + $0xd0] sm:$0xff]
    %v1598 = vld [vmem:[#allocation3 + $0xd8] sm:$0xff]
    %v1599 = vld [vmem:[#allocation3 + $0xe0] sm:$0xff]
    %v1600 = vld [vmem:[#allocation3 + $0xe8] sm:$0xff]
    %v1601 = vld [vmem:[#allocation3 + $0xf0] sm:$0xff]
    %v1602 = vld [vmem:[#allocation3 + $0xf8] sm:$0xff]
    %v1603 = vld [vmem:[#allocation3 + $0x100] sm:$0xff]
    %v1604 = vld [vmem:[#allocation3 + $0x108] sm:$0xff]
    %v1605 = vld [vmem:[#allocation3 + $0x110] sm:$0xff]
    %v1606 = vld [vmem:[#allocation3 + $0x118] sm:$0xff]
    %v1607 = vld [vmem:[#allocation3 + $0x120] sm:$0xff]
    %v1608 = vld [vmem:[#allocation3 + $0x128] sm:$0xff]
    %v1609 = vld [vmem:[#allocation3 + $0x130] sm:$0xff]
    %v1610 = vld [vmem:[#allocation3 + $0x138] sm:$0xff]
    %v1611 = vld [vmem:[#allocation3 + $0x140] sm:$0xff]
    %v1612 = vld [vmem:[#allocation3 + $0x148] sm:$0xff]
    %v1613 = vld [vmem:[#allocation3 + $0x150] sm:$0xff]
    %v1614 = vld [vmem:[#allocation3 + $0x158] sm:$0xff]
    %v1615 = vld [vmem:[#allocation3 + $0x160] sm:$0xff]
    %v1616 = vld [vmem:[#allocation3 + $0x168] sm:$0xff]
    %v1617 = vld [vmem:[#allocation3 + $0x170] sm:$0xff]
    %v1618 = vld [vmem:[#allocation3 + $0x178] sm:$0xff]
    %1619 = vmatprep.subr.mxu0 0.0
    %1620 = vmatpush1.xpose.msra.mxu0 %v1568
    %1621 = vmatprep.subr.mxu0 0.0
    %1622 = vmatpush1.xpose.msra.mxu0 %v1569
    %1623 = vmatprep.subr.mxu0 0.0
    %1624 = vmatpush1.xpose.msra.mxu0 %v1570
    %1625 = vmatprep.subr.mxu0 0.0
    %1626 = vmatpush1.xpose.msra.mxu0 0.0
    %1627 = vmatprep.subr.mxu0 0.0
    %1628 = vmatpush1.xpose.msra.mxu0 0.0
    %1629 = vmatprep.subr.mxu0 0.0
    %1630 = vmatpush1.xpose.msra.mxu0 0.0
    %1631 = vmatprep.subr.mxu0 0.0
    %1632 = vmatpush1.xpose.msra.mxu0 0.0
    %1633 = vmatprep.subr.mxu0 0.0
    %1634 = vmatpush1.xpose.msra.mxu0 0.0
    %1635 = vmatprep.subr.mxu0 0.0
    %1636 = vmatpush1.xpose.msra.mxu0 0.0
    %1637 = vmatprep.subr.mxu0 0.0
    %1638 = vmatpush1.xpose.msra.mxu0 0.0
    %1639 = vmatprep.subr.mxu0 0.0
    %1640 = vmatpush1.xpose.msra.mxu0 0.0
    %1641 = vmatprep.subr.mxu0 0.0
    %1642 = vmatpush1.xpose.msra.mxu0 0.0
    %1643 = vmatprep.subr.mxu0 0.0
    %1644 = vmatpush1.xpose.msra.mxu0 0.0
    %1645 = vmatprep.subr.mxu0 0.0
    %1646 = vmatpush1.xpose.msra.mxu0 0.0
    %1647 = vmatprep.subr.mxu0 0.0
    %1648 = vmatpush1.xpose.msra.mxu0 0.0
    %1649 = vmatprep.subr.mxu0 0.0
    %1650 = vmatpush1.xpose.msra.mxu0 0.0
    %1651 = vmatprep.subr.mxu0 0.0
    %1652 = vmatpush1.xpose.msra.mxu0 0.0
    %1653 = vmatprep.subr.mxu0 0.0
    %1654 = vmatpush1.xpose.msra.mxu0 0.0
    %1655 = vmatprep.subr.mxu0 0.0
    %1656 = vmatpush1.xpose.msra.mxu0 0.0
    %1657 = vmatprep.subr.mxu0 0.0
    %1658 = vmatpush1.xpose.msra.mxu0 0.0
    %1659 = vmatprep.subr.mxu0 0.0
    %1660 = vmatpush1.xpose.msra.mxu0 0.0
    %1661 = vmatprep.subr.mxu0 0.0
    %1662 = vmatpush1.xpose.msra.mxu0 0.0
    %1663 = vmatprep.subr.mxu0 0.0
    %1664 = vmatpush1.xpose.msra.mxu0 0.0
    %1665 = vmatprep.subr.mxu0 0.0
    %1666 = vmatpush1.xpose.msra.mxu0 0.0
    %1667 = vmatprep.subr.mxu0 0.0
    %1668 = vmatpush1.xpose.msra.mxu0 0.0
    %1669 = vmatprep.subr.mxu0 0.0
    %1670 = vmatpush1.xpose.msra.mxu0 0.0
    %1671 = vmatprep.subr.mxu0 0.0
    %1672 = vmatpush1.xpose.msra.mxu0 0.0
    %1673 = vmatprep.subr.mxu0 0.0
    %1674 = vmatpush1.xpose.msra.mxu0 0.0
    %1675 = vmatprep.subr.mxu0 0.0
    %1676 = vmatpush1.xpose.msra.mxu0 0.0
    %1677 = vmatprep.subr.mxu0 0.0
    %1678 = vmatpush1.xpose.msra.mxu0 0.0
    %1679 = vmatprep.subr.mxu0 0.0
    %1680 = vmatpush1.xpose.msra.mxu0 0.0
    %1681 = vmatprep.subr.mxu0 0.0
    %1682 = vmatpush1.xpose.msra.mxu0 0.0
    %1683 = vmatprep.mubr.f32.mxu0 0.0
    %1684 = vmatmul.mubr.f32.gmra.mrb[0].mxu0 %v1571
    %v1685 = vpop.f32.mrb[0].mxu0
    %v1686 = vadd.f32 0.0, %v1685
    %v1687 = vpop.f32.mrb[0].mxu0
    %1688 = vmatprep.mubr.f32.mxu0 0.0
    %1689 = vmatmul.mubr.f32.gmra.mrb[0].mxu0 %v1572
    %v1690 = vpop.f32.mrb[0].mxu0
    %v1691 = vadd.f32 0.0, %v1690
    %v1692 = vpop.f32.mrb[0].mxu0
    %1693 = vmatprep.mubr.f32.mxu0 0.0
    %1694 = vmatmul.mubr.f32.gmra.mrb[0].mxu0 %v1573
    %v1695 = vpop.f32.mrb[0].mxu0
    %v1696 = vadd.f32 0.0, %v1695
    %v1697 = vpop.f32.mrb[0].mxu0
    %1698 = vmatprep.mubr.f32.mxu0 0.0
    %1699 = vmatmul.mubr.f32.gmra.mrb[0].mxu0 %v1574
    %v1700 = vpop.f32.mrb[0].mxu0
    %v1701 = vadd.f32 0.0, %v1700
    %v1702 = vpop.f32.mrb[0].mxu0
    %1703 = vmatprep.mubr.f32.mxu0 0.0
    %1704 = vmatmul.mubr.f32.gmra.mrb[0].mxu0 %v1575
    %v1705 = vpop.f32.mrb[0].mxu0
    %v1706 = vadd.f32 0.0, %v1705
    %v1707 = vpop.f32.mrb[0].mxu0
    %1708 = vmatprep.mubr.f32.mxu0 0.0
    %1709 = vmatmul.mubr.f32.gmra.mrb[0].mxu0 %v1576
    %v1710 = vpop.f32.mrb[0].mxu0
    %v1711 = vadd.f32 0.0, %v1710
    %v1712 = vpop.f32.mrb[0].mxu0
    %1713 = vmatprep.mubr.f32.mxu0 0.0
    %1714 = vmatmul.mubr.f32.gmra.mrb[0].mxu0 %v1577
    %v1715 = vpop.f32.mrb[0].mxu0
    %v1716 = vadd.f32 0.0, %v1715
    %v1717 = vpop.f32.mrb[0].mxu0
    %1718 = vmatprep.mubr.f32.mxu0 0.0
    %1719 = vmatmul.mubr.f32.gmra.mrb[0].mxu0 %v1578
    %v1720 = vpop.f32.mrb[0].mxu0
    %v1721 = vadd.f32 0.0, %v1720
    %v1722 = vpop.f32.mrb[0].mxu0
    %1723 = vmatprep.mubr.f32.mxu0 0.0
    %1724 = vmatmul.mubr.f32.gmra.mrb[0].mxu0 %v1579
    %v1725 = vpop.f32.mrb[0].mxu0
    %v1726 = vadd.f32 0.0, %v1725
    %v1727 = vpop.f32.mrb[0].mxu0
    %1728 = vmatprep.mubr.f32.mxu0 0.0
    %1729 = vmatmul.mubr.f32.gmra.mrb[0].mxu0 %v1580
    %v1730 = vpop.f32.mrb[0].mxu0
    %v1731 = vadd.f32 0.0, %v1730
    %v1732 = vpop.f32.mrb[0].mxu0
    %1733 = vmatprep.mubr.f32.mxu0 0.0
    %1734 = vmatmul.mubr.f32.gmra.mrb[0].mxu0 %v1581
    %v1735 = vpop.f32.mrb[0].mxu0
    %v1736 = vadd.f32 0.0, %v1735
    %v1737 = vpop.f32.mrb[0].mxu0
    %1738 = vmatprep.mubr.f32.mxu0 0.0
    %1739 = vmatmul.mubr.f32.gmra.mrb[0].mxu0 %v1582
    %v1740 = vpop.f32.mrb[0].mxu0
    %v1741 = vadd.f32 0.0, %v1740
    %v1742 = vpop.f32.mrb[0].mxu0
    %1743 = vmatprep.mubr.f32.mxu0 0.0
    %1744 = vmatmul.mubr.f32.gmra.mrb[0].mxu0 %v1583
    %v1745 = vpop.f32.mrb[0].mxu0
    %v1746 = vadd.f32 0.0, %v1745
    %v1747 = vpop.f32.mrb[0].mxu0
    %1748 = vmatprep.mubr.f32.mxu0 0.0
    %1749 = vmatmul.mubr.f32.gmra.mrb[0].mxu0 %v1584
    %v1750 = vpop.f32.mrb[0].mxu0
    %v1751 = vadd.f32 0.0, %v1750
    %v1752 = vpop.f32.mrb[0].mxu0
    %1753 = vmatprep.mubr.f32.mxu0 0.0
    %1754 = vmatmul.mubr.f32.gmra.mrb[0].mxu0 %v1585
    %v1755 = vpop.f32.mrb[0].mxu0
    %v1756 = vadd.f32 0.0, %v1755
    %v1757 = vpop.f32.mrb[0].mxu0
    %1758 = vmatprep.mubr.f32.mxu0 0.0
    %1759 = vmatmul.mubr.f32.gmra.mrb[0].mxu0 %v1586
    %v1760 = vpop.f32.mrb[0].mxu0
    %v1761 = vadd.f32 0.0, %v1760
    %v1762 = vpop.f32.mrb[0].mxu0
    %1763 = vmatprep.mubr.f32.mxu0 0.0
    %1764 = vmatmul.mubr.f32.gmra.mrb[0].mxu0 %v1587
    %v1765 = vpop.f32.mrb[0].mxu0
    %v1766 = vadd.f32 0.0, %v1765
    %v1767 = vpop.f32.mrb[0].mxu0
    %1768 = vmatprep.mubr.f32.mxu0 0.0
    %1769 = vmatmul.mubr.f32.gmra.mrb[0].mxu0 %v1588
    %v1770 = vpop.f32.mrb[0].mxu0
    %v1771 = vadd.f32 0.0, %v1770
    %v1772 = vpop.f32.mrb[0].mxu0
    %1773 = vmatprep.mubr.f32.mxu0 0.0
    %1774 = vmatmul.mubr.f32.gmra.mrb[0].mxu0 %v1589
    %v1775 = vpop.f32.mrb[0].mxu0
    %v1776 = vadd.f32 0.0, %v1775
    %v1777 = vpop.f32.mrb[0].mxu0
    %1778 = vmatprep.mubr.f32.mxu0 0.0
    %1779 = vmatmul.mubr.f32.gmra.mrb[0].mxu0 %v1590
    %v1780 = vpop.f32.mrb[0].mxu0
    %v1781 = vadd.f32 0.0, %v1780
    %v1782 = vpop.f32.mrb[0].mxu0
    %1783 = vmatprep.mubr.f32.mxu0 0.0
    %1784 = vmatmul.mubr.f32.gmra.mrb[0].mxu0 %v1591
    %v1785 = vpop.f32.mrb[0].mxu0
    %v1786 = vadd.f32 0.0, %v1785
    %v1787 = vpop.f32.mrb[0].mxu0
    %1788 = vmatprep.mubr.f32.mxu0 0.0
    %1789 = vmatmul.mubr.f32.gmra.mrb[0].mxu0 %v1592
    %v1790 = vpop.f32.mrb[0].mxu0
    %v1791 = vadd.f32 0.0, %v1790
    %v1792 = vpop.f32.mrb[0].mxu0
    %1793 = vmatprep.mubr.f32.mxu0 0.0
    %1794 = vmatmul.mubr.f32.gmra.mrb[0].mxu0 %v1593
    %v1795 = vpop.f32.mrb[0].mxu0
    %v1796 = vadd.f32 0.0, %v1795
    %v1797 = vpop.f32.mrb[0].mxu0
    %1798 = vmatprep.mubr.f32.mxu0 0.0
    %1799 = vmatmul.mubr.f32.gmra.mrb[0].mxu0 %v1594
    %v1800 = vpop.f32.mrb[0].mxu0
    %v1801 = vadd.f32 0.0, %v1800
    %v1802 = vpop.f32.mrb[0].mxu0
    %1803 = vmatprep.mubr.f32.mxu0 0.0
    %1804 = vmatmul.mubr.f32.gmra.mrb[0].mxu0 %v1595
    %v1805 = vpop.f32.mrb[0].mxu0
    %v1806 = vadd.f32 0.0, %v1805
    %v1807 = vpop.f32.mrb[0].mxu0
    %1808 = vmatprep.mubr.f32.mxu0 0.0
    %1809 = vmatmul.mubr.f32.gmra.mrb[0].mxu0 %v1596
    %v1810 = vpop.f32.mrb[0].mxu0
    %v1811 = vadd.f32 0.0, %v1810
    %v1812 = vpop.f32.mrb[0].mxu0
    %1813 = vmatprep.mubr.f32.mxu0 0.0
    %1814 = vmatmul.mubr.f32.gmra.mrb[0].mxu0 %v1597
    %v1815 = vpop.f32.mrb[0].mxu0
    %v1816 = vadd.f32 0.0, %v1815
    %v1817 = vpop.f32.mrb[0].mxu0
    %1818 = vmatprep.mubr.f32.mxu0 0.0
    %1819 = vmatmul.mubr.f32.gmra.mrb[0].mxu0 %v1598
    %v1820 = vpop.f32.mrb[0].mxu0
    %v1821 = vadd.f32 0.0, %v1820
    %v1822 = vpop.f32.mrb[0].mxu0
    %1823 = vmatprep.mubr.f32.mxu0 0.0
    %1824 = vmatmul.mubr.f32.gmra.mrb[0].mxu0 %v1599
    %v1825 = vpop.f32.mrb[0].mxu0
    %v1826 = vadd.f32 0.0, %v1825
    %v1827 = vpop.f32.mrb[0].mxu0
    %1828 = vmatprep.mubr.f32.mxu0 0.0
    %1829 = vmatmul.mubr.f32.gmra.mrb[0].mxu0 %v1600
    %v1830 = vpop.f32.mrb[0].mxu0
    %v1831 = vadd.f32 0.0, %v1830
    %v1832 = vpop.f32.mrb[0].mxu0
    %1833 = vmatprep.mubr.f32.mxu0 0.0
    %1834 = vmatmul.mubr.f32.gmra.mrb[0].mxu0 %v1601
    %v1835 = vpop.f32.mrb[0].mxu0
    %v1836 = vadd.f32 0.0, %v1835
    %v1837 = vpop.f32.mrb[0].mxu0
    %1838 = vmatprep.mubr.f32.mxu0 0.0
    %1839 = vmatmul.mubr.f32.gmra.mrb[0].mxu0 %v1602
    %v1840 = vpop.f32.mrb[0].mxu0
    %v1841 = vadd.f32 0.0, %v1840
    %v1842 = vpop.f32.mrb[0].mxu0
    %1843 = vmatprep.mubr.f32.mxu0 0.0
    %1844 = vmatmul.mubr.f32.gmra.mrb[0].mxu0 %v1603
    %v1845 = vpop.f32.mrb[0].mxu0
    %v1846 = vadd.f32 0.0, %v1845
    %v1847 = vpop.f32.mrb[0].mxu0
    %1848 = vmatprep.mubr.f32.mxu0 0.0
    %1849 = vmatmul.mubr.f32.gmra.mrb[0].mxu0 %v1604
    %v1850 = vpop.f32.mrb[0].mxu0
    %v1851 = vadd.f32 0.0, %v1850
    %v1852 = vpop.f32.mrb[0].mxu0
    %1853 = vmatprep.mubr.f32.mxu0 0.0
    %1854 = vmatmul.mubr.f32.gmra.mrb[0].mxu0 %v1605
    %v1855 = vpop.f32.mrb[0].mxu0
    %v1856 = vadd.f32 0.0, %v1855
    %v1857 = vpop.f32.mrb[0].mxu0
    %1858 = vmatprep.mubr.f32.mxu0 0.0
    %1859 = vmatmul.mubr.f32.gmra.mrb[0].mxu0 %v1606
    %v1860 = vpop.f32.mrb[0].mxu0
    %v1861 = vadd.f32 0.0, %v1860
    %v1862 = vpop.f32.mrb[0].mxu0
    %1863 = vmatprep.mubr.f32.mxu0 0.0
    %1864 = vmatmul.mubr.f32.gmra.mrb[0].mxu0 %v1607
    %v1865 = vpop.f32.mrb[0].mxu0
    %v1866 = vadd.f32 0.0, %v1865
    %v1867 = vpop.f32.mrb[0].mxu0
    %1868 = vmatprep.mubr.f32.mxu0 0.0
    %1869 = vmatmul.mubr.f32.gmra.mrb[0].mxu0 %v1608
    %v1870 = vpop.f32.mrb[0].mxu0
    %v1871 = vadd.f32 0.0, %v1870
    %v1872 = vpop.f32.mrb[0].mxu0
    %1873 = vmatprep.mubr.f32.mxu0 0.0
    %1874 = vmatmul.mubr.f32.gmra.mrb[0].mxu0 %v1609
    %v1875 = vpop.f32.mrb[0].mxu0
    %v1876 = vadd.f32 0.0, %v1875
    %v1877 = vpop.f32.mrb[0].mxu0
    %1878 = vmatprep.mubr.f32.mxu0 0.0
    %1879 = vmatmul.mubr.f32.gmra.mrb[0].mxu0 %v1610
    %v1880 = vpop.f32.mrb[0].mxu0
    %v1881 = vadd.f32 0.0, %v1880
    %v1882 = vpop.f32.mrb[0].mxu0
    %1883 = vmatprep.mubr.f32.mxu0 0.0
    %1884 = vmatmul.mubr.f32.gmra.mrb[0].mxu0 %v1611
    %v1885 = vpop.f32.mrb[0].mxu0
    %v1886 = vadd.f32 0.0, %v1885
    %v1887 = vpop.f32.mrb[0].mxu0
    %1888 = vmatprep.mubr.f32.mxu0 0.0
    %1889 = vmatmul.mubr.f32.gmra.mrb[0].mxu0 %v1612
    %v1890 = vpop.f32.mrb[0].mxu0
    %v1891 = vadd.f32 0.0, %v1890
    %v1892 = vpop.f32.mrb[0].mxu0
    %1893 = vmatprep.mubr.f32.mxu0 0.0
    %1894 = vmatmul.mubr.f32.gmra.mrb[0].mxu0 %v1613
    %v1895 = vpop.f32.mrb[0].mxu0
    %v1896 = vadd.f32 0.0, %v1895
    %v1897 = vpop.f32.mrb[0].mxu0
    %1898 = vmatprep.mubr.f32.mxu0 0.0
    %1899 = vmatmul.mubr.f32.gmra.mrb[0].mxu0 %v1614
    %v1900 = vpop.f32.mrb[0].mxu0
    %v1901 = vadd.f32 0.0, %v1900
    %v1902 = vpop.f32.mrb[0].mxu0
    %1903 = vmatprep.mubr.f32.mxu0 0.0
    %1904 = vmatmul.mubr.f32.gmra.mrb[0].mxu0 %v1615
    %v1905 = vpop.f32.mrb[0].mxu0
    %v1906 = vadd.f32 0.0, %v1905
    %v1907 = vpop.f32.mrb[0].mxu0
    %1908 = vmatprep.mubr.f32.mxu0 0.0
    %1909 = vmatmul.mubr.f32.gmra.mrb[0].mxu0 %v1616
    %v1910 = vpop.f32.mrb[0].mxu0
    %v1911 = vadd.f32 0.0, %v1910
    %v1912 = vpop.f32.mrb[0].mxu0
    %1913 = vmatprep.mubr.f32.mxu0 0.0
    %1914 = vmatmul.mubr.f32.gmra.mrb[0].mxu0 %v1617
    %v1915 = vpop.f32.mrb[0].mxu0
    %v1916 = vadd.f32 0.0, %v1915
    %v1917 = vpop.f32.mrb[0].mxu0
    %1918 = vmatprep.mubr.f32.mxu0 0.0
    %1919 = vmatmul.mubr.f32.gmra.mrb[0].mxu0 %v1618
    %v1920 = vpop.f32.mrb[0].mxu0
    %v1921 = vadd.f32 0.0, %v1920
    %v1922 = vpop.f32.mrb[0].mxu0
    %1923 = vdwg.mxu0
    %1924 = vst.msk [vmem:[#allocation2] sm:$0xff] %vm393, %v1686
    %1925 = vst.msk [vmem:[#allocation2 + $0x8] sm:$0xff] %vm393, %v1691
    %1926 = vst.msk [vmem:[#allocation2 + $0x10] sm:$0xff] %vm393, %v1696
    %1927 = vst.msk [vmem:[#allocation2 + $0x18] sm:$0xff] %vm393, %v1701
    %1928 = vst.msk [vmem:[#allocation2 + $0x20] sm:$0xff] %vm393, %v1706
    %1929 = vst.msk [vmem:[#allocation2 + $0x28] sm:$0xff] %vm393, %v1711
    %1930 = vst.msk [vmem:[#allocation2 + $0x30] sm:$0xff] %vm393, %v1716
    %1931 = vst.msk [vmem:[#allocation2 + $0x38] sm:$0xff] %vm393, %v1721
    %1932 = vst.msk [vmem:[#allocation2 + $0x40] sm:$0xff] %vm393, %v1726
    %1933 = vst.msk [vmem:[#allocation2 + $0x48] sm:$0xff] %vm393, %v1731
    %1934 = vst.msk [vmem:[#allocation2 + $0x50] sm:$0xff] %vm393, %v1736
    %1935 = vst.msk [vmem:[#allocation2 + $0x58] sm:$0xff] %vm393, %v1741
    %1936 = vst.msk [vmem:[#allocation2 + $0x60] sm:$0xff] %vm393, %v1746
    %1937 = vst.msk [vmem:[#allocation2 + $0x68] sm:$0xff] %vm393, %v1751
    %1938 = vst.msk [vmem:[#allocation2 + $0x70] sm:$0xff] %vm393, %v1756
    %1939 = vst.msk [vmem:[#allocation2 + $0x78] sm:$0xff] %vm393, %v1761
    %1940 = vst.msk [vmem:[#allocation2 + $0x80] sm:$0xff] %vm393, %v1766
    %1941 = vst.msk [vmem:[#allocation2 + $0x88] sm:$0xff] %vm393, %v1771
    %1942 = vst.msk [vmem:[#allocation2 + $0x90] sm:$0xff] %vm393, %v1776
    %1943 = vst.msk [vmem:[#allocation2 + $0x98] sm:$0xff] %vm393, %v1781
    %1944 = vst.msk [vmem:[#allocation2 + $0xa0] sm:$0xff] %vm393, %v1786
    %1945 = vst.msk [vmem:[#allocation2 + $0xa8] sm:$0xff] %vm393, %v1791
    %1946 = vst.msk [vmem:[#allocation2 + $0xb0] sm:$0xff] %vm393, %v1796
    %1947 = vst.msk [vmem:[#allocation2 + $0xb8] sm:$0xff] %vm393, %v1801
    %1948 = vst.msk [vmem:[#allocation2 + $0xc0] sm:$0xff] %vm393, %v1806
    %1949 = vst.msk [vmem:[#allocation2 + $0xc8] sm:$0xff] %vm393, %v1811
    %1950 = vst.msk [vmem:[#allocation2 + $0xd0] sm:$0xff] %vm393, %v1816
    %1951 = vst.msk [vmem:[#allocation2 + $0xd8] sm:$0xff] %vm393, %v1821
    %1952 = vst.msk [vmem:[#allocation2 + $0xe0] sm:$0xff] %vm393, %v1826
    %1953 = vst.msk [vmem:[#allocation2 + $0xe8] sm:$0xff] %vm393, %v1831
    %1954 = vst.msk [vmem:[#allocation2 + $0xf0] sm:$0xff] %vm393, %v1836
    %1955 = vst.msk [vmem:[#allocation2 + $0xf8] sm:$0xff] %vm393, %v1841
    %1956 = vst.msk [vmem:[#allocation2 + $0x100] sm:$0xff] %vm393, %v1846
    %1957 = vst.msk [vmem:[#allocation2 + $0x108] sm:$0xff] %vm393, %v1851
    %1958 = vst.msk [vmem:[#allocation2 + $0x110] sm:$0xff] %vm393, %v1856
    %1959 = vst.msk [vmem:[#allocation2 + $0x118] sm:$0xff] %vm393, %v1861
    %1960 = vst.msk [vmem:[#allocation2 + $0x120] sm:$0xff] %vm393, %v1866
    %1961 = vst.msk [vmem:[#allocation2 + $0x128] sm:$0xff] %vm393, %v1871
    %1962 = vst.msk [vmem:[#allocation2 + $0x130] sm:$0xff] %vm393, %v1876
    %1963 = vst.msk [vmem:[#allocation2 + $0x138] sm:$0xff] %vm393, %v1881
    %1964 = vst.msk [vmem:[#allocation2 + $0x140] sm:$0xff] %vm393, %v1886
    %1965 = vst.msk [vmem:[#allocation2 + $0x148] sm:$0xff] %vm393, %v1891
    %1966 = vst.msk [vmem:[#allocation2 + $0x150] sm:$0xff] %vm393, %v1896
    %1967 = vst.msk [vmem:[#allocation2 + $0x158] sm:$0xff] %vm393, %v1901
    %1968 = vst.msk [vmem:[#allocation2 + $0x160] sm:$0xff] %vm393, %v1906
    %1969 = vst.msk [vmem:[#allocation2 + $0x168] sm:$0xff] %vm393, %v1911
    %1970 = vst.msk [vmem:[#allocation2 + $0x170] sm:$0xff] %vm393, %v1916
    %1971 = vst.msk [vmem:[#allocation2 + $0x178] sm:$0xff] %vm393, %v1921
    %v1972 = vld [vmem:[#allocation2] sm:$0xff]
    %v1973 = vld [vmem:[#allocation2 + $0x8] sm:$0xff]
    %v1974 = vld [vmem:[#allocation2 + $0x10] sm:$0xff]
    %v1975 = vld [vmem:[#allocation2 + $0x18] sm:$0xff]
    %v1976 = vld [vmem:[#allocation2 + $0x80] sm:$0xff]
    %v1977 = vld [vmem:[#allocation2 + $0x88] sm:$0xff]
    %v1978 = vld [vmem:[#allocation2 + $0x90] sm:$0xff]
    %v1979 = vld [vmem:[#allocation2 + $0x98] sm:$0xff]
    %v1980 = vld [vmem:[#allocation2 + $0x100] sm:$0xff]
    %v1981 = vld [vmem:[#allocation2 + $0x108] sm:$0xff]
    %v1982 = vld [vmem:[#allocation2 + $0x110] sm:$0xff]
    %v1983 = vld [vmem:[#allocation2 + $0x118] sm:$0xff]
    %1984 = vxpose.xlu0.b32.start [1/16] %v1972, 128
    %1985 = vxpose.xlu0.b32.cont [2/16] %v1973, 128
    %1986 = vxpose.xlu0.b32.cont [3/16] %v1974, 128
    %1987 = vxpose.xlu0.b32.cont [4/16] %v1975, 128
    %1988 = vxpose.xlu0.b32.cont [5/16] 0.0, 128
    %1989 = vxpose.xlu0.b32.cont [6/16] 0.0, 128
    %1990 = vxpose.xlu0.b32.cont [7/16] 0.0, 128
    %1991 = vxpose.xlu0.b32.cont [8/16] 0.0, 128
    %1992 = vxpose.xlu0.b32.cont [9/16] 0.0, 128
    %1993 = vxpose.xlu0.b32.cont [10/16] 0.0, 128
    %1994 = vxpose.xlu0.b32.cont [11/16] 0.0, 128
    %1995 = vxpose.xlu0.b32.cont [12/16] 0.0, 128
    %1996 = vxpose.xlu0.b32.cont [13/16] 0.0, 128
    %1997 = vxpose.xlu0.b32.cont [14/16] 0.0, 128
    %1998 = vxpose.xlu0.b32.cont [15/16] 0.0, 128
    %1999 = vxpose.xlu0.b32.end [16/16] 0.0, 128
    %v2000 = vpop.trf.xlu0
    %v2001 = vpop.trf.xlu0
    %v2002 = vpop.trf.xlu0
    %v2003 = vpop.trf.xlu0
    %v2004 = vpop.trf.xlu0
    %v2005 = vpop.trf.xlu0
    %v2006 = vpop.trf.xlu0
    %v2007 = vpop.trf.xlu0
    %v2008 = vpop.trf.xlu0
    %v2009 = vpop.trf.xlu0
    %v2010 = vpop.trf.xlu0
    %v2011 = vpop.trf.xlu0
    %v2012 = vpop.trf.xlu0
    %v2013 = vpop.trf.xlu0
    %v2014 = vpop.trf.xlu0
    %v2015 = vpop.trf.xlu0
    %v2017 = vsel %vm486, %v2000, 0
    %v2020 = vsel %vm486, %v2001, 0
    %v2023 = vsel %vm486, %v2002, 0
    %2025 = vmatprep.subr.mxu0 0.0
    %2026 = vmatpush1.msra.mxu0 %v1976
    %2027 = vmatprep.subr.mxu0 0.0
    %2028 = vmatpush1.msra.mxu0 %v1977
    %2029 = vmatprep.subr.mxu0 0.0
    %2030 = vmatpush1.msra.mxu0 %v1978
    %2031 = vmatprep.subr.mxu0 0.0
    %2032 = vmatpush1.msra.mxu0 %v1979
    %2033 = vmatprep.subr.mxu0 0.0
    %2034 = vmatpush1.msra.mxu0 0.0
    %2035 = vmatprep.subr.mxu0 0.0
    %2036 = vmatpush1.msra.mxu0 0.0
    %2037 = vmatprep.subr.mxu0 0.0
    %2038 = vmatpush1.msra.mxu0 0.0
    %2039 = vmatprep.subr.mxu0 0.0
    %2040 = vmatpush1.msra.mxu0 0.0
    %2041 = vmatprep.subr.mxu0 0.0
    %2042 = vmatpush1.msra.mxu0 0.0
    %2043 = vmatprep.subr.mxu0 0.0
    %2044 = vmatpush1.msra.mxu0 0.0
    %2045 = vmatprep.subr.mxu0 0.0
    %2046 = vmatpush1.msra.mxu0 0.0
    %2047 = vmatprep.subr.mxu0 0.0
    %2048 = vmatpush1.msra.mxu0 0.0
    %2049 = vmatprep.subr.mxu0 0.0
    %2050 = vmatpush1.msra.mxu0 0.0
    %2051 = vmatprep.subr.mxu0 0.0
    %2052 = vmatpush1.msra.mxu0 0.0
    %2053 = vmatprep.subr.mxu0 0.0
    %2054 = vmatpush1.msra.mxu0 0.0
    %2055 = vmatprep.subr.mxu0 0.0
    %2056 = vmatpush1.msra.mxu0 0.0
    %2057 = vmatprep.subr.mxu0 0.0
    %2058 = vmatpush1.msra.mxu0 0.0
    %2059 = vmatprep.subr.mxu0 0.0
    %2060 = vmatpush1.msra.mxu0 0.0
    %2061 = vmatprep.subr.mxu0 0.0
    %2062 = vmatpush1.msra.mxu0 0.0
    %2063 = vmatprep.subr.mxu0 0.0
    %2064 = vmatpush1.msra.mxu0 0.0
    %2065 = vmatprep.subr.mxu0 0.0
    %2066 = vmatpush1.msra.mxu0 0.0
    %2067 = vmatprep.subr.mxu0 0.0
    %2068 = vmatpush1.msra.mxu0 0.0
    %2069 = vmatprep.subr.mxu0 0.0
    %2070 = vmatpush1.msra.mxu0 0.0
    %2071 = vmatprep.subr.mxu0 0.0
    %2072 = vmatpush1.msra.mxu0 0.0
    %2073 = vmatprep.subr.mxu0 0.0
    %2074 = vmatpush1.msra.mxu0 0.0
    %2075 = vmatprep.subr.mxu0 0.0
    %2076 = vmatpush1.msra.mxu0 0.0
    %2077 = vmatprep.subr.mxu0 0.0
    %2078 = vmatpush1.msra.mxu0 0.0
    %2079 = vmatprep.subr.mxu0 0.0
    %2080 = vmatpush1.msra.mxu0 0.0
    %2081 = vmatprep.subr.mxu0 0.0
    %2082 = vmatpush1.msra.mxu0 0.0
    %2083 = vmatprep.subr.mxu0 0.0
    %2084 = vmatpush1.msra.mxu0 0.0
    %2085 = vmatprep.subr.mxu0 0.0
    %2086 = vmatpush1.msra.mxu0 0.0
    %2087 = vmatprep.subr.mxu0 0.0
    %2088 = vmatpush1.msra.mxu0 0.0
    %2089 = vmatprep.mubr.f32.mxu0 0.0
    %2090 = vmatmul.mubr.f32.gmra.mrb[0].mxu0 %v2017
    %v2091 = vpop.f32.mrb[0].mxu0
    %v2092 = vadd.f32 %v34, %v2091
    %v2093 = vpop.f32.mrb[0].mxu0
    %2094 = vmatprep.mubr.f32.mxu0 0.0
    %2095 = vmatmul.mubr.f32.gmra.mrb[0].mxu0 %v2020
    %v2096 = vpop.f32.mrb[0].mxu0
    %v2097 = vadd.f32 %v35, %v2096
    %v2098 = vpop.f32.mrb[0].mxu0
    %2099 = vmatprep.mubr.f32.mxu0 0.0
    %2100 = vmatmul.mubr.f32.gmra.mrb[0].mxu0 %v2023
    %v2101 = vpop.f32.mrb[0].mxu0
    %v2102 = vadd.f32 %v36, %v2101
    %v2103 = vpop.f32.mrb[0].mxu0
    %2104 = vdwg.mxu0
    %v2105 = vsel %vm393, %v2092, -inf
    %2106 = vmax.xlane.f32.xlu0 %v2105
    %v2107 = vpop.xlane.xlu0 %2106
    %v2108 = vsel %vm393, %v2097, -inf
    %2109 = vmax.xlane.f32.xlu0 %v2108
    %v2110 = vpop.xlane.xlu0 %2109
    %v2111 = vsel %vm582, %v2102, -inf
    %2112 = vmax.xlane.f32.xlu0 %v2111
    %v2113 = vpop.xlane.xlu0 %2112
    %v2114 = vsub.f32 %v2092, %v2107
    %v2115 = vsub.f32 %v2097, %v2110
    %v2116 = vsub.f32 %v2102, %v2113
    %v2117 = vmul.f32 %v2114, 1.442695
    %v2118 = vpow.pop %v2117
    %v2119 = vmul.f32 %v2115, 1.442695
    %v2120 = vpow.pop %v2119
    %v2121 = vmul.f32 %v2116, 1.442695
    %v2122 = vpow.pop %v2121
    %v2123 = vsel %vm393, %v2118, 0.0
    %2124 = vadd.xlane.f32.xlu0 %v2123
    %v2125 = vpop.xlane.xlu0 %2124
    %v2126 = vsel %vm393, %v2120, 0.0
    %2127 = vadd.xlane.f32.xlu0 %v2126
    %v2128 = vpop.xlane.xlu0 %2127
    %v2129 = vsel %vm582, %v2122, 0.0
    %2130 = vadd.xlane.f32.xlu0 %v2129
    %v2131 = vpop.xlane.xlu0 %2130
    %v2132 = vrcp.pop %v2125
    %v2133 = vrcp.pop %v2128
    %v2134 = vrcp.pop %v2131
    %v2135 = vmul.f32 %v2118, %v2132
    %v2136 = vmul.f32 %v2120, %v2133
    %v2137 = vmul.f32 %v2122, %v2134
    %v2139 = vsel %vm393, %v2135, 0
    %v2142 = vsel %vm393, %v2136, 0
    %v2145 = vsel %vm393, %v2137, 0
    %v2148 = vsel %vm393, %v1980, 0
    %v2151 = vsel %vm393, %v1981, 0
    %v2154 = vsel %vm393, %v1982, 0
    %v2157 = vsel %vm393, %v1983, 0
    %2159 = vmatprep.subr.mxu0 0.0
    %2160 = vmatpush1.xpose.msra.mxu0 %v2148
    %2161 = vmatprep.subr.mxu0 0.0
    %2162 = vmatpush1.xpose.msra.mxu0 %v2151
    %2163 = vmatprep.subr.mxu0 0.0
    %2164 = vmatpush1.xpose.msra.mxu0 %v2154
    %2165 = vmatprep.subr.mxu0 0.0
    %2166 = vmatpush1.xpose.msra.mxu0 %v2157
    %2167 = vmatprep.subr.mxu0 0.0
    %2168 = vmatpush1.xpose.msra.mxu0 0.0
    %2169 = vmatprep.subr.mxu0 0.0
    %2170 = vmatpush1.xpose.msra.mxu0 0.0
    %2171 = vmatprep.subr.mxu0 0.0
    %2172 = vmatpush1.xpose.msra.mxu0 0.0
    %2173 = vmatprep.subr.mxu0 0.0
    %2174 = vmatpush1.xpose.msra.mxu0 0.0
    %2175 = vmatprep.subr.mxu0 0.0
    %2176 = vmatpush1.xpose.msra.mxu0 0.0
    %2177 = vmatprep.subr.mxu0 0.0
    %2178 = vmatpush1.xpose.msra.mxu0 0.0
    %2179 = vmatprep.subr.mxu0 0.0
    %2180 = vmatpush1.xpose.msra.mxu0 0.0
    %2181 = vmatprep.subr.mxu0 0.0
    %2182 = vmatpush1.xpose.msra.mxu0 0.0
    %2183 = vmatprep.subr.mxu0 0.0
    %2184 = vmatpush1.xpose.msra.mxu0 0.0
    %2185 = vmatprep.subr.mxu0 0.0
    %2186 = vmatpush1.xpose.msra.mxu0 0.0
    %2187 = vmatprep.subr.mxu0 0.0
    %2188 = vmatpush1.xpose.msra.mxu0 0.0
    %2189 = vmatprep.subr.mxu0 0.0
    %2190 = vmatpush1.xpose.msra.mxu0 0.0
    %2191 = vmatprep.subr.mxu0 0.0
    %2192 = vmatpush1.xpose.msra.mxu0 0.0
    %2193 = vmatprep.subr.mxu0 0.0
    %2194 = vmatpush1.xpose.msra.mxu0 0.0
    %2195 = vmatprep.subr.mxu0 0.0
    %2196 = vmatpush1.xpose.msra.mxu0 0.0
    %2197 = vmatprep.subr.mxu0 0.0
    %2198 = vmatpush1.xpose.msra.mxu0 0.0
    %2199 = vmatprep.subr.mxu0 0.0
    %2200 = vmatpush1.xpose.msra.mxu0 0.0
    %2201 = vmatprep.subr.mxu0 0.0
    %2202 = vmatpush1.xpose.msra.mxu0 0.0
    %2203 = vmatprep.subr.mxu0 0.0
    %2204 = vmatpush1.xpose.msra.mxu0 0.0
    %2205 = vmatprep.subr.mxu0 0.0
    %2206 = vmatpush1.xpose.msra.mxu0 0.0
    %2207 = vmatprep.subr.mxu0 0.0
    %2208 = vmatpush1.xpose.msra.mxu0 0.0
    %2209 = vmatprep.subr.mxu0 0.0
    %2210 = vmatpush1.xpose.msra.mxu0 0.0
    %2211 = vmatprep.subr.mxu0 0.0
    %2212 = vmatpush1.xpose.msra.mxu0 0.0
    %2213 = vmatprep.subr.mxu0 0.0
    %2214 = vmatpush1.xpose.msra.mxu0 0.0
    %2215 = vmatprep.subr.mxu0 0.0
    %2216 = vmatpush1.xpose.msra.mxu0 0.0
    %2217 = vmatprep.subr.mxu0 0.0
    %2218 = vmatpush1.xpose.msra.mxu0 0.0
    %2219 = vmatprep.subr.mxu0 0.0
    %2220 = vmatpush1.xpose.msra.mxu0 0.0
    %2221 = vmatprep.subr.mxu0 0.0
    %2222 = vmatpush1.xpose.msra.mxu0 0.0
    %2223 = vmatprep.mubr.f32.mxu0 0.0
    %2224 = vmatmul.mubr.f32.gmra.mrb[0].mxu0 %v2139
    %v2225 = vpop.f32.mrb[0].mxu0
    %v2226 = vadd.f32 0.0, %v2225
    %v2227 = vpop.f32.mrb[0].mxu0
    %2228 = vmatprep.mubr.f32.mxu0 0.0
    %2229 = vmatmul.mubr.f32.gmra.mrb[0].mxu0 %v2142
    %v2230 = vpop.f32.mrb[0].mxu0
    %v2231 = vadd.f32 0.0, %v2230
    %v2232 = vpop.f32.mrb[0].mxu0
    %2233 = vmatprep.mubr.f32.mxu0 0.0
    %2234 = vmatmul.mubr.f32.gmra.mrb[0].mxu0 %v2145
    %v2235 = vpop.f32.mrb[0].mxu0
    %v2236 = vadd.f32 0.0, %v2235
    %v2237 = vpop.f32.mrb[0].mxu0
    %2238 = vdwg.mxu0
    %s2239 = scalar_lea.vmem %s2, 24
    %2240 = vst.msk [vmem:[%s2239] sm:$0xff] %vm486, %v2226
    %2241 = vst.msk [vmem:[%s2239 + $0x8] sm:$0xff] %vm486, %v2231
    %2242 = vst.msk [vmem:[%s2239 + $0x10] sm:$0x1] %vm713, %v2236
    %v2243 = vld [vmem:[#allocation2 + $0x20] sm:$0xff]
    %v2244 = vld [vmem:[#allocation2 + $0x28] sm:$0xff]
    %v2245 = vld [vmem:[#allocation2 + $0x30] sm:$0xff]
    %v2246 = vld [vmem:[#allocation2 + $0x38] sm:$0xff]
    %v2247 = vld [vmem:[#allocation2 + $0xa0] sm:$0xff]
    %v2248 = vld [vmem:[#allocation2 + $0xa8] sm:$0xff]
    %v2249 = vld [vmem:[#allocation2 + $0xb0] sm:$0xff]
    %v2250 = vld [vmem:[#allocation2 + $0xb8] sm:$0xff]
    %v2251 = vld [vmem:[#allocation2 + $0x120] sm:$0xff]
    %v2252 = vld [vmem:[#allocation2 + $0x128] sm:$0xff]
    %v2253 = vld [vmem:[#allocation2 + $0x130] sm:$0xff]
    %v2254 = vld [vmem:[#allocation2 + $0x138] sm:$0xff]
    %2255 = vxpose.xlu0.b32.start [1/16] %v2243, 128
    %2256 = vxpose.xlu0.b32.cont [2/16] %v2244, 128
    %2257 = vxpose.xlu0.b32.cont [3/16] %v2245, 128
    %2258 = vxpose.xlu0.b32.cont [4/16] %v2246, 128
    %2259 = vxpose.xlu0.b32.cont [5/16] 0.0, 128
    %2260 = vxpose.xlu0.b32.cont [6/16] 0.0, 128
    %2261 = vxpose.xlu0.b32.cont [7/16] 0.0, 128
    %2262 = vxpose.xlu0.b32.cont [8/16] 0.0, 128
    %2263 = vxpose.xlu0.b32.cont [9/16] 0.0, 128
    %2264 = vxpose.xlu0.b32.cont [10/16] 0.0, 128
    %2265 = vxpose.xlu0.b32.cont [11/16] 0.0, 128
    %2266 = vxpose.xlu0.b32.cont [12/16] 0.0, 128
    %2267 = vxpose.xlu0.b32.cont [13/16] 0.0, 128
    %2268 = vxpose.xlu0.b32.cont [14/16] 0.0, 128
    %2269 = vxpose.xlu0.b32.cont [15/16] 0.0, 128
    %2270 = vxpose.xlu0.b32.end [16/16] 0.0, 128
    %v2271 = vpop.trf.xlu0
    %v2272 = vpop.trf.xlu0
    %v2273 = vpop.trf.xlu0
    %v2274 = vpop.trf.xlu0
    %v2275 = vpop.trf.xlu0
    %v2276 = vpop.trf.xlu0
    %v2277 = vpop.trf.xlu0
    %v2278 = vpop.trf.xlu0
    %v2279 = vpop.trf.xlu0
    %v2280 = vpop.trf.xlu0
    %v2281 = vpop.trf.xlu0
    %v2282 = vpop.trf.xlu0
    %v2283 = vpop.trf.xlu0
    %v2284 = vpop.trf.xlu0
    %v2285 = vpop.trf.xlu0
    %v2286 = vpop.trf.xlu0
    %v2288 = vsel %vm486, %v2271, 0
    %v2291 = vsel %vm486, %v2272, 0
    %v2294 = vsel %vm486, %v2273, 0
    %2296 = vmatprep.subr.mxu0 0.0
    %2297 = vmatpush1.msra.mxu0 %v2247
    %2298 = vmatprep.subr.mxu0 0.0
    %2299 = vmatpush1.msra.mxu0 %v2248
    %2300 = vmatprep.subr.mxu0 0.0
    %2301 = vmatpush1.msra.mxu0 %v2249
    %2302 = vmatprep.subr.mxu0 0.0
    %2303 = vmatpush1.msra.mxu0 %v2250
    %2304 = vmatprep.subr.mxu0 0.0
    %2305 = vmatpush1.msra.mxu0 0.0
    %2306 = vmatprep.subr.mxu0 0.0
    %2307 = vmatpush1.msra.mxu0 0.0
    %2308 = vmatprep.subr.mxu0 0.0
    %2309 = vmatpush1.msra.mxu0 0.0
    %2310 = vmatprep.subr.mxu0 0.0
    %2311 = vmatpush1.msra.mxu0 0.0
    %2312 = vmatprep.subr.mxu0 0.0
    %2313 = vmatpush1.msra.mxu0 0.0
    %2314 = vmatprep.subr.mxu0 0.0
    %2315 = vmatpush1.msra.mxu0 0.0
    %2316 = vmatprep.subr.mxu0 0.0
    %2317 = vmatpush1.msra.mxu0 0.0
    %2318 = vmatprep.subr.mxu0 0.0
    %2319 = vmatpush1.msra.mxu0 0.0
    %2320 = vmatprep.subr.mxu0 0.0
    %2321 = vmatpush1.msra.mxu0 0.0
    %2322 = vmatprep.subr.mxu0 0.0
    %2323 = vmatpush1.msra.mxu0 0.0
    %2324 = vmatprep.subr.mxu0 0.0
    %2325 = vmatpush1.msra.mxu0 0.0
    %2326 = vmatprep.subr.mxu0 0.0
    %2327 = vmatpush1.msra.mxu0 0.0
    %2328 = vmatprep.subr.mxu0 0.0
    %2329 = vmatpush1.msra.mxu0 0.0
    %2330 = vmatprep.subr.mxu0 0.0
    %2331 = vmatpush1.msra.mxu0 0.0
    %2332 = vmatprep.subr.mxu0 0.0
    %2333 = vmatpush1.msra.mxu0 0.0
    %2334 = vmatprep.subr.mxu0 0.0
    %2335 = vmatpush1.msra.mxu0 0.0
    %2336 = vmatprep.subr.mxu0 0.0
    %2337 = vmatpush1.msra.mxu0 0.0
    %2338 = vmatprep.subr.mxu0 0.0
    %2339 = vmatpush1.msra.mxu0 0.0
    %2340 = vmatprep.subr.mxu0 0.0
    %2341 = vmatpush1.msra.mxu0 0.0
    %2342 = vmatprep.subr.mxu0 0.0
    %2343 = vmatpush1.msra.mxu0 0.0
    %2344 = vmatprep.subr.mxu0 0.0
    %2345 = vmatpush1.msra.mxu0 0.0
    %2346 = vmatprep.subr.mxu0 0.0
    %2347 = vmatpush1.msra.mxu0 0.0
    %2348 = vmatprep.subr.mxu0 0.0
    %2349 = vmatpush1.msra.mxu0 0.0
    %2350 = vmatprep.subr.mxu0 0.0
    %2351 = vmatpush1.msra.mxu0 0.0
    %2352 = vmatprep.subr.mxu0 0.0
    %2353 = vmatpush1.msra.mxu0 0.0
    %2354 = vmatprep.subr.mxu0 0.0
    %2355 = vmatpush1.msra.mxu0 0.0
    %2356 = vmatprep.subr.mxu0 0.0
    %2357 = vmatpush1.msra.mxu0 0.0
    %2358 = vmatprep.subr.mxu0 0.0
    %2359 = vmatpush1.msra.mxu0 0.0
    %2360 = vmatprep.mubr.f32.mxu0 0.0
    %2361 = vmatmul.mubr.f32.gmra.mrb[0].mxu0 %v2288
    %v2362 = vpop.f32.mrb[0].mxu0
    %v2363 = vadd.f32 %v34, %v2362
    %v2364 = vpop.f32.mrb[0].mxu0
    %2365 = vmatprep.mubr.f32.mxu0 0.0
    %2366 = vmatmul.mubr.f32.gmra.mrb[0].mxu0 %v2291
    %v2367 = vpop.f32.mrb[0].mxu0
    %v2368 = vadd.f32 %v35, %v2367
    %v2369 = vpop.f32.mrb[0].mxu0
    %2370 = vmatprep.mubr.f32.mxu0 0.0
    %2371 = vmatmul.mubr.f32.gmra.mrb[0].mxu0 %v2294
    %v2372 = vpop.f32.mrb[0].mxu0
    %v2373 = vadd.f32 %v36, %v2372
    %v2374 = vpop.f32.mrb[0].mxu0
    %2375 = vdwg.mxu0
    %v2376 = vsel %vm393, %v2363, -inf
    %2377 = vmax.xlane.f32.xlu0 %v2376
    %v2378 = vpop.xlane.xlu0 %2377
    %v2379 = vsel %vm393, %v2368, -inf
    %2380 = vmax.xlane.f32.xlu0 %v2379
    %v2381 = vpop.xlane.xlu0 %2380
    %v2382 = vsel %vm582, %v2373, -inf
    %2383 = vmax.xlane.f32.xlu0 %v2382
    %v2384 = vpop.xlane.xlu0 %2383
    %v2385 = vsub.f32 %v2363, %v2378
    %v2386 = vsub.f32 %v2368, %v2381
    %v2387 = vsub.f32 %v2373, %v2384
    %v2388 = vmul.f32 %v2385, 1.442695
    %v2389 = vpow.pop %v2388
    %v2390 = vmul.f32 %v2386, 1.442695
    %v2391 = vpow.pop %v2390
    %v2392 = vmul.f32 %v2387, 1.442695
    %v2393 = vpow.pop %v2392
    %v2394 = vsel %vm393, %v2389, 0.0
    %2395 = vadd.xlane.f32.xlu0 %v2394
    %v2396 = vpop.xlane.xlu0 %2395
    %v2397 = vsel %vm393, %v2391, 0.0
    %2398 = vadd.xlane.f32.xlu0 %v2397
    %v2399 = vpop.xlane.xlu0 %2398
    %v2400 = vsel %vm582, %v2393, 0.0
    %2401 = vadd.xlane.f32.xlu0 %v2400
    %v2402 = vpop.xlane.xlu0 %2401
    %v2403 = vrcp.pop %v2396
    %v2404 = vrcp.pop %v2399
    %v2405 = vrcp.pop %v2402
    %v2406 = vmul.f32 %v2389, %v2403
    %v2407 = vmul.f32 %v2391, %v2404
    %v2408 = vmul.f32 %v2393, %v2405
    %v2410 = vsel %vm393, %v2406, 0
    %v2413 = vsel %vm393, %v2407, 0
    %v2416 = vsel %vm393, %v2408, 0
    %v2419 = vsel %vm393, %v2251, 0
    %v2422 = vsel %vm393, %v2252, 0
    %v2425 = vsel %vm393, %v2253, 0
    %v2428 = vsel %vm393, %v2254, 0
    %2430 = vmatprep.subr.mxu0 0.0
    %2431 = vmatpush1.xpose.msra.mxu0 %v2419
    %2432 = vmatprep.subr.mxu0 0.0
    %2433 = vmatpush1.xpose.msra.mxu0 %v2422
    %2434 = vmatprep.subr.mxu0 0.0
    %2435 = vmatpush1.xpose.msra.mxu0 %v2425
    %2436 = vmatprep.subr.mxu0 0.0
    %2437 = vmatpush1.xpose.msra.mxu0 %v2428
    %2438 = vmatprep.subr.mxu0 0.0
    %2439 = vmatpush1.xpose.msra.mxu0 0.0
    %2440 = vmatprep.subr.mxu0 0.0
    %2441 = vmatpush1.xpose.msra.mxu0 0.0
    %2442 = vmatprep.subr.mxu0 0.0
    %2443 = vmatpush1.xpose.msra.mxu0 0.0
    %2444 = vmatprep.subr.mxu0 0.0
    %2445 = vmatpush1.xpose.msra.mxu0 0.0
    %2446 = vmatprep.subr.mxu0 0.0
    %2447 = vmatpush1.xpose.msra.mxu0 0.0
    %2448 = vmatprep.subr.mxu0 0.0
    %2449 = vmatpush1.xpose.msra.mxu0 0.0
    %2450 = vmatprep.subr.mxu0 0.0
    %2451 = vmatpush1.xpose.msra.mxu0 0.0
    %2452 = vmatprep.subr.mxu0 0.0
    %2453 = vmatpush1.xpose.msra.mxu0 0.0
    %2454 = vmatprep.subr.mxu0 0.0
    %2455 = vmatpush1.xpose.msra.mxu0 0.0
    %2456 = vmatprep.subr.mxu0 0.0
    %2457 = vmatpush1.xpose.msra.mxu0 0.0
    %2458 = vmatprep.subr.mxu0 0.0
    %2459 = vmatpush1.xpose.msra.mxu0 0.0
    %2460 = vmatprep.subr.mxu0 0.0
    %2461 = vmatpush1.xpose.msra.mxu0 0.0
    %2462 = vmatprep.subr.mxu0 0.0
    %2463 = vmatpush1.xpose.msra.mxu0 0.0
    %2464 = vmatprep.subr.mxu0 0.0
    %2465 = vmatpush1.xpose.msra.mxu0 0.0
    %2466 = vmatprep.subr.mxu0 0.0
    %2467 = vmatpush1.xpose.msra.mxu0 0.0
    %2468 = vmatprep.subr.mxu0 0.0
    %2469 = vmatpush1.xpose.msra.mxu0 0.0
    %2470 = vmatprep.subr.mxu0 0.0
    %2471 = vmatpush1.xpose.msra.mxu0 0.0
    %2472 = vmatprep.subr.mxu0 0.0
    %2473 = vmatpush1.xpose.msra.mxu0 0.0
    %2474 = vmatprep.subr.mxu0 0.0
    %2475 = vmatpush1.xpose.msra.mxu0 0.0
    %2476 = vmatprep.subr.mxu0 0.0
    %2477 = vmatpush1.xpose.msra.mxu0 0.0
    %2478 = vmatprep.subr.mxu0 0.0
    %2479 = vmatpush1.xpose.msra.mxu0 0.0
    %2480 = vmatprep.subr.mxu0 0.0
    %2481 = vmatpush1.xpose.msra.mxu0 0.0
    %2482 = vmatprep.subr.mxu0 0.0
    %2483 = vmatpush1.xpose.msra.mxu0 0.0
    %2484 = vmatprep.subr.mxu0 0.0
    %2485 = vmatpush1.xpose.msra.mxu0 0.0
    %2486 = vmatprep.subr.mxu0 0.0
    %2487 = vmatpush1.xpose.msra.mxu0 0.0
    %2488 = vmatprep.subr.mxu0 0.0
    %2489 = vmatpush1.xpose.msra.mxu0 0.0
    %2490 = vmatprep.subr.mxu0 0.0
    %2491 = vmatpush1.xpose.msra.mxu0 0.0
    %2492 = vmatprep.subr.mxu0 0.0
    %2493 = vmatpush1.xpose.msra.mxu0 0.0
    %2494 = vmatprep.mubr.f32.mxu0 0.0
    %2495 = vmatmul.mubr.f32.gmra.mrb[0].mxu0 %v2410
    %v2496 = vpop.f32.mrb[0].mxu0
    %v2497 = vadd.f32 0.0, %v2496
    %v2498 = vpop.f32.mrb[0].mxu0
    %2499 = vmatprep.mubr.f32.mxu0 0.0
    %2500 = vmatmul.mubr.f32.gmra.mrb[0].mxu0 %v2413
    %v2501 = vpop.f32.mrb[0].mxu0
    %v2502 = vadd.f32 0.0, %v2501
    %v2503 = vpop.f32.mrb[0].mxu0
    %2504 = vmatprep.mubr.f32.mxu0 0.0
    %2505 = vmatmul.mubr.f32.gmra.mrb[0].mxu0 %v2416
    %v2506 = vpop.f32.mrb[0].mxu0
    %v2507 = vadd.f32 0.0, %v2506
    %v2508 = vpop.f32.mrb[0].mxu0
    %2509 = vdwg.mxu0
    %2513 = vrot.lane.b32.xlu0 %v2497, 32
    %v2514 = vpop.permute.xlu0 %2513
    %2515 = vrot.lane.b32.xlu0 %v2502, 32
    %v2516 = vpop.permute.xlu0 %2515
    %2517 = vrot.lane.b32.xlu0 %v2507, 32
    %v2518 = vpop.permute.xlu0 %2517
    %2522 = vst.msk [vmem:[%s2239] sm:$0xff] %vm994, %v2514
    %2523 = vst.msk [vmem:[%s2239 + $0x8] sm:$0xff] %vm994, %v2516
    %2524 = vst.msk [vmem:[%s2239 + $0x10] sm:$0x1] %vm997, %v2518
    %v2525 = vld [vmem:[#allocation2 + $0x40] sm:$0xff]
    %v2526 = vld [vmem:[#allocation2 + $0x48] sm:$0xff]
    %v2527 = vld [vmem:[#allocation2 + $0x50] sm:$0xff]
    %v2528 = vld [vmem:[#allocation2 + $0x58] sm:$0xff]
    %v2529 = vld [vmem:[#allocation2 + $0xc0] sm:$0xff]
    %v2530 = vld [vmem:[#allocation2 + $0xc8] sm:$0xff]
    %v2531 = vld [vmem:[#allocation2 + $0xd0] sm:$0xff]
    %v2532 = vld [vmem:[#allocation2 + $0xd8] sm:$0xff]
    %v2533 = vld [vmem:[#allocation2 + $0x140] sm:$0xff]
    %v2534 = vld [vmem:[#allocation2 + $0x148] sm:$0xff]
    %v2535 = vld [vmem:[#allocation2 + $0x150] sm:$0xff]
    %v2536 = vld [vmem:[#allocation2 + $0x158] sm:$0xff]
    %2537 = vxpose.xlu0.b32.start [1/16] %v2525, 128
    %2538 = vxpose.xlu0.b32.cont [2/16] %v2526, 128
    %2539 = vxpose.xlu0.b32.cont [3/16] %v2527, 128
    %2540 = vxpose.xlu0.b32.cont [4/16] %v2528, 128
    %2541 = vxpose.xlu0.b32.cont [5/16] 0.0, 128
    %2542 = vxpose.xlu0.b32.cont [6/16] 0.0, 128
    %2543 = vxpose.xlu0.b32.cont [7/16] 0.0, 128
    %2544 = vxpose.xlu0.b32.cont [8/16] 0.0, 128
    %2545 = vxpose.xlu0.b32.cont [9/16] 0.0, 128
    %2546 = vxpose.xlu0.b32.cont [10/16] 0.0, 128
    %2547 = vxpose.xlu0.b32.cont [11/16] 0.0, 128
    %2548 = vxpose.xlu0.b32.cont [12/16] 0.0, 128
    %2549 = vxpose.xlu0.b32.cont [13/16] 0.0, 128
    %2550 = vxpose.xlu0.b32.cont [14/16] 0.0, 128
    %2551 = vxpose.xlu0.b32.cont [15/16] 0.0, 128
    %2552 = vxpose.xlu0.b32.end [16/16] 0.0, 128
    %v2553 = vpop.trf.xlu0
    %v2554 = vpop.trf.xlu0
    %v2555 = vpop.trf.xlu0
    %v2556 = vpop.trf.xlu0
    %v2557 = vpop.trf.xlu0
    %v2558 = vpop.trf.xlu0
    %v2559 = vpop.trf.xlu0
    %v2560 = vpop.trf.xlu0
    %v2561 = vpop.trf.xlu0
    %v2562 = vpop.trf.xlu0
    %v2563 = vpop.trf.xlu0
    %v2564 = vpop.trf.xlu0
    %v2565 = vpop.trf.xlu0
    %v2566 = vpop.trf.xlu0
    %v2567 = vpop.trf.xlu0
    %v2568 = vpop.trf.xlu0
    %v2570 = vsel %vm486, %v2553, 0
    %v2573 = vsel %vm486, %v2554, 0
    %v2576 = vsel %vm486, %v2555, 0
    %2578 = vmatprep.subr.mxu0 0.0
    %2579 = vmatpush1.msra.mxu0 %v2529
    %2580 = vmatprep.subr.mxu0 0.0
    %2581 = vmatpush1.msra.mxu0 %v2530
    %2582 = vmatprep.subr.mxu0 0.0
    %2583 = vmatpush1.msra.mxu0 %v2531
    %2584 = vmatprep.subr.mxu0 0.0
    %2585 = vmatpush1.msra.mxu0 %v2532
    %2586 = vmatprep.subr.mxu0 0.0
    %2587 = vmatpush1.msra.mxu0 0.0
    %2588 = vmatprep.subr.mxu0 0.0
    %2589 = vmatpush1.msra.mxu0 0.0
    %2590 = vmatprep.subr.mxu0 0.0
    %2591 = vmatpush1.msra.mxu0 0.0
    %2592 = vmatprep.subr.mxu0 0.0
    %2593 = vmatpush1.msra.mxu0 0.0
    %2594 = vmatprep.subr.mxu0 0.0
    %2595 = vmatpush1.msra.mxu0 0.0
    %2596 = vmatprep.subr.mxu0 0.0
    %2597 = vmatpush1.msra.mxu0 0.0
    %2598 = vmatprep.subr.mxu0 0.0
    %2599 = vmatpush1.msra.mxu0 0.0
    %2600 = vmatprep.subr.mxu0 0.0
    %2601 = vmatpush1.msra.mxu0 0.0
    %2602 = vmatprep.subr.mxu0 0.0
    %2603 = vmatpush1.msra.mxu0 0.0
    %2604 = vmatprep.subr.mxu0 0.0
    %2605 = vmatpush1.msra.mxu0 0.0
    %2606 = vmatprep.subr.mxu0 0.0
    %2607 = vmatpush1.msra.mxu0 0.0
    %2608 = vmatprep.subr.mxu0 0.0
    %2609 = vmatpush1.msra.mxu0 0.0
    %2610 = vmatprep.subr.mxu0 0.0
    %2611 = vmatpush1.msra.mxu0 0.0
    %2612 = vmatprep.subr.mxu0 0.0
    %2613 = vmatpush1.msra.mxu0 0.0
    %2614 = vmatprep.subr.mxu0 0.0
    %2615 = vmatpush1.msra.mxu0 0.0
    %2616 = vmatprep.subr.mxu0 0.0
    %2617 = vmatpush1.msra.mxu0 0.0
    %2618 = vmatprep.subr.mxu0 0.0
    %2619 = vmatpush1.msra.mxu0 0.0
    %2620 = vmatprep.subr.mxu0 0.0
    %2621 = vmatpush1.msra.mxu0 0.0
    %2622 = vmatprep.subr.mxu0 0.0
    %2623 = vmatpush1.msra.mxu0 0.0
    %2624 = vmatprep.subr.mxu0 0.0
    %2625 = vmatpush1.msra.mxu0 0.0
    %2626 = vmatprep.subr.mxu0 0.0
    %2627 = vmatpush1.msra.mxu0 0.0
    %2628 = vmatprep.subr.mxu0 0.0
    %2629 = vmatpush1.msra.mxu0 0.0
    %2630 = vmatprep.subr.mxu0 0.0
    %2631 = vmatpush1.msra.mxu0 0.0
    %2632 = vmatprep.subr.mxu0 0.0
    %2633 = vmatpush1.msra.mxu0 0.0
    %2634 = vmatprep.subr.mxu0 0.0
    %2635 = vmatpush1.msra.mxu0 0.0
    %2636 = vmatprep.subr.mxu0 0.0
    %2637 = vmatpush1.msra.mxu0 0.0
    %2638 = vmatprep.subr.mxu0 0.0
    %2639 = vmatpush1.msra.mxu0 0.0
    %2640 = vmatprep.subr.mxu0 0.0
    %2641 = vmatpush1.msra.mxu0 0.0
    %2642 = vmatprep.mubr.f32.mxu0 0.0
    %2643 = vmatmul.mubr.f32.gmra.mrb[0].mxu0 %v2570
    %v2644 = vpop.f32.mrb[0].mxu0
    %v2645 = vadd.f32 %v34, %v2644
    %v2646 = vpop.f32.mrb[0].mxu0
    %2647 = vmatprep.mubr.f32.mxu0 0.0
    %2648 = vmatmul.mubr.f32.gmra.mrb[0].mxu0 %v2573
    %v2649 = vpop.f32.mrb[0].mxu0
    %v2650 = vadd.f32 %v35, %v2649
    %v2651 = vpop.f32.mrb[0].mxu0
    %2652 = vmatprep.mubr.f32.mxu0 0.0
    %2653 = vmatmul.mubr.f32.gmra.mrb[0].mxu0 %v2576
    %v2654 = vpop.f32.mrb[0].mxu0
    %v2655 = vadd.f32 %v36, %v2654
    %v2656 = vpop.f32.mrb[0].mxu0
    %2657 = vdwg.mxu0
    %v2658 = vsel %vm393, %v2645, -inf
    %2659 = vmax.xlane.f32.xlu0 %v2658
    %v2660 = vpop.xlane.xlu0 %2659
    %v2661 = vsel %vm393, %v2650, -inf
    %2662 = vmax.xlane.f32.xlu0 %v2661
    %v2663 = vpop.xlane.xlu0 %2662
    %v2664 = vsel %vm582, %v2655, -inf
    %2665 = vmax.xlane.f32.xlu0 %v2664
    %v2666 = vpop.xlane.xlu0 %2665
    %v2667 = vsub.f32 %v2645, %v2660
    %v2668 = vsub.f32 %v2650, %v2663
    %v2669 = vsub.f32 %v2655, %v2666
    %v2670 = vmul.f32 %v2667, 1.442695
    %v2671 = vpow.pop %v2670
    %v2672 = vmul.f32 %v2668, 1.442695
    %v2673 = vpow.pop %v2672
    %v2674 = vmul.f32 %v2669, 1.442695
    %v2675 = vpow.pop %v2674
    %v2676 = vsel %vm393, %v2671, 0.0
    %2677 = vadd.xlane.f32.xlu0 %v2676
    %v2678 = vpop.xlane.xlu0 %2677
    %v2679 = vsel %vm393, %v2673, 0.0
    %2680 = vadd.xlane.f32.xlu0 %v2679
    %v2681 = vpop.xlane.xlu0 %2680
    %v2682 = vsel %vm582, %v2675, 0.0
    %2683 = vadd.xlane.f32.xlu0 %v2682
    %v2684 = vpop.xlane.xlu0 %2683
    %v2685 = vrcp.pop %v2678
    %v2686 = vrcp.pop %v2681
    %v2687 = vrcp.pop %v2684
    %v2688 = vmul.f32 %v2671, %v2685
    %v2689 = vmul.f32 %v2673, %v2686
    %v2690 = vmul.f32 %v2675, %v2687
    %v2692 = vsel %vm393, %v2688, 0
    %v2695 = vsel %vm393, %v2689, 0
    %v2698 = vsel %vm393, %v2690, 0
    %v2701 = vsel %vm393, %v2533, 0
    %v2704 = vsel %vm393, %v2534, 0
    %v2707 = vsel %vm393, %v2535, 0
    %v2710 = vsel %vm393, %v2536, 0
    %2712 = vmatprep.subr.mxu0 0.0
    %2713 = vmatpush1.xpose.msra.mxu0 %v2701
    %2714 = vmatprep.subr.mxu0 0.0
    %2715 = vmatpush1.xpose.msra.mxu0 %v2704
    %2716 = vmatprep.subr.mxu0 0.0
    %2717 = vmatpush1.xpose.msra.mxu0 %v2707
    %2718 = vmatprep.subr.mxu0 0.0
    %2719 = vmatpush1.xpose.msra.mxu0 %v2710
    %2720 = vmatprep.subr.mxu0 0.0
    %2721 = vmatpush1.xpose.msra.mxu0 0.0
    %2722 = vmatprep.subr.mxu0 0.0
    %2723 = vmatpush1.xpose.msra.mxu0 0.0
    %2724 = vmatprep.subr.mxu0 0.0
    %2725 = vmatpush1.xpose.msra.mxu0 0.0
    %2726 = vmatprep.subr.mxu0 0.0
    %2727 = vmatpush1.xpose.msra.mxu0 0.0
    %2728 = vmatprep.subr.mxu0 0.0
    %2729 = vmatpush1.xpose.msra.mxu0 0.0
    %2730 = vmatprep.subr.mxu0 0.0
    %2731 = vmatpush1.xpose.msra.mxu0 0.0
    %2732 = vmatprep.subr.mxu0 0.0
    %2733 = vmatpush1.xpose.msra.mxu0 0.0
    %2734 = vmatprep.subr.mxu0 0.0
    %2735 = vmatpush1.xpose.msra.mxu0 0.0
    %2736 = vmatprep.subr.mxu0 0.0
    %2737 = vmatpush1.xpose.msra.mxu0 0.0
    %2738 = vmatprep.subr.mxu0 0.0
    %2739 = vmatpush1.xpose.msra.mxu0 0.0
    %2740 = vmatprep.subr.mxu0 0.0
    %2741 = vmatpush1.xpose.msra.mxu0 0.0
    %2742 = vmatprep.subr.mxu0 0.0
    %2743 = vmatpush1.xpose.msra.mxu0 0.0
    %2744 = vmatprep.subr.mxu0 0.0
    %2745 = vmatpush1.xpose.msra.mxu0 0.0
    %2746 = vmatprep.subr.mxu0 0.0
    %2747 = vmatpush1.xpose.msra.mxu0 0.0
    %2748 = vmatprep.subr.mxu0 0.0
    %2749 = vmatpush1.xpose.msra.mxu0 0.0
    %2750 = vmatprep.subr.mxu0 0.0
    %2751 = vmatpush1.xpose.msra.mxu0 0.0
    %2752 = vmatprep.subr.mxu0 0.0
    %2753 = vmatpush1.xpose.msra.mxu0 0.0
    %2754 = vmatprep.subr.mxu0 0.0
    %2755 = vmatpush1.xpose.msra.mxu0 0.0
    %2756 = vmatprep.subr.mxu0 0.0
    %2757 = vmatpush1.xpose.msra.mxu0 0.0
    %2758 = vmatprep.subr.mxu0 0.0
    %2759 = vmatpush1.xpose.msra.mxu0 0.0
    %2760 = vmatprep.subr.mxu0 0.0
    %2761 = vmatpush1.xpose.msra.mxu0 0.0
    %2762 = vmatprep.subr.mxu0 0.0
    %2763 = vmatpush1.xpose.msra.mxu0 0.0
    %2764 = vmatprep.subr.mxu0 0.0
    %2765 = vmatpush1.xpose.msra.mxu0 0.0
    %2766 = vmatprep.subr.mxu0 0.0
    %2767 = vmatpush1.xpose.msra.mxu0 0.0
    %2768 = vmatprep.subr.mxu0 0.0
    %2769 = vmatpush1.xpose.msra.mxu0 0.0
    %2770 = vmatprep.subr.mxu0 0.0
    %2771 = vmatpush1.xpose.msra.mxu0 0.0
    %2772 = vmatprep.subr.mxu0 0.0
    %2773 = vmatpush1.xpose.msra.mxu0 0.0
    %2774 = vmatprep.subr.mxu0 0.0
    %2775 = vmatpush1.xpose.msra.mxu0 0.0
    %2776 = vmatprep.mubr.f32.mxu0 0.0
    %2777 = vmatmul.mubr.f32.gmra.mrb[0].mxu0 %v2692
    %v2778 = vpop.f32.mrb[0].mxu0
    %v2779 = vadd.f32 0.0, %v2778
    %v2780 = vpop.f32.mrb[0].mxu0
    %2781 = vmatprep.mubr.f32.mxu0 0.0
    %2782 = vmatmul.mubr.f32.gmra.mrb[0].mxu0 %v2695
    %v2783 = vpop.f32.mrb[0].mxu0
    %v2784 = vadd.f32 0.0, %v2783
    %v2785 = vpop.f32.mrb[0].mxu0
    %2786 = vmatprep.mubr.f32.mxu0 0.0
    %2787 = vmatmul.mubr.f32.gmra.mrb[0].mxu0 %v2698
    %v2788 = vpop.f32.mrb[0].mxu0
    %v2789 = vadd.f32 0.0, %v2788
    %v2790 = vpop.f32.mrb[0].mxu0
    %2791 = vdwg.mxu0
    %2795 = vrot.lane.b32.xlu0 %v2779, 64
    %v2796 = vpop.permute.xlu0 %2795
    %2797 = vrot.lane.b32.xlu0 %v2784, 64
    %v2798 = vpop.permute.xlu0 %2797
    %2799 = vrot.lane.b32.xlu0 %v2789, 64
    %v2800 = vpop.permute.xlu0 %2799
    %2804 = vst.msk [vmem:[%s2239] sm:$0xff] %vm1278, %v2796
    %2805 = vst.msk [vmem:[%s2239 + $0x8] sm:$0xff] %vm1278, %v2798
    %2806 = vst.msk [vmem:[%s2239 + $0x10] sm:$0x1] %vm1281, %v2800
    %v2807 = vld [vmem:[#allocation2 + $0x60] sm:$0xff]
    %v2808 = vld [vmem:[#allocation2 + $0x68] sm:$0xff]
    %v2809 = vld [vmem:[#allocation2 + $0x70] sm:$0xff]
    %v2810 = vld [vmem:[#allocation2 + $0x78] sm:$0xff]
    %v2811 = vld [vmem:[#allocation2 + $0xe0] sm:$0xff]
    %v2812 = vld [vmem:[#allocation2 + $0xe8] sm:$0xff]
    %v2813 = vld [vmem:[#allocation2 + $0xf0] sm:$0xff]
    %v2814 = vld [vmem:[#allocation2 + $0xf8] sm:$0xff]
    %v2815 = vld [vmem:[#allocation2 + $0x160] sm:$0xff]
    %v2816 = vld [vmem:[#allocation2 + $0x168] sm:$0xff]
    %v2817 = vld [vmem:[#allocation2 + $0x170] sm:$0xff]
    %v2818 = vld [vmem:[#allocation2 + $0x178] sm:$0xff]
    %2819 = vxpose.xlu0.b32.start [1/16] %v2807, 128
    %2820 = vxpose.xlu0.b32.cont [2/16] %v2808, 128
    %2821 = vxpose.xlu0.b32.cont [3/16] %v2809, 128
    %2822 = vxpose.xlu0.b32.cont [4/16] %v2810, 128
    %2823 = vxpose.xlu0.b32.cont [5/16] 0.0, 128
    %2824 = vxpose.xlu0.b32.cont [6/16] 0.0, 128
    %2825 = vxpose.xlu0.b32.cont [7/16] 0.0, 128
    %2826 = vxpose.xlu0.b32.cont [8/16] 0.0, 128
    %2827 = vxpose.xlu0.b32.cont [9/16] 0.0, 128
    %2828 = vxpose.xlu0.b32.cont [10/16] 0.0, 128
    %2829 = vxpose.xlu0.b32.cont [11/16] 0.0, 128
    %2830 = vxpose.xlu0.b32.cont [12/16] 0.0, 128
    %2831 = vxpose.xlu0.b32.cont [13/16] 0.0, 128
    %2832 = vxpose.xlu0.b32.cont [14/16] 0.0, 128
    %2833 = vxpose.xlu0.b32.cont [15/16] 0.0, 128
    %2834 = vxpose.xlu0.b32.end [16/16] 0.0, 128
    %v2835 = vpop.trf.xlu0
    %v2836 = vpop.trf.xlu0
    %v2837 = vpop.trf.xlu0
    %v2838 = vpop.trf.xlu0
    %v2839 = vpop.trf.xlu0
    %v2840 = vpop.trf.xlu0
    %v2841 = vpop.trf.xlu0
    %v2842 = vpop.trf.xlu0
    %v2843 = vpop.trf.xlu0
    %v2844 = vpop.trf.xlu0
    %v2845 = vpop.trf.xlu0
    %v2846 = vpop.trf.xlu0
    %v2847 = vpop.trf.xlu0
    %v2848 = vpop.trf.xlu0
    %v2849 = vpop.trf.xlu0
    %v2850 = vpop.trf.xlu0
    %v2852 = vsel %vm486, %v2835, 0
    %v2855 = vsel %vm486, %v2836, 0
    %v2858 = vsel %vm486, %v2837, 0
    %2860 = vmatprep.subr.mxu0 0.0
    %2861 = vmatpush1.msra.mxu0 %v2811
    %2862 = vmatprep.subr.mxu0 0.0
    %2863 = vmatpush1.msra.mxu0 %v2812
    %2864 = vmatprep.subr.mxu0 0.0
    %2865 = vmatpush1.msra.mxu0 %v2813
    %2866 = vmatprep.subr.mxu0 0.0
    %2867 = vmatpush1.msra.mxu0 %v2814
    %2868 = vmatprep.subr.mxu0 0.0
    %2869 = vmatpush1.msra.mxu0 0.0
    %2870 = vmatprep.subr.mxu0 0.0
    %2871 = vmatpush1.msra.mxu0 0.0
    %2872 = vmatprep.subr.mxu0 0.0
    %2873 = vmatpush1.msra.mxu0 0.0
    %2874 = vmatprep.subr.mxu0 0.0
    %2875 = vmatpush1.msra.mxu0 0.0
    %2876 = vmatprep.subr.mxu0 0.0
    %2877 = vmatpush1.msra.mxu0 0.0
    %2878 = vmatprep.subr.mxu0 0.0
    %2879 = vmatpush1.msra.mxu0 0.0
    %2880 = vmatprep.subr.mxu0 0.0
    %2881 = vmatpush1.msra.mxu0 0.0
    %2882 = vmatprep.subr.mxu0 0.0
    %2883 = vmatpush1.msra.mxu0 0.0
    %2884 = vmatprep.subr.mxu0 0.0
    %2885 = vmatpush1.msra.mxu0 0.0
    %2886 = vmatprep.subr.mxu0 0.0
    %2887 = vmatpush1.msra.mxu0 0.0
    %2888 = vmatprep.subr.mxu0 0.0
    %2889 = vmatpush1.msra.mxu0 0.0
    %2890 = vmatprep.subr.mxu0 0.0
    %2891 = vmatpush1.msra.mxu0 0.0
    %2892 = vmatprep.subr.mxu0 0.0
    %2893 = vmatpush1.msra.mxu0 0.0
    %2894 = vmatprep.subr.mxu0 0.0
    %2895 = vmatpush1.msra.mxu0 0.0
    %2896 = vmatprep.subr.mxu0 0.0
    %2897 = vmatpush1.msra.mxu0 0.0
    %2898 = vmatprep.subr.mxu0 0.0
    %2899 = vmatpush1.msra.mxu0 0.0
    %2900 = vmatprep.subr.mxu0 0.0
    %2901 = vmatpush1.msra.mxu0 0.0
    %2902 = vmatprep.subr.mxu0 0.0
    %2903 = vmatpush1.msra.mxu0 0.0
    %2904 = vmatprep.subr.mxu0 0.0
    %2905 = vmatpush1.msra.mxu0 0.0
    %2906 = vmatprep.subr.mxu0 0.0
    %2907 = vmatpush1.msra.mxu0 0.0
    %2908 = vmatprep.subr.mxu0 0.0
    %2909 = vmatpush1.msra.mxu0 0.0
    %2910 = vmatprep.subr.mxu0 0.0
    %2911 = vmatpush1.msra.mxu0 0.0
    %2912 = vmatprep.subr.mxu0 0.0
    %2913 = vmatpush1.msra.mxu0 0.0
    %2914 = vmatprep.subr.mxu0 0.0
    %2915 = vmatpush1.msra.mxu0 0.0
    %2916 = vmatprep.subr.mxu0 0.0
    %2917 = vmatpush1.msra.mxu0 0.0
    %2918 = vmatprep.subr.mxu0 0.0
    %2919 = vmatpush1.msra.mxu0 0.0
    %2920 = vmatprep.subr.mxu0 0.0
    %2921 = vmatpush1.msra.mxu0 0.0
    %2922 = vmatprep.subr.mxu0 0.0
    %2923 = vmatpush1.msra.mxu0 0.0
    %2924 = vmatprep.mubr.f32.mxu0 0.0
    %2925 = vmatmul.mubr.f32.gmra.mrb[0].mxu0 %v2852
    %v2926 = vpop.f32.mrb[0].mxu0
    %v2927 = vadd.f32 %v34, %v2926
    %v2928 = vpop.f32.mrb[0].mxu0
    %2929 = vmatprep.mubr.f32.mxu0 0.0
    %2930 = vmatmul.mubr.f32.gmra.mrb[0].mxu0 %v2855
    %v2931 = vpop.f32.mrb[0].mxu0
    %v2932 = vadd.f32 %v35, %v2931
    %v2933 = vpop.f32.mrb[0].mxu0
    %2934 = vmatprep.mubr.f32.mxu0 0.0
    %2935 = vmatmul.mubr.f32.gmra.mrb[0].mxu0 %v2858
    %v2936 = vpop.f32.mrb[0].mxu0
    %v2937 = vadd.f32 %v36, %v2936
    %v2938 = vpop.f32.mrb[0].mxu0
    %2939 = vdwg.mxu0
    %v2940 = vsel %vm393, %v2927, -inf
    %2941 = vmax.xlane.f32.xlu0 %v2940
    %v2942 = vpop.xlane.xlu0 %2941
    %v2943 = vsel %vm393, %v2932, -inf
    %2944 = vmax.xlane.f32.xlu0 %v2943
    %v2945 = vpop.xlane.xlu0 %2944
    %v2946 = vsel %vm582, %v2937, -inf
    %2947 = vmax.xlane.f32.xlu0 %v2946
    %v2948 = vpop.xlane.xlu0 %2947
    %v2949 = vsub.f32 %v2927, %v2942
    %v2950 = vsub.f32 %v2932, %v2945
    %v2951 = vsub.f32 %v2937, %v2948
    %v2952 = vmul.f32 %v2949, 1.442695
    %v2953 = vpow.pop %v2952
    %v2954 = vmul.f32 %v2950, 1.442695
    %v2955 = vpow.pop %v2954
    %v2956 = vmul.f32 %v2951, 1.442695
    %v2957 = vpow.pop %v2956
    %v2958 = vsel %vm393, %v2953, 0.0
    %2959 = vadd.xlane.f32.xlu0 %v2958
    %v2960 = vpop.xlane.xlu0 %2959
    %v2961 = vsel %vm393, %v2955, 0.0
    %2962 = vadd.xlane.f32.xlu0 %v2961
    %v2963 = vpop.xlane.xlu0 %2962
    %v2964 = vsel %vm582, %v2957, 0.0
    %2965 = vadd.xlane.f32.xlu0 %v2964
    %v2966 = vpop.xlane.xlu0 %2965
    %v2967 = vrcp.pop %v2960
    %v2968 = vrcp.pop %v2963
    %v2969 = vrcp.pop %v2966
    %v2970 = vmul.f32 %v2953, %v2967
    %v2971 = vmul.f32 %v2955, %v2968
    %v2972 = vmul.f32 %v2957, %v2969
    %v2974 = vsel %vm393, %v2970, 0
    %v2977 = vsel %vm393, %v2971, 0
    %v2980 = vsel %vm393, %v2972, 0
    %v2983 = vsel %vm393, %v2815, 0
    %v2986 = vsel %vm393, %v2816, 0
    %v2989 = vsel %vm393, %v2817, 0
    %v2992 = vsel %vm393, %v2818, 0
    %2994 = vmatprep.subr.mxu0 0.0
    %2995 = vmatpush1.xpose.msra.mxu0 %v2983
    %2996 = vmatprep.subr.mxu0 0.0
    %2997 = vmatpush1.xpose.msra.mxu0 %v2986
    %2998 = vmatprep.subr.mxu0 0.0
    %2999 = vmatpush1.xpose.msra.mxu0 %v2989
    %3000 = vmatprep.subr.mxu0 0.0
    %3001 = vmatpush1.xpose.msra.mxu0 %v2992
    %3002 = vmatprep.subr.mxu0 0.0
    %3003 = vmatpush1.xpose.msra.mxu0 0.0
    %3004 = vmatprep.subr.mxu0 0.0
    %3005 = vmatpush1.xpose.msra.mxu0 0.0
    %3006 = vmatprep.subr.mxu0 0.0
    %3007 = vmatpush1.xpose.msra.mxu0 0.0
    %3008 = vmatprep.subr.mxu0 0.0
    %3009 = vmatpush1.xpose.msra.mxu0 0.0
    %3010 = vmatprep.subr.mxu0 0.0
    %3011 = vmatpush1.xpose.msra.mxu0 0.0
    %3012 = vmatprep.subr.mxu0 0.0
    %3013 = vmatpush1.xpose.msra.mxu0 0.0
    %3014 = vmatprep.subr.mxu0 0.0
    %3015 = vmatpush1.xpose.msra.mxu0 0.0
    %3016 = vmatprep.subr.mxu0 0.0
    %3017 = vmatpush1.xpose.msra.mxu0 0.0
    %3018 = vmatprep.subr.mxu0 0.0
    %3019 = vmatpush1.xpose.msra.mxu0 0.0
    %3020 = vmatprep.subr.mxu0 0.0
    %3021 = vmatpush1.xpose.msra.mxu0 0.0
    %3022 = vmatprep.subr.mxu0 0.0
    %3023 = vmatpush1.xpose.msra.mxu0 0.0
    %3024 = vmatprep.subr.mxu0 0.0
    %3025 = vmatpush1.xpose.msra.mxu0 0.0
    %3026 = vmatprep.subr.mxu0 0.0
    %3027 = vmatpush1.xpose.msra.mxu0 0.0
    %3028 = vmatprep.subr.mxu0 0.0
    %3029 = vmatpush1.xpose.msra.mxu0 0.0
    %3030 = vmatprep.subr.mxu0 0.0
    %3031 = vmatpush1.xpose.msra.mxu0 0.0
    %3032 = vmatprep.subr.mxu0 0.0
    %3033 = vmatpush1.xpose.msra.mxu0 0.0
    %3034 = vmatprep.subr.mxu0 0.0
    %3035 = vmatpush1.xpose.msra.mxu0 0.0
    %3036 = vmatprep.subr.mxu0 0.0
    %3037 = vmatpush1.xpose.msra.mxu0 0.0
    %3038 = vmatprep.subr.mxu0 0.0
    %3039 = vmatpush1.xpose.msra.mxu0 0.0
    %3040 = vmatprep.subr.mxu0 0.0
    %3041 = vmatpush1.xpose.msra.mxu0 0.0
    %3042 = vmatprep.subr.mxu0 0.0
    %3043 = vmatpush1.xpose.msra.mxu0 0.0
    %3044 = vmatprep.subr.mxu0 0.0
    %3045 = vmatpush1.xpose.msra.mxu0 0.0
    %3046 = vmatprep.subr.mxu0 0.0
    %3047 = vmatpush1.xpose.msra.mxu0 0.0
    %3048 = vmatprep.subr.mxu0 0.0
    %3049 = vmatpush1.xpose.msra.mxu0 0.0
    %3050 = vmatprep.subr.mxu0 0.0
    %3051 = vmatpush1.xpose.msra.mxu0 0.0
    %3052 = vmatprep.subr.mxu0 0.0
    %3053 = vmatpush1.xpose.msra.mxu0 0.0
    %3054 = vmatprep.subr.mxu0 0.0
    %3055 = vmatpush1.xpose.msra.mxu0 0.0
    %3056 = vmatprep.subr.mxu0 0.0
    %3057 = vmatpush1.xpose.msra.mxu0 0.0
    %3058 = vmatprep.mubr.f32.mxu0 0.0
    %3059 = vmatmul.mubr.f32.gmra.mrb[0].mxu0 %v2974
    %v3060 = vpop.f32.mrb[0].mxu0
    %v3061 = vadd.f32 0.0, %v3060
    %v3062 = vpop.f32.mrb[0].mxu0
    %3063 = vmatprep.mubr.f32.mxu0 0.0
    %3064 = vmatmul.mubr.f32.gmra.mrb[0].mxu0 %v2977
    %v3065 = vpop.f32.mrb[0].mxu0
    %v3066 = vadd.f32 0.0, %v3065
    %v3067 = vpop.f32.mrb[0].mxu0
    %3068 = vmatprep.mubr.f32.mxu0 0.0
    %3069 = vmatmul.mubr.f32.gmra.mrb[0].mxu0 %v2980
    %v3070 = vpop.f32.mrb[0].mxu0
    %v3071 = vadd.f32 0.0, %v3070
    %v3072 = vpop.f32.mrb[0].mxu0
    %3073 = vdwg.mxu0
    %3077 = vrot.lane.b32.xlu0 %v3061, 96
    %v3078 = vpop.permute.xlu0 %3077
    %3079 = vrot.lane.b32.xlu0 %v3066, 96
    %v3080 = vpop.permute.xlu0 %3079
    %3081 = vrot.lane.b32.xlu0 %v3071, 96
    %v3082 = vpop.permute.xlu0 %3081
    %3086 = vst.msk [vmem:[%s2239] sm:$0xff] %vm1562, %v3078
    %3087 = vst.msk [vmem:[%s2239 + $0x8] sm:$0xff] %vm1562, %v3080
    %3088 = vst.msk [vmem:[%s2239 + $0x10] sm:$0x1] %vm1565, %v3082
    // Predicated region
    $region14: #{tpu_custom_call.1} parent=1 // pred_check
      _
    $region15: #{tpu_custom_call.1} parent=1 // pred_check_branch
      %3090 = sbr.rel (0) target = $region17
    $region16: #{tpu_custom_call.1} parent=1 // pred_region
      _
    $region17: #{tpu_custom_call.1} parent=1 // pred_fallthru
      _
    // Predicated region
    $region18: #{tpu_custom_call.1} parent=1 // pred_check
      _
    $region19: #{tpu_custom_call.1} parent=1 // pred_check_branch
      %3092 = sbr.rel (0) target = $region21
    $region20: #{tpu_custom_call.1} parent=1 // pred_region
      _
    $region21: #{tpu_custom_call.1} parent=1 // pred_fallthru
      _
    %3093 = vsyncpa [#allocation4], 1

</llo_original>
